<compile_context>
chip_gen: v7x
topology: tpu7x:2x2x1
jax: 0.10.0
libtpu: 0.0.40
codegen_flags: <defaults>
</compile_context>

<pallas_src>
import math
import functools

import jax
import jax.numpy as jnp
from jax import lax
from jax.experimental import pallas as pl
from jax.experimental.pallas import tpu as pltpu


def _upsample_subpixel_kernel(w_ref, b_ref, x_ref, o_ref, pad_ref, *, C, H, W, NB):
    """One batch-block per grid step.

    w_ref  : SMEM (16*C*C,) f32 -- folded sub-pixel weights, row-major over
             [dy, dx, a, b, co, ci] (see upsample_forward for the fold).
    b_ref  : SMEM (C,)      f32 -- conv bias.
    x_ref  : VMEM (C, NB, H, W)      -- channel-major input block.
    o_ref  : VMEM (C*4, NB, H, W)    -- phase planes, channel index co*4+dy*2+dx.
    pad_ref: VMEM (C, NB, H+2, W+2) f32 scratch -- x with a 1-px zero border
             (supplies the conv's padding=1 zeros; shifts become static slices).
    """
    # Zero border + copy the block into the padded scratch.  Only the border
    # actually needs zeros, but a full clear of this small scratch is just a
    # few vector stores and keeps the kernel correct even when the "parallel"
    # grid axis is sharded across TensorCores (scratch is per-core there).
    pad_ref[...] = jnp.zeros(pad_ref.shape, pad_ref.dtype)
    for ci in range(C):
        pad_ref[ci, :, 1:1 + H, 1:1 + W] = x_ref[ci].astype(jnp.float32)

    # 4 sub-pixel phases; each is a 2x2 conv of the original-resolution x.
    for dy in range(2):
        for dx in range(2):
            # C live accumulators is fine for small C; for C >~ 32 make `co`
            # the outer loop (<=2 live accs) or move the channel mix to the
            # MXU as 4 accumulating (C,C)@(C, NB*H*W) matmuls with weights
            # staged in VMEM.
            accs = [jnp.full((NB, H, W), b_ref[co], jnp.float32)
                    for co in range(C)]
            for ci in range(C):
                for a in range(2):
                    for b2 in range(2):
                        oy = dy + a - 1            # in {-1, 0, +1}
                        ox = dx + b2 - 1
                        tap = pad_ref[ci, :, 1 + oy:1 + oy + H,
                                      1 + ox:1 + ox + W]          # (NB, H, W)
                        base = (((dy * 2 + dx) * 2 + a) * 2 + b2) * C
                        for co in range(C):
                            accs[co] = accs[co] + tap * w_ref[(base + co) * C + ci]
            for co in range(C):
                o_ref[co * 4 + dy * 2 + dx] = accs[co].astype(o_ref.dtype)


def upsample_forward(x, weight, bias, *, block_n=None):
    """Pallas equivalent of Upsample.forward: conv3x3(nearest_upsample_x2(x))."""
    N, C, H, W = x.shape
    if block_n is None:
        block_n = N                    # everything fits VMEM comfortably here
    assert N % block_n == 0, "block_n must divide N"

    # Fold the nearest-x2 upsample into the 3x3 conv.  For output phase dy the
    # three ky taps collapse onto two source rows (i-1, i) or (i, i+1):
    #   dy=0: [w0, w1+w2]       dy=1: [w0+w1, w2]     (same along W with dx/kx)
    S = jnp.array([[[1., 0., 0.], [0., 1., 1.]],
                   [[1., 1., 0.], [0., 0., 1.]]], jnp.float32)      # (dy, a, ky)
    w_eff = jnp.einsum('yak,xbl,oikl->yxaboi', S, S, weight.astype(jnp.float32))
    w_flat = w_eff.reshape(-1)                                      # (16*C*C,)

    xt = x.transpose(1, 0, 2, 3)                                    # (C, N, H, W)

    kern = functools.partial(_upsample_subpixel_kernel, C=C, H=H, W=W, NB=block_n)
    phases = pl.pallas_call(
        kern,
        out_shape=jax.ShapeDtypeStruct((C * 4, N, H, W), x.dtype),
        grid=(N // block_n,),
        in_specs=[
            pl.BlockSpec(memory_space=pltpu.MemorySpace.SMEM),       # folded weights
            pl.BlockSpec(memory_space=pltpu.MemorySpace.SMEM),       # bias
            pl.BlockSpec((C, block_n, H, W), lambda n: (0, n, 0, 0)),
        ],
        out_specs=pl.BlockSpec((C * 4, block_n, H, W), lambda n: (0, n, 0, 0)),
        scratch_shapes=[pltpu.VMEM((C, block_n, H + 2, W + 2), jnp.float32)],
        compiler_params=pltpu.CompilerParams(
            dimension_semantics=("parallel",)),    # batch blocks are independent
    )(w_flat, bias.astype(jnp.float32), xt)

    # Interleave the 4 phase planes back to NCHW at 2x resolution:
    #   phases[co*4 + dy*2 + dx, n, i, j] == out[n, co, 2i+dy, 2j+dx]
    out = (phases.reshape(C, 2, 2, N, H, W)
           .transpose(3, 0, 4, 1, 5, 2)
           .reshape(N, C, 2 * H, 2 * W))
    return out


def upsample_reference(x, weight, bias):
    """Pure-JAX reference matching PyTorch semantics exactly."""
    up = jnp.repeat(jnp.repeat(x, 2, axis=2), 2, axis=3)
    out = lax.conv_general_dilated(
        up, weight, window_strides=(1, 1), padding=((1, 1), (1, 1)),
        dimension_numbers=("NCHW", "OIHW", "NCHW"),
        precision=lax.Precision.HIGHEST)
    return out + bias[None, :, None, None]


if __name__ == "__main__":
    dim = 4
    N, H, W = 2, 16, 16

    key = jax.random.PRNGKey(0)
    kx, kw, kb = jax.random.split(key, 3)

    x = jax.random.normal(kx, (N, dim, H, W), dtype=jnp.float32)

    # Deterministic Conv2d(dim, dim, 3) parameters (PyTorch-style uniform init).
    fan_in = dim * 3 * 3
    bound = 1.0 / math.sqrt(fan_in)
    weight = jax.random.uniform(kw, (dim, dim, 3, 3), jnp.float32, -bound, bound)
    bias = jax.random.uniform(kb, (dim,), jnp.float32, -bound, bound)

    out = upsample_forward(x, weight, bias)
    out = jax.block_until_ready(out)

    ref = upsample_reference(x, weight, bias)
    assert out.shape == (N, dim, 2 * H, 2 * W), out.shape
    assert jnp.allclose(out, ref, atol=1e-4, rtol=1e-4), float(
        jnp.max(jnp.abs(out - ref)))

    print("KERNEL_OK")
</pallas_src>

<mosaic_0001>
module attributes {stable_mosaic.version = 11 : i64} {
  func.func @_upsample_subpixel_kernel(%arg0: i32, %arg1: memref<256xf32, #tpu.memory_space<smem>>, %arg2: memref<4xf32, #tpu.memory_space<smem>>, %arg3: memref<4x2x16x16xf32, #tpu.memory_space<vmem>>, %arg4: memref<16x2x16x16xf32, #tpu.memory_space<vmem>>, %arg5: memref<4x2x18x18xf32, #tpu.memory_space<vmem>>) attributes {dimension_semantics = [#tpu.dimension_semantics<parallel>], iteration_bounds = array<i64: 1>, scalar_prefetch = 0 : i64, scratch_operands = 1 : i64, tpu.core_type = #tpu.core_type<tc>, window_params = [{transform_indices = @transform_0, window_bounds = array<i64: 256>}, {transform_indices = @transform_1, window_bounds = array<i64: 4>}, {transform_indices = @transform_2, window_bounds = array<i64: 4, 2, 16, 16>}, {transform_indices = @transform_3, window_bounds = array<i64: 16, 2, 16, 16>}]} {
    %cst = arith.constant 0.000000e+00 : f32
    %0 = vector.broadcast %cst : f32 to vector<4x2x18x18xf32>
    %c0 = arith.constant 0 : index
    %c0_0 = arith.constant 0 : index
    %c0_1 = arith.constant 0 : index
    %c0_2 = arith.constant 0 : index
    %1 = vector.load %arg5[%c0, %c0_0, %c0_1, %c0_2] : memref<4x2x18x18xf32, #tpu.memory_space<vmem>>, vector<4x2x18x18xf32>
    tpu.vector_store %arg5[%c0, %c0_0, %c0_1, %c0_2], %0 {strides = array<i32>} : memref<4x2x18x18xf32, #tpu.memory_space<vmem>>, vector<4x2x18x18xf32>,
    %c0_3 = arith.constant 0 : index
    %c0_4 = arith.constant 0 : index
    %c0_5 = arith.constant 0 : index
    %c0_6 = arith.constant 0 : index
    %2 = vector.load %arg3[%c0_3, %c0_4, %c0_5, %c0_6] : memref<4x2x16x16xf32, #tpu.memory_space<vmem>>, vector<1x2x16x16xf32>
    %3 = vector.shape_cast %2 : vector<1x2x16x16xf32> to vector<2x16x16xf32>
    %c0_7 = arith.constant 0 : index
    %c0_8 = arith.constant 0 : index
    %c1 = arith.constant 1 : index
    %c1_9 = arith.constant 1 : index
    %4 = vector.load %arg5[%c0_7, %c0_8, %c1, %c1_9] : memref<4x2x18x18xf32, #tpu.memory_space<vmem>>, vector<1x2x16x16xf32>
    %5 = vector.shape_cast %4 : vector<1x2x16x16xf32> to vector<2x16x16xf32>
    %6 = vector.shape_cast %3 : vector<2x16x16xf32> to vector<1x2x16x16xf32>
    tpu.vector_store %arg5[%c0_7, %c0_8, %c1, %c1_9], %6 {strides = array<i32>} : memref<4x2x18x18xf32, #tpu.memory_space<vmem>>, vector<1x2x16x16xf32>,
    %c1_10 = arith.constant 1 : index
    %c0_11 = arith.constant 0 : index
    %c0_12 = arith.constant 0 : index
    %c0_13 = arith.constant 0 : index
    %7 = vector.load %arg3[%c1_10, %c0_11, %c0_12, %c0_13] : memref<4x2x16x16xf32, #tpu.memory_space<vmem>>, vector<1x2x16x16xf32>
    %8 = vector.shape_cast %7 : vector<1x2x16x16xf32> to vector<2x16x16xf32>
    %c1_14 = arith.constant 1 : index
    %c0_15 = arith.constant 0 : index
    %c1_16 = arith.constant 1 : index
    %c1_17 = arith.constant 1 : index
    %9 = vector.load %arg5[%c1_14, %c0_15, %c1_16, %c1_17] : memref<4x2x18x18xf32, #tpu.memory_space<vmem>>, vector<1x2x16x16xf32>
    %10 = vector.shape_cast %9 : vector<1x2x16x16xf32> to vector<2x16x16xf32>
    %11 = vector.shape_cast %8 : vector<2x16x16xf32> to vector<1x2x16x16xf32>
    tpu.vector_store %arg5[%c1_14, %c0_15, %c1_16, %c1_17], %11 {strides = array<i32>} : memref<4x2x18x18xf32, #tpu.memory_space<vmem>>, vector<1x2x16x16xf32>,
    %c2 = arith.constant 2 : index
    %c0_18 = arith.constant 0 : index
    %c0_19 = arith.constant 0 : index
    %c0_20 = arith.constant 0 : index
    %12 = vector.load %arg3[%c2, %c0_18, %c0_19, %c0_20] : memref<4x2x16x16xf32, #tpu.memory_space<vmem>>, vector<1x2x16x16xf32>
    %13 = vector.shape_cast %12 : vector<1x2x16x16xf32> to vector<2x16x16xf32>
    %c2_21 = arith.constant 2 : index
    %c0_22 = arith.constant 0 : index
    %c1_23 = arith.constant 1 : index
    %c1_24 = arith.constant 1 : index
    %14 = vector.load %arg5[%c2_21, %c0_22, %c1_23, %c1_24] : memref<4x2x18x18xf32, #tpu.memory_space<vmem>>, vector<1x2x16x16xf32>
    %15 = vector.shape_cast %14 : vector<1x2x16x16xf32> to vector<2x16x16xf32>
    %16 = vector.shape_cast %13 : vector<2x16x16xf32> to vector<1x2x16x16xf32>
    tpu.vector_store %arg5[%c2_21, %c0_22, %c1_23, %c1_24], %16 {strides = array<i32>} : memref<4x2x18x18xf32, #tpu.memory_space<vmem>>, vector<1x2x16x16xf32>,
    %c3 = arith.constant 3 : index
    %c0_25 = arith.constant 0 : index
    %c0_26 = arith.constant 0 : index
    %c0_27 = arith.constant 0 : index
    %17 = vector.load %arg3[%c3, %c0_25, %c0_26, %c0_27] : memref<4x2x16x16xf32, #tpu.memory_space<vmem>>, vector<1x2x16x16xf32>
    %18 = vector.shape_cast %17 : vector<1x2x16x16xf32> to vector<2x16x16xf32>
    %c3_28 = arith.constant 3 : index
    %c0_29 = arith.constant 0 : index
    %c1_30 = arith.constant 1 : index
    %c1_31 = arith.constant 1 : index
    %19 = vector.load %arg5[%c3_28, %c0_29, %c1_30, %c1_31] : memref<4x2x18x18xf32, #tpu.memory_space<vmem>>, vector<1x2x16x16xf32>
    %20 = vector.shape_cast %19 : vector<1x2x16x16xf32> to vector<2x16x16xf32>
    %21 = vector.shape_cast %18 : vector<2x16x16xf32> to vector<1x2x16x16xf32>
    tpu.vector_store %arg5[%c3_28, %c0_29, %c1_30, %c1_31], %21 {strides = array<i32>} : memref<4x2x18x18xf32, #tpu.memory_space<vmem>>, vector<1x2x16x16xf32>,
    %c0_32 = arith.constant 0 : index
    %22 = memref.load %arg2[%c0_32] : memref<4xf32, #tpu.memory_space<smem>>
    %23 = vector.broadcast %22 : f32 to vector<2x16x16xf32>
    %c1_33 = arith.constant 1 : index
    %24 = memref.load %arg2[%c1_33] : memref<4xf32, #tpu.memory_space<smem>>
    %25 = vector.broadcast %24 : f32 to vector<2x16x16xf32>
    %c2_34 = arith.constant 2 : index
    %26 = memref.load %arg2[%c2_34] : memref<4xf32, #tpu.memory_space<smem>>
    %27 = vector.broadcast %26 : f32 to vector<2x16x16xf32>
    %c3_35 = arith.constant 3 : index
    %28 = memref.load %arg2[%c3_35] : memref<4xf32, #tpu.memory_space<smem>>
    %29 = vector.broadcast %28 : f32 to vector<2x16x16xf32>
    %c0_36 = arith.constant 0 : index
    %c0_37 = arith.constant 0 : index
    %c0_38 = arith.constant 0 : index
    %c0_39 = arith.constant 0 : index
    %30 = vector.load %arg5[%c0_36, %c0_37, %c0_38, %c0_39] : memref<4x2x18x18xf32, #tpu.memory_space<vmem>>, vector<1x2x16x16xf32>
    %31 = vector.shape_cast %30 : vector<1x2x16x16xf32> to vector<2x16x16xf32>
    %c0_40 = arith.constant 0 : index
    %32 = memref.load %arg1[%c0_40] : memref<256xf32, #tpu.memory_space<smem>>
    %33 = vector.broadcast %32 : f32 to vector<2x16x16xf32>
    %34 = arith.mulf %31, %33 : vector<2x16x16xf32>
    %35 = arith.addf %23, %34 : vector<2x16x16xf32>
    %c4 = arith.constant 4 : index
    %36 = memref.load %arg1[%c4] : memref<256xf32, #tpu.memory_space<smem>>
    %37 = vector.broadcast %36 : f32 to vector<2x16x16xf32>
    %38 = arith.mulf %31, %37 : vector<2x16x16xf32>
    %39 = arith.addf %25, %38 : vector<2x16x16xf32>
    %c8 = arith.constant 8 : index
    %40 = memref.load %arg1[%c8] : memref<256xf32, #tpu.memory_space<smem>>
    %41 = vector.broadcast %40 : f32 to vector<2x16x16xf32>
    %42 = arith.mulf %31, %41 : vector<2x16x16xf32>
    %43 = arith.addf %27, %42 : vector<2x16x16xf32>
    %c12 = arith.constant 12 : index
    %44 = memref.load %arg1[%c12] : memref<256xf32, #tpu.memory_space<smem>>
    %45 = vector.broadcast %44 : f32 to vector<2x16x16xf32>
    %46 = arith.mulf %31, %45 : vector<2x16x16xf32>
    %47 = arith.addf %29, %46 : vector<2x16x16xf32>
    %c0_41 = arith.constant 0 : index
    %c0_42 = arith.constant 0 : index
    %c0_43 = arith.constant 0 : index
    %c1_44 = arith.constant 1 : index
    %48 = vector.load %arg5[%c0_41, %c0_42, %c0_43, %c1_44] : memref<4x2x18x18xf32, #tpu.memory_space<vmem>>, vector<1x2x16x16xf32>
    %49 = vector.shape_cast %48 : vector<1x2x16x16xf32> to vector<2x16x16xf32>
    %c16 = arith.constant 16 : index
    %50 = memref.load %arg1[%c16] : memref<256xf32, #tpu.memory_space<smem>>
    %51 = vector.broadcast %50 : f32 to vector<2x16x16xf32>
    %52 = arith.mulf %49, %51 : vector<2x16x16xf32>
    %53 = arith.addf %35, %52 : vector<2x16x16xf32>
    %c20 = arith.constant 20 : index
    %54 = memref.load %arg1[%c20] : memref<256xf32, #tpu.memory_space<smem>>
    %55 = vector.broadcast %54 : f32 to vector<2x16x16xf32>
    %56 = arith.mulf %49, %55 : vector<2x16x16xf32>
    %57 = arith.addf %39, %56 : vector<2x16x16xf32>
    %c24 = arith.constant 24 : index
    %58 = memref.load %arg1[%c24] : memref<256xf32, #tpu.memory_space<smem>>
    %59 = vector.broadcast %58 : f32 to vector<2x16x16xf32>
    %60 = arith.mulf %49, %59 : vector<2x16x16xf32>
    %61 = arith.addf %43, %60 : vector<2x16x16xf32>
    %c28 = arith.constant 28 : index
    %62 = memref.load %arg1[%c28] : memref<256xf32, #tpu.memory_space<smem>>
    %63 = vector.broadcast %62 : f32 to vector<2x16x16xf32>
    %64 = arith.mulf %49, %63 : vector<2x16x16xf32>
    %65 = arith.addf %47, %64 : vector<2x16x16xf32>
    %c0_45 = arith.constant 0 : index
    %c0_46 = arith.constant 0 : index
    %c1_47 = arith.constant 1 : index
    %c0_48 = arith.constant 0 : index
    %66 = vector.load %arg5[%c0_45, %c0_46, %c1_47, %c0_48] : memref<4x2x18x18xf32, #tpu.memory_space<vmem>>, vector<1x2x16x16xf32>
    %67 = vector.shape_cast %66 : vector<1x2x16x16xf32> to vector<2x16x16xf32>
    %c32 = arith.constant 32 : index
    %68 = memref.load %arg1[%c32] : memref<256xf32, #tpu.memory_space<smem>>
    %69 = vector.broadcast %68 : f32 to vector<2x16x16xf32>
    %70 = arith.mulf %67, %69 : vector<2x16x16xf32>
    %71 = arith.addf %53, %70 : vector<2x16x16xf32>
    %c36 = arith.constant 36 : index
    %72 = memref.load %arg1[%c36] : memref<256xf32, #tpu.memory_space<smem>>
    %73 = vector.broadcast %72 : f32 to vector<2x16x16xf32>
    %74 = arith.mulf %67, %73 : vector<2x16x16xf32>
    %75 = arith.addf %57, %74 : vector<2x16x16xf32>
    %c40 = arith.constant 40 : index
    %76 = memref.load %arg1[%c40] : memref<256xf32, #tpu.memory_space<smem>>
    %77 = vector.broadcast %76 : f32 to vector<2x16x16xf32>
    %78 = arith.mulf %67, %77 : vector<2x16x16xf32>
    %79 = arith.addf %61, %78 : vector<2x16x16xf32>
    %c44 = arith.constant 44 : index
    %80 = memref.load %arg1[%c44] : memref<256xf32, #tpu.memory_space<smem>>
    %81 = vector.broadcast %80 : f32 to vector<2x16x16xf32>
    %82 = arith.mulf %67, %81 : vector<2x16x16xf32>
    %83 = arith.addf %65, %82 : vector<2x16x16xf32>
    %c0_49 = arith.constant 0 : index
    %c0_50 = arith.constant 0 : index
    %c1_51 = arith.constant 1 : index
    %c1_52 = arith.constant 1 : index
    %84 = vector.load %arg5[%c0_49, %c0_50, %c1_51, %c1_52] : memref<4x2x18x18xf32, #tpu.memory_space<vmem>>, vector<1x2x16x16xf32>
    %85 = vector.shape_cast %84 : vector<1x2x16x16xf32> to vector<2x16x16xf32>
    %c48 = arith.constant 48 : index
    %86 = memref.load %arg1[%c48] : memref<256xf32, #tpu.memory_space<smem>>
    %87 = vector.broadcast %86 : f32 to vector<2x16x16xf32>
    %88 = arith.mulf %85, %87 : vector<2x16x16xf32>
    %89 = arith.addf %71, %88 : vector<2x16x16xf32>
    %c52 = arith.constant 52 : index
    %90 = memref.load %arg1[%c52] : memref<256xf32, #tpu.memory_space<smem>>
    %91 = vector.broadcast %90 : f32 to vector<2x16x16xf32>
    %92 = arith.mulf %85, %91 : vector<2x16x16xf32>
    %93 = arith.addf %75, %92 : vector<2x16x16xf32>
    %c56 = arith.constant 56 : index
    %94 = memref.load %arg1[%c56] : memref<256xf32, #tpu.memory_space<smem>>
    %95 = vector.broadcast %94 : f32 to vector<2x16x16xf32>
    %96 = arith.mulf %85, %95 : vector<2x16x16xf32>
    %97 = arith.addf %79, %96 : vector<2x16x16xf32>
    %c60 = arith.constant 60 : index
    %98 = memref.load %arg1[%c60] : memref<256xf32, #tpu.memory_space<smem>>
    %99 = vector.broadcast %98 : f32 to vector<2x16x16xf32>
    %100 = arith.mulf %85, %99 : vector<2x16x16xf32>
    %101 = arith.addf %83, %100 : vector<2x16x16xf32>
    %c1_53 = arith.constant 1 : index
    %c0_54 = arith.constant 0 : index
    %c0_55 = arith.constant 0 : index
    %c0_56 = arith.constant 0 : index
    %102 = vector.load %arg5[%c1_53, %c0_54, %c0_55, %c0_56] : memref<4x2x18x18xf32, #tpu.memory_space<vmem>>, vector<1x2x16x16xf32>
    %103 = vector.shape_cast %102 : vector<1x2x16x16xf32> to vector<2x16x16xf32>
    %c1_57 = arith.constant 1 : index
    %104 = memref.load %arg1[%c1_57] : memref<256xf32, #tpu.memory_space<smem>>
    %105 = vector.broadcast %104 : f32 to vector<2x16x16xf32>
    %106 = arith.mulf %103, %105 : vector<2x16x16xf32>
    %107 = arith.addf %89, %106 : vector<2x16x16xf32>
    %c5 = arith.constant 5 : index
    %108 = memref.load %arg1[%c5] : memref<256xf32, #tpu.memory_space<smem>>
    %109 = vector.broadcast %108 : f32 to vector<2x16x16xf32>
    %110 = arith.mulf %103, %109 : vector<2x16x16xf32>
    %111 = arith.addf %93, %110 : vector<2x16x16xf32>
    %c9 = arith.constant 9 : index
    %112 = memref.load %arg1[%c9] : memref<256xf32, #tpu.memory_space<smem>>
    %113 = vector.broadcast %112 : f32 to vector<2x16x16xf32>
    %114 = arith.mulf %103, %113 : vector<2x16x16xf32>
    %115 = arith.addf %97, %114 : vector<2x16x16xf32>
    %c13 = arith.constant 13 : index
    %116 = memref.load %arg1[%c13] : memref<256xf32, #tpu.memory_space<smem>>
    %117 = vector.broadcast %116 : f32 to vector<2x16x16xf32>
    %118 = arith.mulf %103, %117 : vector<2x16x16xf32>
    %119 = arith.addf %101, %118 : vector<2x16x16xf32>
    %c1_58 = arith.constant 1 : index
    %c0_59 = arith.constant 0 : index
    %c0_60 = arith.constant 0 : index
    %c1_61 = arith.constant 1 : index
    %120 = vector.load %arg5[%c1_58, %c0_59, %c0_60, %c1_61] : memref<4x2x18x18xf32, #tpu.memory_space<vmem>>, vector<1x2x16x16xf32>
    %121 = vector.shape_cast %120 : vector<1x2x16x16xf32> to vector<2x16x16xf32>
    %c17 = arith.constant 17 : index
    %122 = memref.load %arg1[%c17] : memref<256xf32, #tpu.memory_space<smem>>
    %123 = vector.broadcast %122 : f32 to vector<2x16x16xf32>
    %124 = arith.mulf %121, %123 : vector<2x16x16xf32>
    %125 = arith.addf %107, %124 : vector<2x16x16xf32>
    %c21 = arith.constant 21 : index
    %126 = memref.load %arg1[%c21] : memref<256xf32, #tpu.memory_space<smem>>
    %127 = vector.broadcast %126 : f32 to vector<2x16x16xf32>
    %128 = arith.mulf %121, %127 : vector<2x16x16xf32>
    %129 = arith.addf %111, %128 : vector<2x16x16xf32>
    %c25 = arith.constant 25 : index
    %130 = memref.load %arg1[%c25] : memref<256xf32, #tpu.memory_space<smem>>
    %131 = vector.broadcast %130 : f32 to vector<2x16x16xf32>
    %132 = arith.mulf %121, %131 : vector<2x16x16xf32>
    %133 = arith.addf %115, %132 : vector<2x16x16xf32>
    %c29 = arith.constant 29 : index
    %134 = memref.load %arg1[%c29] : memref<256xf32, #tpu.memory_space<smem>>
    %135 = vector.broadcast %134 : f32 to vector<2x16x16xf32>
    %136 = arith.mulf %121, %135 : vector<2x16x16xf32>
    %137 = arith.addf %119, %136 : vector<2x16x16xf32>
    %c1_62 = arith.constant 1 : index
    %c0_63 = arith.constant 0 : index
    %c1_64 = arith.constant 1 : index
    %c0_65 = arith.constant 0 : index
    %138 = vector.load %arg5[%c1_62, %c0_63, %c1_64, %c0_65] : memref<4x2x18x18xf32, #tpu.memory_space<vmem>>, vector<1x2x16x16xf32>
    %139 = vector.shape_cast %138 : vector<1x2x16x16xf32> to vector<2x16x16xf32>
    %c33 = arith.constant 33 : index
    %140 = memref.load %arg1[%c33] : memref<256xf32, #tpu.memory_space<smem>>
    %141 = vector.broadcast %140 : f32 to vector<2x16x16xf32>
    %142 = arith.mulf %139, %141 : vector<2x16x16xf32>
    %143 = arith.addf %125, %142 : vector<2x16x16xf32>
    %c37 = arith.constant 37 : index
    %144 = memref.load %arg1[%c37] : memref<256xf32, #tpu.memory_space<smem>>
    %145 = vector.broadcast %144 : f32 to vector<2x16x16xf32>
    %146 = arith.mulf %139, %145 : vector<2x16x16xf32>
    %147 = arith.addf %129, %146 : vector<2x16x16xf32>
    %c41 = arith.constant 41 : index
    %148 = memref.load %arg1[%c41] : memref<256xf32, #tpu.memory_space<smem>>
    %149 = vector.broadcast %148 : f32 to vector<2x16x16xf32>
    %150 = arith.mulf %139, %149 : vector<2x16x16xf32>
    %151 = arith.addf %133, %150 : vector<2x16x16xf32>
    %c45 = arith.constant 45 : index
    %152 = memref.load %arg1[%c45] : memref<256xf32, #tpu.memory_space<smem>>
    %153 = vector.broadcast %152 : f32 to vector<2x16x16xf32>
    %154 = arith.mulf %139, %153 : vector<2x16x16xf32>
    %155 = arith.addf %137, %154 : vector<2x16x16xf32>
    %c1_66 = arith.constant 1 : index
    %c0_67 = arith.constant 0 : index
    %c1_68 = arith.constant 1 : index
    %c1_69 = arith.constant 1 : index
    %156 = vector.load %arg5[%c1_66, %c0_67, %c1_68, %c1_69] : memref<4x2x18x18xf32, #tpu.memory_space<vmem>>, vector<1x2x16x16xf32>
    %157 = vector.shape_cast %156 : vector<1x2x16x16xf32> to vector<2x16x16xf32>
    %c49 = arith.constant 49 : index
    %158 = memref.load %arg1[%c49] : memref<256xf32, #tpu.memory_space<smem>>
    %159 = vector.broadcast %158 : f32 to vector<2x16x16xf32>
    %160 = arith.mulf %157, %159 : vector<2x16x16xf32>
    %161 = arith.addf %143, %160 : vector<2x16x16xf32>
    %c53 = arith.constant 53 : index
    %162 = memref.load %arg1[%c53] : memref<256xf32, #tpu.memory_space<smem>>
    %163 = vector.broadcast %162 : f32 to vector<2x16x16xf32>
    %164 = arith.mulf %157, %163 : vector<2x16x16xf32>
    %165 = arith.addf %147, %164 : vector<2x16x16xf32>
    %c57 = arith.constant 57 : index
    %166 = memref.load %arg1[%c57] : memref<256xf32, #tpu.memory_space<smem>>
    %167 = vector.broadcast %166 : f32 to vector<2x16x16xf32>
    %168 = arith.mulf %157, %167 : vector<2x16x16xf32>
    %169 = arith.addf %151, %168 : vector<2x16x16xf32>
    %c61 = arith.constant 61 : index
    %170 = memref.load %arg1[%c61] : memref<256xf32, #tpu.memory_space<smem>>
    %171 = vector.broadcast %170 : f32 to vector<2x16x16xf32>
    %172 = arith.mulf %157, %171 : vector<2x16x16xf32>
    %173 = arith.addf %155, %172 : vector<2x16x16xf32>
    %c2_70 = arith.constant 2 : index
    %c0_71 = arith.constant 0 : index
    %c0_72 = arith.constant 0 : index
    %c0_73 = arith.constant 0 : index
    %174 = vector.load %arg5[%c2_70, %c0_71, %c0_72, %c0_73] : memref<4x2x18x18xf32, #tpu.memory_space<vmem>>, vector<1x2x16x16xf32>
    %175 = vector.shape_cast %174 : vector<1x2x16x16xf32> to vector<2x16x16xf32>
    %c2_74 = arith.constant 2 : index
    %176 = memref.load %arg1[%c2_74] : memref<256xf32, #tpu.memory_space<smem>>
    %177 = vector.broadcast %176 : f32 to vector<2x16x16xf32>
    %178 = arith.mulf %175, %177 : vector<2x16x16xf32>
    %179 = arith.addf %161, %178 : vector<2x16x16xf32>
    %c6 = arith.constant 6 : index
    %180 = memref.load %arg1[%c6] : memref<256xf32, #tpu.memory_space<smem>>
    %181 = vector.broadcast %180 : f32 to vector<2x16x16xf32>
    %182 = arith.mulf %175, %181 : vector<2x16x16xf32>
    %183 = arith.addf %165, %182 : vector<2x16x16xf32>
    %c10 = arith.constant 10 : index
    %184 = memref.load %arg1[%c10] : memref<256xf32, #tpu.memory_space<smem>>
    %185 = vector.broadcast %184 : f32 to vector<2x16x16xf32>
    %186 = arith.mulf %175, %185 : vector<2x16x16xf32>
    %187 = arith.addf %169, %186 : vector<2x16x16xf32>
    %c14 = arith.constant 14 : index
    %188 = memref.load %arg1[%c14] : memref<256xf32, #tpu.memory_space<smem>>
    %189 = vector.broadcast %188 : f32 to vector<2x16x16xf32>
    %190 = arith.mulf %175, %189 : vector<2x16x16xf32>
    %191 = arith.addf %173, %190 : vector<2x16x16xf32>
    %c2_75 = arith.constant 2 : index
    %c0_76 = arith.constant 0 : index
    %c0_77 = arith.constant 0 : index
    %c1_78 = arith.constant 1 : index
    %192 = vector.load %arg5[%c2_75, %c0_76, %c0_77, %c1_78] : memref<4x2x18x18xf32, #tpu.memory_space<vmem>>, vector<1x2x16x16xf32>
    %193 = vector.shape_cast %192 : vector<1x2x16x16xf32> to vector<2x16x16xf32>
    %c18 = arith.constant 18 : index
    %194 = memref.load %arg1[%c18] : memref<256xf32, #tpu.memory_space<smem>>
    %195 = vector.broadcast %194 : f32 to vector<2x16x16xf32>
    %196 = arith.mulf %193, %195 : vector<2x16x16xf32>
    %197 = arith.addf %179, %196 : vector<2x16x16xf32>
    %c22 = arith.constant 22 : index
    %198 = memref.load %arg1[%c22] : memref<256xf32, #tpu.memory_space<smem>>
    %199 = vector.broadcast %198 : f32 to vector<2x16x16xf32>
    %200 = arith.mulf %193, %199 : vector<2x16x16xf32>
    %201 = arith.addf %183, %200 : vector<2x16x16xf32>
    %c26 = arith.constant 26 : index
    %202 = memref.load %arg1[%c26] : memref<256xf32, #tpu.memory_space<smem>>
    %203 = vector.broadcast %202 : f32 to vector<2x16x16xf32>
    %204 = arith.mulf %193, %203 : vector<2x16x16xf32>
    %205 = arith.addf %187, %204 : vector<2x16x16xf32>
    %c30 = arith.constant 30 : index
    %206 = memref.load %arg1[%c30] : memref<256xf32, #tpu.memory_space<smem>>
    %207 = vector.broadcast %206 : f32 to vector<2x16x16xf32>
    %208 = arith.mulf %193, %207 : vector<2x16x16xf32>
    %209 = arith.addf %191, %208 : vector<2x16x16xf32>
    %c2_79 = arith.constant 2 : index
    %c0_80 = arith.constant 0 : index
    %c1_81 = arith.constant 1 : index
    %c0_82 = arith.constant 0 : index
    %210 = vector.load %arg5[%c2_79, %c0_80, %c1_81, %c0_82] : memref<4x2x18x18xf32, #tpu.memory_space<vmem>>, vector<1x2x16x16xf32>
    %211 = vector.shape_cast %210 : vector<1x2x16x16xf32> to vector<2x16x16xf32>
    %c34 = arith.constant 34 : index
    %212 = memref.load %arg1[%c34] : memref<256xf32, #tpu.memory_space<smem>>
    %213 = vector.broadcast %212 : f32 to vector<2x16x16xf32>
    %214 = arith.mulf %211, %213 : vector<2x16x16xf32>
    %215 = arith.addf %197, %214 : vector<2x16x16xf32>
    %c38 = arith.constant 38 : index
    %216 = memref.load %arg1[%c38] : memref<256xf32, #tpu.memory_space<smem>>
    %217 = vector.broadcast %216 : f32 to vector<2x16x16xf32>
    %218 = arith.mulf %211, %217 : vector<2x16x16xf32>
    %219 = arith.addf %201, %218 : vector<2x16x16xf32>
    %c42 = arith.constant 42 : index
    %220 = memref.load %arg1[%c42] : memref<256xf32, #tpu.memory_space<smem>>
    %221 = vector.broadcast %220 : f32 to vector<2x16x16xf32>
    %222 = arith.mulf %211, %221 : vector<2x16x16xf32>
    %223 = arith.addf %205, %222 : vector<2x16x16xf32>
    %c46 = arith.constant 46 : index
    %224 = memref.load %arg1[%c46] : memref<256xf32, #tpu.memory_space<smem>>
    %225 = vector.broadcast %224 : f32 to vector<2x16x16xf32>
    %226 = arith.mulf %211, %225 : vector<2x16x16xf32>
    %227 = arith.addf %209, %226 : vector<2x16x16xf32>
    %c2_83 = arith.constant 2 : index
    %c0_84 = arith.constant 0 : index
    %c1_85 = arith.constant 1 : index
    %c1_86 = arith.constant 1 : index
    %228 = vector.load %arg5[%c2_83, %c0_84, %c1_85, %c1_86] : memref<4x2x18x18xf32, #tpu.memory_space<vmem>>, vector<1x2x16x16xf32>
    %229 = vector.shape_cast %228 : vector<1x2x16x16xf32> to vector<2x16x16xf32>
    %c50 = arith.constant 50 : index
    %230 = memref.load %arg1[%c50] : memref<256xf32, #tpu.memory_space<smem>>
    %231 = vector.broadcast %230 : f32 to vector<2x16x16xf32>
    %232 = arith.mulf %229, %231 : vector<2x16x16xf32>
    %233 = arith.addf %215, %232 : vector<2x16x16xf32>
    %c54 = arith.constant 54 : index
    %234 = memref.load %arg1[%c54] : memref<256xf32, #tpu.memory_space<smem>>
    %235 = vector.broadcast %234 : f32 to vector<2x16x16xf32>
    %236 = arith.mulf %229, %235 : vector<2x16x16xf32>
    %237 = arith.addf %219, %236 : vector<2x16x16xf32>
    %c58 = arith.constant 58 : index
    %238 = memref.load %arg1[%c58] : memref<256xf32, #tpu.memory_space<smem>>
    %239 = vector.broadcast %238 : f32 to vector<2x16x16xf32>
    %240 = arith.mulf %229, %239 : vector<2x16x16xf32>
    %241 = arith.addf %223, %240 : vector<2x16x16xf32>
    %c62 = arith.constant 62 : index
    %242 = memref.load %arg1[%c62] : memref<256xf32, #tpu.memory_space<smem>>
    %243 = vector.broadcast %242 : f32 to vector<2x16x16xf32>
    %244 = arith.mulf %229, %243 : vector<2x16x16xf32>
    %245 = arith.addf %227, %244 : vector<2x16x16xf32>
    %c3_87 = arith.constant 3 : index
    %c0_88 = arith.constant 0 : index
    %c0_89 = arith.constant 0 : index
    %c0_90 = arith.constant 0 : index
    %246 = vector.load %arg5[%c3_87, %c0_88, %c0_89, %c0_90] : memref<4x2x18x18xf32, #tpu.memory_space<vmem>>, vector<1x2x16x16xf32>
    %247 = vector.shape_cast %246 : vector<1x2x16x16xf32> to vector<2x16x16xf32>
    %c3_91 = arith.constant 3 : index
    %248 = memref.load %arg1[%c3_91] : memref<256xf32, #tpu.memory_space<smem>>
    %249 = vector.broadcast %248 : f32 to vector<2x16x16xf32>
    %250 = arith.mulf %247, %249 : vector<2x16x16xf32>
    %251 = arith.addf %233, %250 : vector<2x16x16xf32>
    %c7 = arith.constant 7 : index
    %252 = memref.load %arg1[%c7] : memref<256xf32, #tpu.memory_space<smem>>
    %253 = vector.broadcast %252 : f32 to vector<2x16x16xf32>
    %254 = arith.mulf %247, %253 : vector<2x16x16xf32>
    %255 = arith.addf %237, %254 : vector<2x16x16xf32>
    %c11 = arith.constant 11 : index
    %256 = memref.load %arg1[%c11] : memref<256xf32, #tpu.memory_space<smem>>
    %257 = vector.broadcast %256 : f32 to vector<2x16x16xf32>
    %258 = arith.mulf %247, %257 : vector<2x16x16xf32>
    %259 = arith.addf %241, %258 : vector<2x16x16xf32>
    %c15 = arith.constant 15 : index
    %260 = memref.load %arg1[%c15] : memref<256xf32, #tpu.memory_space<smem>>
    %261 = vector.broadcast %260 : f32 to vector<2x16x16xf32>
    %262 = arith.mulf %247, %261 : vector<2x16x16xf32>
    %263 = arith.addf %245, %262 : vector<2x16x16xf32>
    %c3_92 = arith.constant 3 : index
    %c0_93 = arith.constant 0 : index
    %c0_94 = arith.constant 0 : index
    %c1_95 = arith.constant 1 : index
    %264 = vector.load %arg5[%c3_92, %c0_93, %c0_94, %c1_95] : memref<4x2x18x18xf32, #tpu.memory_space<vmem>>, vector<1x2x16x16xf32>
    %265 = vector.shape_cast %264 : vector<1x2x16x16xf32> to vector<2x16x16xf32>
    %c19 = arith.constant 19 : index
    %266 = memref.load %arg1[%c19] : memref<256xf32, #tpu.memory_space<smem>>
    %267 = vector.broadcast %266 : f32 to vector<2x16x16xf32>
    %268 = arith.mulf %265, %267 : vector<2x16x16xf32>
    %269 = arith.addf %251, %268 : vector<2x16x16xf32>
    %c23 = arith.constant 23 : index
    %270 = memref.load %arg1[%c23] : memref<256xf32, #tpu.memory_space<smem>>
    %271 = vector.broadcast %270 : f32 to vector<2x16x16xf32>
    %272 = arith.mulf %265, %271 : vector<2x16x16xf32>
    %273 = arith.addf %255, %272 : vector<2x16x16xf32>
    %c27 = arith.constant 27 : index
    %274 = memref.load %arg1[%c27] : memref<256xf32, #tpu.memory_space<smem>>
    %275 = vector.broadcast %274 : f32 to vector<2x16x16xf32>
    %276 = arith.mulf %265, %275 : vector<2x16x16xf32>
    %277 = arith.addf %259, %276 : vector<2x16x16xf32>
    %c31 = arith.constant 31 : index
    %278 = memref.load %arg1[%c31] : memref<256xf32, #tpu.memory_space<smem>>
    %279 = vector.broadcast %278 : f32 to vector<2x16x16xf32>
    %280 = arith.mulf %265, %279 : vector<2x16x16xf32>
    %281 = arith.addf %263, %280 : vector<2x16x16xf32>
    %c3_96 = arith.constant 3 : index
    %c0_97 = arith.constant 0 : index
    %c1_98 = arith.constant 1 : index
    %c0_99 = arith.constant 0 : index
    %282 = vector.load %arg5[%c3_96, %c0_97, %c1_98, %c0_99] : memref<4x2x18x18xf32, #tpu.memory_space<vmem>>, vector<1x2x16x16xf32>
    %283 = vector.shape_cast %282 : vector<1x2x16x16xf32> to vector<2x16x16xf32>
    %c35 = arith.constant 35 : index
    %284 = memref.load %arg1[%c35] : memref<256xf32, #tpu.memory_space<smem>>
    %285 = vector.broadcast %284 : f32 to vector<2x16x16xf32>
    %286 = arith.mulf %283, %285 : vector<2x16x16xf32>
    %287 = arith.addf %269, %286 : vector<2x16x16xf32>
    %c39 = arith.constant 39 : index
    %288 = memref.load %arg1[%c39] : memref<256xf32, #tpu.memory_space<smem>>
    %289 = vector.broadcast %288 : f32 to vector<2x16x16xf32>
    %290 = arith.mulf %283, %289 : vector<2x16x16xf32>
    %291 = arith.addf %273, %290 : vector<2x16x16xf32>
    %c43 = arith.constant 43 : index
    %292 = memref.load %arg1[%c43] : memref<256xf32, #tpu.memory_space<smem>>
    %293 = vector.broadcast %292 : f32 to vector<2x16x16xf32>
    %294 = arith.mulf %283, %293 : vector<2x16x16xf32>
    %295 = arith.addf %277, %294 : vector<2x16x16xf32>
    %c47 = arith.constant 47 : index
    %296 = memref.load %arg1[%c47] : memref<256xf32, #tpu.memory_space<smem>>
    %297 = vector.broadcast %296 : f32 to vector<2x16x16xf32>
    %298 = arith.mulf %283, %297 : vector<2x16x16xf32>
    %299 = arith.addf %281, %298 : vector<2x16x16xf32>
    %c3_100 = arith.constant 3 : index
    %c0_101 = arith.constant 0 : index
    %c1_102 = arith.constant 1 : index
    %c1_103 = arith.constant 1 : index
    %300 = vector.load %arg5[%c3_100, %c0_101, %c1_102, %c1_103] : memref<4x2x18x18xf32, #tpu.memory_space<vmem>>, vector<1x2x16x16xf32>
    %301 = vector.shape_cast %300 : vector<1x2x16x16xf32> to vector<2x16x16xf32>
    %c51 = arith.constant 51 : index
    %302 = memref.load %arg1[%c51] : memref<256xf32, #tpu.memory_space<smem>>
    %303 = vector.broadcast %302 : f32 to vector<2x16x16xf32>
    %304 = arith.mulf %301, %303 : vector<2x16x16xf32>
    %305 = arith.addf %287, %304 : vector<2x16x16xf32>
    %c55 = arith.constant 55 : index
    %306 = memref.load %arg1[%c55] : memref<256xf32, #tpu.memory_space<smem>>
    %307 = vector.broadcast %306 : f32 to vector<2x16x16xf32>
    %308 = arith.mulf %301, %307 : vector<2x16x16xf32>
    %309 = arith.addf %291, %308 : vector<2x16x16xf32>
    %c59 = arith.constant 59 : index
    %310 = memref.load %arg1[%c59] : memref<256xf32, #tpu.memory_space<smem>>
    %311 = vector.broadcast %310 : f32 to vector<2x16x16xf32>
    %312 = arith.mulf %301, %311 : vector<2x16x16xf32>
    %313 = arith.addf %295, %312 : vector<2x16x16xf32>
    %c63 = arith.constant 63 : index
    %314 = memref.load %arg1[%c63] : memref<256xf32, #tpu.memory_space<smem>>
    %315 = vector.broadcast %314 : f32 to vector<2x16x16xf32>
    %316 = arith.mulf %301, %315 : vector<2x16x16xf32>
    %317 = arith.addf %299, %316 : vector<2x16x16xf32>
    %c0_104 = arith.constant 0 : index
    %c0_105 = arith.constant 0 : index
    %c0_106 = arith.constant 0 : index
    %c0_107 = arith.constant 0 : index
    %318 = vector.load %arg4[%c0_104, %c0_105, %c0_106, %c0_107] : memref<16x2x16x16xf32, #tpu.memory_space<vmem>>, vector<1x2x16x16xf32>
    %319 = vector.shape_cast %318 : vector<1x2x16x16xf32> to vector<2x16x16xf32>
    %320 = vector.shape_cast %305 : vector<2x16x16xf32> to vector<1x2x16x16xf32>
    tpu.vector_store %arg4[%c0_104, %c0_105, %c0_106, %c0_107], %320 {strides = array<i32>} : memref<16x2x16x16xf32, #tpu.memory_space<vmem>>, vector<1x2x16x16xf32>,
    %c4_108 = arith.constant 4 : index
    %c0_109 = arith.constant 0 : index
    %c0_110 = arith.constant 0 : index
    %c0_111 = arith.constant 0 : index
    %321 = vector.load %arg4[%c4_108, %c0_109, %c0_110, %c0_111] : memref<16x2x16x16xf32, #tpu.memory_space<vmem>>, vector<1x2x16x16xf32>
    %322 = vector.shape_cast %321 : vector<1x2x16x16xf32> to vector<2x16x16xf32>
    %323 = vector.shape_cast %309 : vector<2x16x16xf32> to vector<1x2x16x16xf32>
    tpu.vector_store %arg4[%c4_108, %c0_109, %c0_110, %c0_111], %323 {strides = array<i32>} : memref<16x2x16x16xf32, #tpu.memory_space<vmem>>, vector<1x2x16x16xf32>,
    %c8_112 = arith.constant 8 : index
    %c0_113 = arith.constant 0 : index
    %c0_114 = arith.constant 0 : index
    %c0_115 = arith.constant 0 : index
    %324 = vector.load %arg4[%c8_112, %c0_113, %c0_114, %c0_115] : memref<16x2x16x16xf32, #tpu.memory_space<vmem>>, vector<1x2x16x16xf32>
    %325 = vector.shape_cast %324 : vector<1x2x16x16xf32> to vector<2x16x16xf32>
    %326 = vector.shape_cast %313 : vector<2x16x16xf32> to vector<1x2x16x16xf32>
    tpu.vector_store %arg4[%c8_112, %c0_113, %c0_114, %c0_115], %326 {strides = array<i32>} : memref<16x2x16x16xf32, #tpu.memory_space<vmem>>, vector<1x2x16x16xf32>,
    %c12_116 = arith.constant 12 : index
    %c0_117 = arith.constant 0 : index
    %c0_118 = arith.constant 0 : index
    %c0_119 = arith.constant 0 : index
    %327 = vector.load %arg4[%c12_116, %c0_117, %c0_118, %c0_119] : memref<16x2x16x16xf32, #tpu.memory_space<vmem>>, vector<1x2x16x16xf32>
    %328 = vector.shape_cast %327 : vector<1x2x16x16xf32> to vector<2x16x16xf32>
    %329 = vector.shape_cast %317 : vector<2x16x16xf32> to vector<1x2x16x16xf32>
    tpu.vector_store %arg4[%c12_116, %c0_117, %c0_118, %c0_119], %329 {strides = array<i32>} : memref<16x2x16x16xf32, #tpu.memory_space<vmem>>, vector<1x2x16x16xf32>,
    %c0_120 = arith.constant 0 : index
    %330 = memref.load %arg2[%c0_120] : memref<4xf32, #tpu.memory_space<smem>>
    %331 = vector.broadcast %330 : f32 to vector<2x16x16xf32>
    %c1_121 = arith.constant 1 : index
    %332 = memref.load %arg2[%c1_121] : memref<4xf32, #tpu.memory_space<smem>>
    %333 = vector.broadcast %332 : f32 to vector<2x16x16xf32>
    %c2_122 = arith.constant 2 : index
    %334 = memref.load %arg2[%c2_122] : memref<4xf32, #tpu.memory_space<smem>>
    %335 = vector.broadcast %334 : f32 to vector<2x16x16xf32>
    %c3_123 = arith.constant 3 : index
    %336 = memref.load %arg2[%c3_123] : memref<4xf32, #tpu.memory_space<smem>>
    %337 = vector.broadcast %336 : f32 to vector<2x16x16xf32>
    %c0_124 = arith.constant 0 : index
    %c0_125 = arith.constant 0 : index
    %c0_126 = arith.constant 0 : index
    %c1_127 = arith.constant 1 : index
    %338 = vector.load %arg5[%c0_124, %c0_125, %c0_126, %c1_127] : memref<4x2x18x18xf32, #tpu.memory_space<vmem>>, vector<1x2x16x16xf32>
    %339 = vector.shape_cast %338 : vector<1x2x16x16xf32> to vector<2x16x16xf32>
    %c64 = arith.constant 64 : index
    %340 = memref.load %arg1[%c64] : memref<256xf32, #tpu.memory_space<smem>>
    %341 = vector.broadcast %340 : f32 to vector<2x16x16xf32>
    %342 = arith.mulf %339, %341 : vector<2x16x16xf32>
    %343 = arith.addf %331, %342 : vector<2x16x16xf32>
    %c68 = arith.constant 68 : index
    %344 = memref.load %arg1[%c68] : memref<256xf32, #tpu.memory_space<smem>>
    %345 = vector.broadcast %344 : f32 to vector<2x16x16xf32>
    %346 = arith.mulf %339, %345 : vector<2x16x16xf32>
    %347 = arith.addf %333, %346 : vector<2x16x16xf32>
    %c72 = arith.constant 72 : index
    %348 = memref.load %arg1[%c72] : memref<256xf32, #tpu.memory_space<smem>>
    %349 = vector.broadcast %348 : f32 to vector<2x16x16xf32>
    %350 = arith.mulf %339, %349 : vector<2x16x16xf32>
    %351 = arith.addf %335, %350 : vector<2x16x16xf32>
    %c76 = arith.constant 76 : index
    %352 = memref.load %arg1[%c76] : memref<256xf32, #tpu.memory_space<smem>>
    %353 = vector.broadcast %352 : f32 to vector<2x16x16xf32>
    %354 = arith.mulf %339, %353 : vector<2x16x16xf32>
    %355 = arith.addf %337, %354 : vector<2x16x16xf32>
    %c0_128 = arith.constant 0 : index
    %c0_129 = arith.constant 0 : index
    %c0_130 = arith.constant 0 : index
    %c2_131 = arith.constant 2 : index
    %356 = vector.load %arg5[%c0_128, %c0_129, %c0_130, %c2_131] : memref<4x2x18x18xf32, #tpu.memory_space<vmem>>, vector<1x2x16x16xf32>
    %357 = vector.shape_cast %356 : vector<1x2x16x16xf32> to vector<2x16x16xf32>
    %c80 = arith.constant 80 : index
    %358 = memref.load %arg1[%c80] : memref<256xf32, #tpu.memory_space<smem>>
    %359 = vector.broadcast %358 : f32 to vector<2x16x16xf32>
    %360 = arith.mulf %357, %359 : vector<2x16x16xf32>
    %361 = arith.addf %343, %360 : vector<2x16x16xf32>
    %c84 = arith.constant 84 : index
    %362 = memref.load %arg1[%c84] : memref<256xf32, #tpu.memory_space<smem>>
    %363 = vector.broadcast %362 : f32 to vector<2x16x16xf32>
    %364 = arith.mulf %357, %363 : vector<2x16x16xf32>
    %365 = arith.addf %347, %364 : vector<2x16x16xf32>
    %c88 = arith.constant 88 : index
    %366 = memref.load %arg1[%c88] : memref<256xf32, #tpu.memory_space<smem>>
    %367 = vector.broadcast %366 : f32 to vector<2x16x16xf32>
    %368 = arith.mulf %357, %367 : vector<2x16x16xf32>
    %369 = arith.addf %351, %368 : vector<2x16x16xf32>
    %c92 = arith.constant 92 : index
    %370 = memref.load %arg1[%c92] : memref<256xf32, #tpu.memory_space<smem>>
    %371 = vector.broadcast %370 : f32 to vector<2x16x16xf32>
    %372 = arith.mulf %357, %371 : vector<2x16x16xf32>
    %373 = arith.addf %355, %372 : vector<2x16x16xf32>
    %c0_132 = arith.constant 0 : index
    %c0_133 = arith.constant 0 : index
    %c1_134 = arith.constant 1 : index
    %c1_135 = arith.constant 1 : index
    %374 = vector.load %arg5[%c0_132, %c0_133, %c1_134, %c1_135] : memref<4x2x18x18xf32, #tpu.memory_space<vmem>>, vector<1x2x16x16xf32>
    %375 = vector.shape_cast %374 : vector<1x2x16x16xf32> to vector<2x16x16xf32>
    %c96 = arith.constant 96 : index
    %376 = memref.load %arg1[%c96] : memref<256xf32, #tpu.memory_space<smem>>
    %377 = vector.broadcast %376 : f32 to vector<2x16x16xf32>
    %378 = arith.mulf %375, %377 : vector<2x16x16xf32>
    %379 = arith.addf %361, %378 : vector<2x16x16xf32>
    %c100 = arith.constant 100 : index
    %380 = memref.load %arg1[%c100] : memref<256xf32, #tpu.memory_space<smem>>
    %381 = vector.broadcast %380 : f32 to vector<2x16x16xf32>
    %382 = arith.mulf %375, %381 : vector<2x16x16xf32>
    %383 = arith.addf %365, %382 : vector<2x16x16xf32>
    %c104 = arith.constant 104 : index
    %384 = memref.load %arg1[%c104] : memref<256xf32, #tpu.memory_space<smem>>
    %385 = vector.broadcast %384 : f32 to vector<2x16x16xf32>
    %386 = arith.mulf %375, %385 : vector<2x16x16xf32>
    %387 = arith.addf %369, %386 : vector<2x16x16xf32>
    %c108 = arith.constant 108 : index
    %388 = memref.load %arg1[%c108] : memref<256xf32, #tpu.memory_space<smem>>
    %389 = vector.broadcast %388 : f32 to vector<2x16x16xf32>
    %390 = arith.mulf %375, %389 : vector<2x16x16xf32>
    %391 = arith.addf %373, %390 : vector<2x16x16xf32>
    %c0_136 = arith.constant 0 : index
    %c0_137 = arith.constant 0 : index
    %c1_138 = arith.constant 1 : index
    %c2_139 = arith.constant 2 : index
    %392 = vector.load %arg5[%c0_136, %c0_137, %c1_138, %c2_139] : memref<4x2x18x18xf32, #tpu.memory_space<vmem>>, vector<1x2x16x16xf32>
    %393 = vector.shape_cast %392 : vector<1x2x16x16xf32> to vector<2x16x16xf32>
    %c112 = arith.constant 112 : index
    %394 = memref.load %arg1[%c112] : memref<256xf32, #tpu.memory_space<smem>>
    %395 = vector.broadcast %394 : f32 to vector<2x16x16xf32>
    %396 = arith.mulf %393, %395 : vector<2x16x16xf32>
    %397 = arith.addf %379, %396 : vector<2x16x16xf32>
    %c116 = arith.constant 116 : index
    %398 = memref.load %arg1[%c116] : memref<256xf32, #tpu.memory_space<smem>>
    %399 = vector.broadcast %398 : f32 to vector<2x16x16xf32>
    %400 = arith.mulf %393, %399 : vector<2x16x16xf32>
    %401 = arith.addf %383, %400 : vector<2x16x16xf32>
    %c120 = arith.constant 120 : index
    %402 = memref.load %arg1[%c120] : memref<256xf32, #tpu.memory_space<smem>>
    %403 = vector.broadcast %402 : f32 to vector<2x16x16xf32>
    %404 = arith.mulf %393, %403 : vector<2x16x16xf32>
    %405 = arith.addf %387, %404 : vector<2x16x16xf32>
    %c124 = arith.constant 124 : index
    %406 = memref.load %arg1[%c124] : memref<256xf32, #tpu.memory_space<smem>>
    %407 = vector.broadcast %406 : f32 to vector<2x16x16xf32>
    %408 = arith.mulf %393, %407 : vector<2x16x16xf32>
    %409 = arith.addf %391, %408 : vector<2x16x16xf32>
    %c1_140 = arith.constant 1 : index
    %c0_141 = arith.constant 0 : index
    %c0_142 = arith.constant 0 : index
    %c1_143 = arith.constant 1 : index
    %410 = vector.load %arg5[%c1_140, %c0_141, %c0_142, %c1_143] : memref<4x2x18x18xf32, #tpu.memory_space<vmem>>, vector<1x2x16x16xf32>
    %411 = vector.shape_cast %410 : vector<1x2x16x16xf32> to vector<2x16x16xf32>
    %c65 = arith.constant 65 : index
    %412 = memref.load %arg1[%c65] : memref<256xf32, #tpu.memory_space<smem>>
    %413 = vector.broadcast %412 : f32 to vector<2x16x16xf32>
    %414 = arith.mulf %411, %413 : vector<2x16x16xf32>
    %415 = arith.addf %397, %414 : vector<2x16x16xf32>
    %c69 = arith.constant 69 : index
    %416 = memref.load %arg1[%c69] : memref<256xf32, #tpu.memory_space<smem>>
    %417 = vector.broadcast %416 : f32 to vector<2x16x16xf32>
    %418 = arith.mulf %411, %417 : vector<2x16x16xf32>
    %419 = arith.addf %401, %418 : vector<2x16x16xf32>
    %c73 = arith.constant 73 : index
    %420 = memref.load %arg1[%c73] : memref<256xf32, #tpu.memory_space<smem>>
    %421 = vector.broadcast %420 : f32 to vector<2x16x16xf32>
    %422 = arith.mulf %411, %421 : vector<2x16x16xf32>
    %423 = arith.addf %405, %422 : vector<2x16x16xf32>
    %c77 = arith.constant 77 : index
    %424 = memref.load %arg1[%c77] : memref<256xf32, #tpu.memory_space<smem>>
    %425 = vector.broadcast %424 : f32 to vector<2x16x16xf32>
    %426 = arith.mulf %411, %425 : vector<2x16x16xf32>
    %427 = arith.addf %409, %426 : vector<2x16x16xf32>
    %c1_144 = arith.constant 1 : index
    %c0_145 = arith.constant 0 : index
    %c0_146 = arith.constant 0 : index
    %c2_147 = arith.constant 2 : index
    %428 = vector.load %arg5[%c1_144, %c0_145, %c0_146, %c2_147] : memref<4x2x18x18xf32, #tpu.memory_space<vmem>>, vector<1x2x16x16xf32>
    %429 = vector.shape_cast %428 : vector<1x2x16x16xf32> to vector<2x16x16xf32>
    %c81 = arith.constant 81 : index
    %430 = memref.load %arg1[%c81] : memref<256xf32, #tpu.memory_space<smem>>
    %431 = vector.broadcast %430 : f32 to vector<2x16x16xf32>
    %432 = arith.mulf %429, %431 : vector<2x16x16xf32>
    %433 = arith.addf %415, %432 : vector<2x16x16xf32>
    %c85 = arith.constant 85 : index
    %434 = memref.load %arg1[%c85] : memref<256xf32, #tpu.memory_space<smem>>
    %435 = vector.broadcast %434 : f32 to vector<2x16x16xf32>
    %436 = arith.mulf %429, %435 : vector<2x16x16xf32>
    %437 = arith.addf %419, %436 : vector<2x16x16xf32>
    %c89 = arith.constant 89 : index
    %438 = memref.load %arg1[%c89] : memref<256xf32, #tpu.memory_space<smem>>
    %439 = vector.broadcast %438 : f32 to vector<2x16x16xf32>
    %440 = arith.mulf %429, %439 : vector<2x16x16xf32>
    %441 = arith.addf %423, %440 : vector<2x16x16xf32>
    %c93 = arith.constant 93 : index
    %442 = memref.load %arg1[%c93] : memref<256xf32, #tpu.memory_space<smem>>
    %443 = vector.broadcast %442 : f32 to vector<2x16x16xf32>
    %444 = arith.mulf %429, %443 : vector<2x16x16xf32>
    %445 = arith.addf %427, %444 : vector<2x16x16xf32>
    %c1_148 = arith.constant 1 : index
    %c0_149 = arith.constant 0 : index
    %c1_150 = arith.constant 1 : index
    %c1_151 = arith.constant 1 : index
    %446 = vector.load %arg5[%c1_148, %c0_149, %c1_150, %c1_151] : memref<4x2x18x18xf32, #tpu.memory_space<vmem>>, vector<1x2x16x16xf32>
    %447 = vector.shape_cast %446 : vector<1x2x16x16xf32> to vector<2x16x16xf32>
    %c97 = arith.constant 97 : index
    %448 = memref.load %arg1[%c97] : memref<256xf32, #tpu.memory_space<smem>>
    %449 = vector.broadcast %448 : f32 to vector<2x16x16xf32>
    %450 = arith.mulf %447, %449 : vector<2x16x16xf32>
    %451 = arith.addf %433, %450 : vector<2x16x16xf32>
    %c101 = arith.constant 101 : index
    %452 = memref.load %arg1[%c101] : memref<256xf32, #tpu.memory_space<smem>>
    %453 = vector.broadcast %452 : f32 to vector<2x16x16xf32>
    %454 = arith.mulf %447, %453 : vector<2x16x16xf32>
    %455 = arith.addf %437, %454 : vector<2x16x16xf32>
    %c105 = arith.constant 105 : index
    %456 = memref.load %arg1[%c105] : memref<256xf32, #tpu.memory_space<smem>>
    %457 = vector.broadcast %456 : f32 to vector<2x16x16xf32>
    %458 = arith.mulf %447, %457 : vector<2x16x16xf32>
    %459 = arith.addf %441, %458 : vector<2x16x16xf32>
    %c109 = arith.constant 109 : index
    %460 = memref.load %arg1[%c109] : memref<256xf32, #tpu.memory_space<smem>>
    %461 = vector.broadcast %460 : f32 to vector<2x16x16xf32>
    %462 = arith.mulf %447, %461 : vector<2x16x16xf32>
    %463 = arith.addf %445, %462 : vector<2x16x16xf32>
    %c1_152 = arith.constant 1 : index
    %c0_153 = arith.constant 0 : index
    %c1_154 = arith.constant 1 : index
    %c2_155 = arith.constant 2 : index
    %464 = vector.load %arg5[%c1_152, %c0_153, %c1_154, %c2_155] : memref<4x2x18x18xf32, #tpu.memory_space<vmem>>, vector<1x2x16x16xf32>
    %465 = vector.shape_cast %464 : vector<1x2x16x16xf32> to vector<2x16x16xf32>
    %c113 = arith.constant 113 : index
    %466 = memref.load %arg1[%c113] : memref<256xf32, #tpu.memory_space<smem>>
    %467 = vector.broadcast %466 : f32 to vector<2x16x16xf32>
    %468 = arith.mulf %465, %467 : vector<2x16x16xf32>
    %469 = arith.addf %451, %468 : vector<2x16x16xf32>
    %c117 = arith.constant 117 : index
    %470 = memref.load %arg1[%c117] : memref<256xf32, #tpu.memory_space<smem>>
    %471 = vector.broadcast %470 : f32 to vector<2x16x16xf32>
    %472 = arith.mulf %465, %471 : vector<2x16x16xf32>
    %473 = arith.addf %455, %472 : vector<2x16x16xf32>
    %c121 = arith.constant 121 : index
    %474 = memref.load %arg1[%c121] : memref<256xf32, #tpu.memory_space<smem>>
    %475 = vector.broadcast %474 : f32 to vector<2x16x16xf32>
    %476 = arith.mulf %465, %475 : vector<2x16x16xf32>
    %477 = arith.addf %459, %476 : vector<2x16x16xf32>
    %c125 = arith.constant 125 : index
    %478 = memref.load %arg1[%c125] : memref<256xf32, #tpu.memory_space<smem>>
    %479 = vector.broadcast %478 : f32 to vector<2x16x16xf32>
    %480 = arith.mulf %465, %479 : vector<2x16x16xf32>
    %481 = arith.addf %463, %480 : vector<2x16x16xf32>
    %c2_156 = arith.constant 2 : index
    %c0_157 = arith.constant 0 : index
    %c0_158 = arith.constant 0 : index
    %c1_159 = arith.constant 1 : index
    %482 = vector.load %arg5[%c2_156, %c0_157, %c0_158, %c1_159] : memref<4x2x18x18xf32, #tpu.memory_space<vmem>>, vector<1x2x16x16xf32>
    %483 = vector.shape_cast %482 : vector<1x2x16x16xf32> to vector<2x16x16xf32>
    %c66 = arith.constant 66 : index
    %484 = memref.load %arg1[%c66] : memref<256xf32, #tpu.memory_space<smem>>
    %485 = vector.broadcast %484 : f32 to vector<2x16x16xf32>
    %486 = arith.mulf %483, %485 : vector<2x16x16xf32>
    %487 = arith.addf %469, %486 : vector<2x16x16xf32>
    %c70 = arith.constant 70 : index
    %488 = memref.load %arg1[%c70] : memref<256xf32, #tpu.memory_space<smem>>
    %489 = vector.broadcast %488 : f32 to vector<2x16x16xf32>
    %490 = arith.mulf %483, %489 : vector<2x16x16xf32>
    %491 = arith.addf %473, %490 : vector<2x16x16xf32>
    %c74 = arith.constant 74 : index
    %492 = memref.load %arg1[%c74] : memref<256xf32, #tpu.memory_space<smem>>
    %493 = vector.broadcast %492 : f32 to vector<2x16x16xf32>
    %494 = arith.mulf %483, %493 : vector<2x16x16xf32>
    %495 = arith.addf %477, %494 : vector<2x16x16xf32>
    %c78 = arith.constant 78 : index
    %496 = memref.load %arg1[%c78] : memref<256xf32, #tpu.memory_space<smem>>
    %497 = vector.broadcast %496 : f32 to vector<2x16x16xf32>
    %498 = arith.mulf %483, %497 : vector<2x16x16xf32>
    %499 = arith.addf %481, %498 : vector<2x16x16xf32>
    %c2_160 = arith.constant 2 : index
    %c0_161 = arith.constant 0 : index
    %c0_162 = arith.constant 0 : index
    %c2_163 = arith.constant 2 : index
    %500 = vector.load %arg5[%c2_160, %c0_161, %c0_162, %c2_163] : memref<4x2x18x18xf32, #tpu.memory_space<vmem>>, vector<1x2x16x16xf32>
    %501 = vector.shape_cast %500 : vector<1x2x16x16xf32> to vector<2x16x16xf32>
    %c82 = arith.constant 82 : index
    %502 = memref.load %arg1[%c82] : memref<256xf32, #tpu.memory_space<smem>>
    %503 = vector.broadcast %502 : f32 to vector<2x16x16xf32>
    %504 = arith.mulf %501, %503 : vector<2x16x16xf32>
    %505 = arith.addf %487, %504 : vector<2x16x16xf32>
    %c86 = arith.constant 86 : index
    %506 = memref.load %arg1[%c86] : memref<256xf32, #tpu.memory_space<smem>>
    %507 = vector.broadcast %506 : f32 to vector<2x16x16xf32>
    %508 = arith.mulf %501, %507 : vector<2x16x16xf32>
    %509 = arith.addf %491, %508 : vector<2x16x16xf32>
    %c90 = arith.constant 90 : index
    %510 = memref.load %arg1[%c90] : memref<256xf32, #tpu.memory_space<smem>>
    %511 = vector.broadcast %510 : f32 to vector<2x16x16xf32>
    %512 = arith.mulf %501, %511 : vector<2x16x16xf32>
    %513 = arith.addf %495, %512 : vector<2x16x16xf32>
    %c94 = arith.constant 94 : index
    %514 = memref.load %arg1[%c94] : memref<256xf32, #tpu.memory_space<smem>>
    %515 = vector.broadcast %514 : f32 to vector<2x16x16xf32>
    %516 = arith.mulf %501, %515 : vector<2x16x16xf32>
    %517 = arith.addf %499, %516 : vector<2x16x16xf32>
    %c2_164 = arith.constant 2 : index
    %c0_165 = arith.constant 0 : index
    %c1_166 = arith.constant 1 : index
    %c1_167 = arith.constant 1 : index
    %518 = vector.load %arg5[%c2_164, %c0_165, %c1_166, %c1_167] : memref<4x2x18x18xf32, #tpu.memory_space<vmem>>, vector<1x2x16x16xf32>
    %519 = vector.shape_cast %518 : vector<1x2x16x16xf32> to vector<2x16x16xf32>
    %c98 = arith.constant 98 : index
    %520 = memref.load %arg1[%c98] : memref<256xf32, #tpu.memory_space<smem>>
    %521 = vector.broadcast %520 : f32 to vector<2x16x16xf32>
    %522 = arith.mulf %519, %521 : vector<2x16x16xf32>
    %523 = arith.addf %505, %522 : vector<2x16x16xf32>
    %c102 = arith.constant 102 : index
    %524 = memref.load %arg1[%c102] : memref<256xf32, #tpu.memory_space<smem>>
    %525 = vector.broadcast %524 : f32 to vector<2x16x16xf32>
    %526 = arith.mulf %519, %525 : vector<2x16x16xf32>
    %527 = arith.addf %509, %526 : vector<2x16x16xf32>
    %c106 = arith.constant 106 : index
    %528 = memref.load %arg1[%c106] : memref<256xf32, #tpu.memory_space<smem>>
    %529 = vector.broadcast %528 : f32 to vector<2x16x16xf32>
    %530 = arith.mulf %519, %529 : vector<2x16x16xf32>
    %531 = arith.addf %513, %530 : vector<2x16x16xf32>
    %c110 = arith.constant 110 : index
    %532 = memref.load %arg1[%c110] : memref<256xf32, #tpu.memory_space<smem>>
    %533 = vector.broadcast %532 : f32 to vector<2x16x16xf32>
    %534 = arith.mulf %519, %533 : vector<2x16x16xf32>
    %535 = arith.addf %517, %534 : vector<2x16x16xf32>
    %c2_168 = arith.constant 2 : index
    %c0_169 = arith.constant 0 : index
    %c1_170 = arith.constant 1 : index
    %c2_171 = arith.constant 2 : index
    %536 = vector.load %arg5[%c2_168, %c0_169, %c1_170, %c2_171] : memref<4x2x18x18xf32, #tpu.memory_space<vmem>>, vector<1x2x16x16xf32>
    %537 = vector.shape_cast %536 : vector<1x2x16x16xf32> to vector<2x16x16xf32>
    %c114 = arith.constant 114 : index
    %538 = memref.load %arg1[%c114] : memref<256xf32, #tpu.memory_space<smem>>
    %539 = vector.broadcast %538 : f32 to vector<2x16x16xf32>
    %540 = arith.mulf %537, %539 : vector<2x16x16xf32>
    %541 = arith.addf %523, %540 : vector<2x16x16xf32>
    %c118 = arith.constant 118 : index
    %542 = memref.load %arg1[%c118] : memref<256xf32, #tpu.memory_space<smem>>
    %543 = vector.broadcast %542 : f32 to vector<2x16x16xf32>
    %544 = arith.mulf %537, %543 : vector<2x16x16xf32>
    %545 = arith.addf %527, %544 : vector<2x16x16xf32>
    %c122 = arith.constant 122 : index
    %546 = memref.load %arg1[%c122] : memref<256xf32, #tpu.memory_space<smem>>
    %547 = vector.broadcast %546 : f32 to vector<2x16x16xf32>
    %548 = arith.mulf %537, %547 : vector<2x16x16xf32>
    %549 = arith.addf %531, %548 : vector<2x16x16xf32>
    %c126 = arith.constant 126 : index
    %550 = memref.load %arg1[%c126] : memref<256xf32, #tpu.memory_space<smem>>
    %551 = vector.broadcast %550 : f32 to vector<2x16x16xf32>
    %552 = arith.mulf %537, %551 : vector<2x16x16xf32>
    %553 = arith.addf %535, %552 : vector<2x16x16xf32>
    %c3_172 = arith.constant 3 : index
    %c0_173 = arith.constant 0 : index
    %c0_174 = arith.constant 0 : index
    %c1_175 = arith.constant 1 : index
    %554 = vector.load %arg5[%c3_172, %c0_173, %c0_174, %c1_175] : memref<4x2x18x18xf32, #tpu.memory_space<vmem>>, vector<1x2x16x16xf32>
    %555 = vector.shape_cast %554 : vector<1x2x16x16xf32> to vector<2x16x16xf32>
    %c67 = arith.constant 67 : index
    %556 = memref.load %arg1[%c67] : memref<256xf32, #tpu.memory_space<smem>>
    %557 = vector.broadcast %556 : f32 to vector<2x16x16xf32>
    %558 = arith.mulf %555, %557 : vector<2x16x16xf32>
    %559 = arith.addf %541, %558 : vector<2x16x16xf32>
    %c71 = arith.constant 71 : index
    %560 = memref.load %arg1[%c71] : memref<256xf32, #tpu.memory_space<smem>>
    %561 = vector.broadcast %560 : f32 to vector<2x16x16xf32>
    %562 = arith.mulf %555, %561 : vector<2x16x16xf32>
    %563 = arith.addf %545, %562 : vector<2x16x16xf32>
    %c75 = arith.constant 75 : index
    %564 = memref.load %arg1[%c75] : memref<256xf32, #tpu.memory_space<smem>>
    %565 = vector.broadcast %564 : f32 to vector<2x16x16xf32>
    %566 = arith.mulf %555, %565 : vector<2x16x16xf32>
    %567 = arith.addf %549, %566 : vector<2x16x16xf32>
    %c79 = arith.constant 79 : index
    %568 = memref.load %arg1[%c79] : memref<256xf32, #tpu.memory_space<smem>>
    %569 = vector.broadcast %568 : f32 to vector<2x16x16xf32>
    %570 = arith.mulf %555, %569 : vector<2x16x16xf32>
    %571 = arith.addf %553, %570 : vector<2x16x16xf32>
    %c3_176 = arith.constant 3 : index
    %c0_177 = arith.constant 0 : index
    %c0_178 = arith.constant 0 : index
    %c2_179 = arith.constant 2 : index
    %572 = vector.load %arg5[%c3_176, %c0_177, %c0_178, %c2_179] : memref<4x2x18x18xf32, #tpu.memory_space<vmem>>, vector<1x2x16x16xf32>
    %573 = vector.shape_cast %572 : vector<1x2x16x16xf32> to vector<2x16x16xf32>
    %c83 = arith.constant 83 : index
    %574 = memref.load %arg1[%c83] : memref<256xf32, #tpu.memory_space<smem>>
    %575 = vector.broadcast %574 : f32 to vector<2x16x16xf32>
    %576 = arith.mulf %573, %575 : vector<2x16x16xf32>
    %577 = arith.addf %559, %576 : vector<2x16x16xf32>
    %c87 = arith.constant 87 : index
    %578 = memref.load %arg1[%c87] : memref<256xf32, #tpu.memory_space<smem>>
    %579 = vector.broadcast %578 : f32 to vector<2x16x16xf32>
    %580 = arith.mulf %573, %579 : vector<2x16x16xf32>
    %581 = arith.addf %563, %580 : vector<2x16x16xf32>
    %c91 = arith.constant 91 : index
    %582 = memref.load %arg1[%c91] : memref<256xf32, #tpu.memory_space<smem>>
    %583 = vector.broadcast %582 : f32 to vector<2x16x16xf32>
    %584 = arith.mulf %573, %583 : vector<2x16x16xf32>
    %585 = arith.addf %567, %584 : vector<2x16x16xf32>
    %c95 = arith.constant 95 : index
    %586 = memref.load %arg1[%c95] : memref<256xf32, #tpu.memory_space<smem>>
    %587 = vector.broadcast %586 : f32 to vector<2x16x16xf32>
    %588 = arith.mulf %573, %587 : vector<2x16x16xf32>
    %589 = arith.addf %571, %588 : vector<2x16x16xf32>
    %c3_180 = arith.constant 3 : index
    %c0_181 = arith.constant 0 : index
    %c1_182 = arith.constant 1 : index
    %c1_183 = arith.constant 1 : index
    %590 = vector.load %arg5[%c3_180, %c0_181, %c1_182, %c1_183] : memref<4x2x18x18xf32, #tpu.memory_space<vmem>>, vector<1x2x16x16xf32>
    %591 = vector.shape_cast %590 : vector<1x2x16x16xf32> to vector<2x16x16xf32>
    %c99 = arith.constant 99 : index
    %592 = memref.load %arg1[%c99] : memref<256xf32, #tpu.memory_space<smem>>
    %593 = vector.broadcast %592 : f32 to vector<2x16x16xf32>
    %594 = arith.mulf %591, %593 : vector<2x16x16xf32>
    %595 = arith.addf %577, %594 : vector<2x16x16xf32>
    %c103 = arith.constant 103 : index
    %596 = memref.load %arg1[%c103] : memref<256xf32, #tpu.memory_space<smem>>
    %597 = vector.broadcast %596 : f32 to vector<2x16x16xf32>
    %598 = arith.mulf %591, %597 : vector<2x16x16xf32>
    %599 = arith.addf %581, %598 : vector<2x16x16xf32>
    %c107 = arith.constant 107 : index
    %600 = memref.load %arg1[%c107] : memref<256xf32, #tpu.memory_space<smem>>
    %601 = vector.broadcast %600 : f32 to vector<2x16x16xf32>
    %602 = arith.mulf %591, %601 : vector<2x16x16xf32>
    %603 = arith.addf %585, %602 : vector<2x16x16xf32>
    %c111 = arith.constant 111 : index
    %604 = memref.load %arg1[%c111] : memref<256xf32, #tpu.memory_space<smem>>
    %605 = vector.broadcast %604 : f32 to vector<2x16x16xf32>
    %606 = arith.mulf %591, %605 : vector<2x16x16xf32>
    %607 = arith.addf %589, %606 : vector<2x16x16xf32>
    %c3_184 = arith.constant 3 : index
    %c0_185 = arith.constant 0 : index
    %c1_186 = arith.constant 1 : index
    %c2_187 = arith.constant 2 : index
    %608 = vector.load %arg5[%c3_184, %c0_185, %c1_186, %c2_187] : memref<4x2x18x18xf32, #tpu.memory_space<vmem>>, vector<1x2x16x16xf32>
    %609 = vector.shape_cast %608 : vector<1x2x16x16xf32> to vector<2x16x16xf32>
    %c115 = arith.constant 115 : index
    %610 = memref.load %arg1[%c115] : memref<256xf32, #tpu.memory_space<smem>>
    %611 = vector.broadcast %610 : f32 to vector<2x16x16xf32>
    %612 = arith.mulf %609, %611 : vector<2x16x16xf32>
    %613 = arith.addf %595, %612 : vector<2x16x16xf32>
    %c119 = arith.constant 119 : index
    %614 = memref.load %arg1[%c119] : memref<256xf32, #tpu.memory_space<smem>>
    %615 = vector.broadcast %614 : f32 to vector<2x16x16xf32>
    %616 = arith.mulf %609, %615 : vector<2x16x16xf32>
    %617 = arith.addf %599, %616 : vector<2x16x16xf32>
    %c123 = arith.constant 123 : index
    %618 = memref.load %arg1[%c123] : memref<256xf32, #tpu.memory_space<smem>>
    %619 = vector.broadcast %618 : f32 to vector<2x16x16xf32>
    %620 = arith.mulf %609, %619 : vector<2x16x16xf32>
    %621 = arith.addf %603, %620 : vector<2x16x16xf32>
    %c127 = arith.constant 127 : index
    %622 = memref.load %arg1[%c127] : memref<256xf32, #tpu.memory_space<smem>>
    %623 = vector.broadcast %622 : f32 to vector<2x16x16xf32>
    %624 = arith.mulf %609, %623 : vector<2x16x16xf32>
    %625 = arith.addf %607, %624 : vector<2x16x16xf32>
    %c1_188 = arith.constant 1 : index
    %c0_189 = arith.constant 0 : index
    %c0_190 = arith.constant 0 : index
    %c0_191 = arith.constant 0 : index
    %626 = vector.load %arg4[%c1_188, %c0_189, %c0_190, %c0_191] : memref<16x2x16x16xf32, #tpu.memory_space<vmem>>, vector<1x2x16x16xf32>
    %627 = vector.shape_cast %626 : vector<1x2x16x16xf32> to vector<2x16x16xf32>
    %628 = vector.shape_cast %613 : vector<2x16x16xf32> to vector<1x2x16x16xf32>
    tpu.vector_store %arg4[%c1_188, %c0_189, %c0_190, %c0_191], %628 {strides = array<i32>} : memref<16x2x16x16xf32, #tpu.memory_space<vmem>>, vector<1x2x16x16xf32>,
    %c5_192 = arith.constant 5 : index
    %c0_193 = arith.constant 0 : index
    %c0_194 = arith.constant 0 : index
    %c0_195 = arith.constant 0 : index
    %629 = vector.load %arg4[%c5_192, %c0_193, %c0_194, %c0_195] : memref<16x2x16x16xf32, #tpu.memory_space<vmem>>, vector<1x2x16x16xf32>
    %630 = vector.shape_cast %629 : vector<1x2x16x16xf32> to vector<2x16x16xf32>
    %631 = vector.shape_cast %617 : vector<2x16x16xf32> to vector<1x2x16x16xf32>
    tpu.vector_store %arg4[%c5_192, %c0_193, %c0_194, %c0_195], %631 {strides = array<i32>} : memref<16x2x16x16xf32, #tpu.memory_space<vmem>>, vector<1x2x16x16xf32>,
    %c9_196 = arith.constant 9 : index
    %c0_197 = arith.constant 0 : index
    %c0_198 = arith.constant 0 : index
    %c0_199 = arith.constant 0 : index
    %632 = vector.load %arg4[%c9_196, %c0_197, %c0_198, %c0_199] : memref<16x2x16x16xf32, #tpu.memory_space<vmem>>, vector<1x2x16x16xf32>
    %633 = vector.shape_cast %632 : vector<1x2x16x16xf32> to vector<2x16x16xf32>
    %634 = vector.shape_cast %621 : vector<2x16x16xf32> to vector<1x2x16x16xf32>
    tpu.vector_store %arg4[%c9_196, %c0_197, %c0_198, %c0_199], %634 {strides = array<i32>} : memref<16x2x16x16xf32, #tpu.memory_space<vmem>>, vector<1x2x16x16xf32>,
    %c13_200 = arith.constant 13 : index
    %c0_201 = arith.constant 0 : index
    %c0_202 = arith.constant 0 : index
    %c0_203 = arith.constant 0 : index
    %635 = vector.load %arg4[%c13_200, %c0_201, %c0_202, %c0_203] : memref<16x2x16x16xf32, #tpu.memory_space<vmem>>, vector<1x2x16x16xf32>
    %636 = vector.shape_cast %635 : vector<1x2x16x16xf32> to vector<2x16x16xf32>
    %637 = vector.shape_cast %625 : vector<2x16x16xf32> to vector<1x2x16x16xf32>
    tpu.vector_store %arg4[%c13_200, %c0_201, %c0_202, %c0_203], %637 {strides = array<i32>} : memref<16x2x16x16xf32, #tpu.memory_space<vmem>>, vector<1x2x16x16xf32>,
    %c0_204 = arith.constant 0 : index
    %638 = memref.load %arg2[%c0_204] : memref<4xf32, #tpu.memory_space<smem>>
    %639 = vector.broadcast %638 : f32 to vector<2x16x16xf32>
    %c1_205 = arith.constant 1 : index
    %640 = memref.load %arg2[%c1_205] : memref<4xf32, #tpu.memory_space<smem>>
    %641 = vector.broadcast %640 : f32 to vector<2x16x16xf32>
    %c2_206 = arith.constant 2 : index
    %642 = memref.load %arg2[%c2_206] : memref<4xf32, #tpu.memory_space<smem>>
    %643 = vector.broadcast %642 : f32 to vector<2x16x16xf32>
    %c3_207 = arith.constant 3 : index
    %644 = memref.load %arg2[%c3_207] : memref<4xf32, #tpu.memory_space<smem>>
    %645 = vector.broadcast %644 : f32 to vector<2x16x16xf32>
    %c0_208 = arith.constant 0 : index
    %c0_209 = arith.constant 0 : index
    %c1_210 = arith.constant 1 : index
    %c0_211 = arith.constant 0 : index
    %646 = vector.load %arg5[%c0_208, %c0_209, %c1_210, %c0_211] : memref<4x2x18x18xf32, #tpu.memory_space<vmem>>, vector<1x2x16x16xf32>
    %647 = vector.shape_cast %646 : vector<1x2x16x16xf32> to vector<2x16x16xf32>
    %c128 = arith.constant 128 : index
    %648 = memref.load %arg1[%c128] : memref<256xf32, #tpu.memory_space<smem>>
    %649 = vector.broadcast %648 : f32 to vector<2x16x16xf32>
    %650 = arith.mulf %647, %649 : vector<2x16x16xf32>
    %651 = arith.addf %639, %650 : vector<2x16x16xf32>
    %c132 = arith.constant 132 : index
    %652 = memref.load %arg1[%c132] : memref<256xf32, #tpu.memory_space<smem>>
    %653 = vector.broadcast %652 : f32 to vector<2x16x16xf32>
    %654 = arith.mulf %647, %653 : vector<2x16x16xf32>
    %655 = arith.addf %641, %654 : vector<2x16x16xf32>
    %c136 = arith.constant 136 : index
    %656 = memref.load %arg1[%c136] : memref<256xf32, #tpu.memory_space<smem>>
    %657 = vector.broadcast %656 : f32 to vector<2x16x16xf32>
    %658 = arith.mulf %647, %657 : vector<2x16x16xf32>
    %659 = arith.addf %643, %658 : vector<2x16x16xf32>
    %c140 = arith.constant 140 : index
    %660 = memref.load %arg1[%c140] : memref<256xf32, #tpu.memory_space<smem>>
    %661 = vector.broadcast %660 : f32 to vector<2x16x16xf32>
    %662 = arith.mulf %647, %661 : vector<2x16x16xf32>
    %663 = arith.addf %645, %662 : vector<2x16x16xf32>
    %c0_212 = arith.constant 0 : index
    %c0_213 = arith.constant 0 : index
    %c1_214 = arith.constant 1 : index
    %c1_215 = arith.constant 1 : index
    %664 = vector.load %arg5[%c0_212, %c0_213, %c1_214, %c1_215] : memref<4x2x18x18xf32, #tpu.memory_space<vmem>>, vector<1x2x16x16xf32>
    %665 = vector.shape_cast %664 : vector<1x2x16x16xf32> to vector<2x16x16xf32>
    %c144 = arith.constant 144 : index
    %666 = memref.load %arg1[%c144] : memref<256xf32, #tpu.memory_space<smem>>
    %667 = vector.broadcast %666 : f32 to vector<2x16x16xf32>
    %668 = arith.mulf %665, %667 : vector<2x16x16xf32>
    %669 = arith.addf %651, %668 : vector<2x16x16xf32>
    %c148 = arith.constant 148 : index
    %670 = memref.load %arg1[%c148] : memref<256xf32, #tpu.memory_space<smem>>
    %671 = vector.broadcast %670 : f32 to vector<2x16x16xf32>
    %672 = arith.mulf %665, %671 : vector<2x16x16xf32>
    %673 = arith.addf %655, %672 : vector<2x16x16xf32>
    %c152 = arith.constant 152 : index
    %674 = memref.load %arg1[%c152] : memref<256xf32, #tpu.memory_space<smem>>
    %675 = vector.broadcast %674 : f32 to vector<2x16x16xf32>
    %676 = arith.mulf %665, %675 : vector<2x16x16xf32>
    %677 = arith.addf %659, %676 : vector<2x16x16xf32>
    %c156 = arith.constant 156 : index
    %678 = memref.load %arg1[%c156] : memref<256xf32, #tpu.memory_space<smem>>
    %679 = vector.broadcast %678 : f32 to vector<2x16x16xf32>
    %680 = arith.mulf %665, %679 : vector<2x16x16xf32>
    %681 = arith.addf %663, %680 : vector<2x16x16xf32>
    %c0_216 = arith.constant 0 : index
    %c0_217 = arith.constant 0 : index
    %c2_218 = arith.constant 2 : index
    %c0_219 = arith.constant 0 : index
    %682 = vector.load %arg5[%c0_216, %c0_217, %c2_218, %c0_219] : memref<4x2x18x18xf32, #tpu.memory_space<vmem>>, vector<1x2x16x16xf32>
    %683 = vector.shape_cast %682 : vector<1x2x16x16xf32> to vector<2x16x16xf32>
    %c160 = arith.constant 160 : index
    %684 = memref.load %arg1[%c160] : memref<256xf32, #tpu.memory_space<smem>>
    %685 = vector.broadcast %684 : f32 to vector<2x16x16xf32>
    %686 = arith.mulf %683, %685 : vector<2x16x16xf32>
    %687 = arith.addf %669, %686 : vector<2x16x16xf32>
    %c164 = arith.constant 164 : index
    %688 = memref.load %arg1[%c164] : memref<256xf32, #tpu.memory_space<smem>>
    %689 = vector.broadcast %688 : f32 to vector<2x16x16xf32>
    %690 = arith.mulf %683, %689 : vector<2x16x16xf32>
    %691 = arith.addf %673, %690 : vector<2x16x16xf32>
    %c168 = arith.constant 168 : index
    %692 = memref.load %arg1[%c168] : memref<256xf32, #tpu.memory_space<smem>>
    %693 = vector.broadcast %692 : f32 to vector<2x16x16xf32>
    %694 = arith.mulf %683, %693 : vector<2x16x16xf32>
    %695 = arith.addf %677, %694 : vector<2x16x16xf32>
    %c172 = arith.constant 172 : index
    %696 = memref.load %arg1[%c172] : memref<256xf32, #tpu.memory_space<smem>>
    %697 = vector.broadcast %696 : f32 to vector<2x16x16xf32>
    %698 = arith.mulf %683, %697 : vector<2x16x16xf32>
    %699 = arith.addf %681, %698 : vector<2x16x16xf32>
    %c0_220 = arith.constant 0 : index
    %c0_221 = arith.constant 0 : index
    %c2_222 = arith.constant 2 : index
    %c1_223 = arith.constant 1 : index
    %700 = vector.load %arg5[%c0_220, %c0_221, %c2_222, %c1_223] : memref<4x2x18x18xf32, #tpu.memory_space<vmem>>, vector<1x2x16x16xf32>
    %701 = vector.shape_cast %700 : vector<1x2x16x16xf32> to vector<2x16x16xf32>
    %c176 = arith.constant 176 : index
    %702 = memref.load %arg1[%c176] : memref<256xf32, #tpu.memory_space<smem>>
    %703 = vector.broadcast %702 : f32 to vector<2x16x16xf32>
    %704 = arith.mulf %701, %703 : vector<2x16x16xf32>
    %705 = arith.addf %687, %704 : vector<2x16x16xf32>
    %c180 = arith.constant 180 : index
    %706 = memref.load %arg1[%c180] : memref<256xf32, #tpu.memory_space<smem>>
    %707 = vector.broadcast %706 : f32 to vector<2x16x16xf32>
    %708 = arith.mulf %701, %707 : vector<2x16x16xf32>
    %709 = arith.addf %691, %708 : vector<2x16x16xf32>
    %c184 = arith.constant 184 : index
    %710 = memref.load %arg1[%c184] : memref<256xf32, #tpu.memory_space<smem>>
    %711 = vector.broadcast %710 : f32 to vector<2x16x16xf32>
    %712 = arith.mulf %701, %711 : vector<2x16x16xf32>
    %713 = arith.addf %695, %712 : vector<2x16x16xf32>
    %c188 = arith.constant 188 : index
    %714 = memref.load %arg1[%c188] : memref<256xf32, #tpu.memory_space<smem>>
    %715 = vector.broadcast %714 : f32 to vector<2x16x16xf32>
    %716 = arith.mulf %701, %715 : vector<2x16x16xf32>
    %717 = arith.addf %699, %716 : vector<2x16x16xf32>
    %c1_224 = arith.constant 1 : index
    %c0_225 = arith.constant 0 : index
    %c1_226 = arith.constant 1 : index
    %c0_227 = arith.constant 0 : index
    %718 = vector.load %arg5[%c1_224, %c0_225, %c1_226, %c0_227] : memref<4x2x18x18xf32, #tpu.memory_space<vmem>>, vector<1x2x16x16xf32>
    %719 = vector.shape_cast %718 : vector<1x2x16x16xf32> to vector<2x16x16xf32>
    %c129 = arith.constant 129 : index
    %720 = memref.load %arg1[%c129] : memref<256xf32, #tpu.memory_space<smem>>
    %721 = vector.broadcast %720 : f32 to vector<2x16x16xf32>
    %722 = arith.mulf %719, %721 : vector<2x16x16xf32>
    %723 = arith.addf %705, %722 : vector<2x16x16xf32>
    %c133 = arith.constant 133 : index
    %724 = memref.load %arg1[%c133] : memref<256xf32, #tpu.memory_space<smem>>
    %725 = vector.broadcast %724 : f32 to vector<2x16x16xf32>
    %726 = arith.mulf %719, %725 : vector<2x16x16xf32>
    %727 = arith.addf %709, %726 : vector<2x16x16xf32>
    %c137 = arith.constant 137 : index
    %728 = memref.load %arg1[%c137] : memref<256xf32, #tpu.memory_space<smem>>
    %729 = vector.broadcast %728 : f32 to vector<2x16x16xf32>
    %730 = arith.mulf %719, %729 : vector<2x16x16xf32>
    %731 = arith.addf %713, %730 : vector<2x16x16xf32>
    %c141 = arith.constant 141 : index
    %732 = memref.load %arg1[%c141] : memref<256xf32, #tpu.memory_space<smem>>
    %733 = vector.broadcast %732 : f32 to vector<2x16x16xf32>
    %734 = arith.mulf %719, %733 : vector<2x16x16xf32>
    %735 = arith.addf %717, %734 : vector<2x16x16xf32>
    %c1_228 = arith.constant 1 : index
    %c0_229 = arith.constant 0 : index
    %c1_230 = arith.constant 1 : index
    %c1_231 = arith.constant 1 : index
    %736 = vector.load %arg5[%c1_228, %c0_229, %c1_230, %c1_231] : memref<4x2x18x18xf32, #tpu.memory_space<vmem>>, vector<1x2x16x16xf32>
    %737 = vector.shape_cast %736 : vector<1x2x16x16xf32> to vector<2x16x16xf32>
    %c145 = arith.constant 145 : index
    %738 = memref.load %arg1[%c145] : memref<256xf32, #tpu.memory_space<smem>>
    %739 = vector.broadcast %738 : f32 to vector<2x16x16xf32>
    %740 = arith.mulf %737, %739 : vector<2x16x16xf32>
    %741 = arith.addf %723, %740 : vector<2x16x16xf32>
    %c149 = arith.constant 149 : index
    %742 = memref.load %arg1[%c149] : memref<256xf32, #tpu.memory_space<smem>>
    %743 = vector.broadcast %742 : f32 to vector<2x16x16xf32>
    %744 = arith.mulf %737, %743 : vector<2x16x16xf32>
    %745 = arith.addf %727, %744 : vector<2x16x16xf32>
    %c153 = arith.constant 153 : index
    %746 = memref.load %arg1[%c153] : memref<256xf32, #tpu.memory_space<smem>>
    %747 = vector.broadcast %746 : f32 to vector<2x16x16xf32>
    %748 = arith.mulf %737, %747 : vector<2x16x16xf32>
    %749 = arith.addf %731, %748 : vector<2x16x16xf32>
    %c157 = arith.constant 157 : index
    %750 = memref.load %arg1[%c157] : memref<256xf32, #tpu.memory_space<smem>>
    %751 = vector.broadcast %750 : f32 to vector<2x16x16xf32>
    %752 = arith.mulf %737, %751 : vector<2x16x16xf32>
    %753 = arith.addf %735, %752 : vector<2x16x16xf32>
    %c1_232 = arith.constant 1 : index
    %c0_233 = arith.constant 0 : index
    %c2_234 = arith.constant 2 : index
    %c0_235 = arith.constant 0 : index
    %754 = vector.load %arg5[%c1_232, %c0_233, %c2_234, %c0_235] : memref<4x2x18x18xf32, #tpu.memory_space<vmem>>, vector<1x2x16x16xf32>
    %755 = vector.shape_cast %754 : vector<1x2x16x16xf32> to vector<2x16x16xf32>
    %c161 = arith.constant 161 : index
    %756 = memref.load %arg1[%c161] : memref<256xf32, #tpu.memory_space<smem>>
    %757 = vector.broadcast %756 : f32 to vector<2x16x16xf32>
    %758 = arith.mulf %755, %757 : vector<2x16x16xf32>
    %759 = arith.addf %741, %758 : vector<2x16x16xf32>
    %c165 = arith.constant 165 : index
    %760 = memref.load %arg1[%c165] : memref<256xf32, #tpu.memory_space<smem>>
    %761 = vector.broadcast %760 : f32 to vector<2x16x16xf32>
    %762 = arith.mulf %755, %761 : vector<2x16x16xf32>
    %763 = arith.addf %745, %762 : vector<2x16x16xf32>
    %c169 = arith.constant 169 : index
    %764 = memref.load %arg1[%c169] : memref<256xf32, #tpu.memory_space<smem>>
    %765 = vector.broadcast %764 : f32 to vector<2x16x16xf32>
    %766 = arith.mulf %755, %765 : vector<2x16x16xf32>
    %767 = arith.addf %749, %766 : vector<2x16x16xf32>
    %c173 = arith.constant 173 : index
    %768 = memref.load %arg1[%c173] : memref<256xf32, #tpu.memory_space<smem>>
    %769 = vector.broadcast %768 : f32 to vector<2x16x16xf32>
    %770 = arith.mulf %755, %769 : vector<2x16x16xf32>
    %771 = arith.addf %753, %770 : vector<2x16x16xf32>
    %c1_236 = arith.constant 1 : index
    %c0_237 = arith.constant 0 : index
    %c2_238 = arith.constant 2 : index
    %c1_239 = arith.constant 1 : index
    %772 = vector.load %arg5[%c1_236, %c0_237, %c2_238, %c1_239] : memref<4x2x18x18xf32, #tpu.memory_space<vmem>>, vector<1x2x16x16xf32>
    %773 = vector.shape_cast %772 : vector<1x2x16x16xf32> to vector<2x16x16xf32>
    %c177 = arith.constant 177 : index
    %774 = memref.load %arg1[%c177] : memref<256xf32, #tpu.memory_space<smem>>
    %775 = vector.broadcast %774 : f32 to vector<2x16x16xf32>
    %776 = arith.mulf %773, %775 : vector<2x16x16xf32>
    %777 = arith.addf %759, %776 : vector<2x16x16xf32>
    %c181 = arith.constant 181 : index
    %778 = memref.load %arg1[%c181] : memref<256xf32, #tpu.memory_space<smem>>
    %779 = vector.broadcast %778 : f32 to vector<2x16x16xf32>
    %780 = arith.mulf %773, %779 : vector<2x16x16xf32>
    %781 = arith.addf %763, %780 : vector<2x16x16xf32>
    %c185 = arith.constant 185 : index
    %782 = memref.load %arg1[%c185] : memref<256xf32, #tpu.memory_space<smem>>
    %783 = vector.broadcast %782 : f32 to vector<2x16x16xf32>
    %784 = arith.mulf %773, %783 : vector<2x16x16xf32>
    %785 = arith.addf %767, %784 : vector<2x16x16xf32>
    %c189 = arith.constant 189 : index
    %786 = memref.load %arg1[%c189] : memref<256xf32, #tpu.memory_space<smem>>
    %787 = vector.broadcast %786 : f32 to vector<2x16x16xf32>
    %788 = arith.mulf %773, %787 : vector<2x16x16xf32>
    %789 = arith.addf %771, %788 : vector<2x16x16xf32>
    %c2_240 = arith.constant 2 : index
    %c0_241 = arith.constant 0 : index
    %c1_242 = arith.constant 1 : index
    %c0_243 = arith.constant 0 : index
    %790 = vector.load %arg5[%c2_240, %c0_241, %c1_242, %c0_243] : memref<4x2x18x18xf32, #tpu.memory_space<vmem>>, vector<1x2x16x16xf32>
    %791 = vector.shape_cast %790 : vector<1x2x16x16xf32> to vector<2x16x16xf32>
    %c130 = arith.constant 130 : index
    %792 = memref.load %arg1[%c130] : memref<256xf32, #tpu.memory_space<smem>>
    %793 = vector.broadcast %792 : f32 to vector<2x16x16xf32>
    %794 = arith.mulf %791, %793 : vector<2x16x16xf32>
    %795 = arith.addf %777, %794 : vector<2x16x16xf32>
    %c134 = arith.constant 134 : index
    %796 = memref.load %arg1[%c134] : memref<256xf32, #tpu.memory_space<smem>>
    %797 = vector.broadcast %796 : f32 to vector<2x16x16xf32>
    %798 = arith.mulf %791, %797 : vector<2x16x16xf32>
    %799 = arith.addf %781, %798 : vector<2x16x16xf32>
    %c138 = arith.constant 138 : index
    %800 = memref.load %arg1[%c138] : memref<256xf32, #tpu.memory_space<smem>>
    %801 = vector.broadcast %800 : f32 to vector<2x16x16xf32>
    %802 = arith.mulf %791, %801 : vector<2x16x16xf32>
    %803 = arith.addf %785, %802 : vector<2x16x16xf32>
    %c142 = arith.constant 142 : index
    %804 = memref.load %arg1[%c142] : memref<256xf32, #tpu.memory_space<smem>>
    %805 = vector.broadcast %804 : f32 to vector<2x16x16xf32>
    %806 = arith.mulf %791, %805 : vector<2x16x16xf32>
    %807 = arith.addf %789, %806 : vector<2x16x16xf32>
    %c2_244 = arith.constant 2 : index
    %c0_245 = arith.constant 0 : index
    %c1_246 = arith.constant 1 : index
    %c1_247 = arith.constant 1 : index
    %808 = vector.load %arg5[%c2_244, %c0_245, %c1_246, %c1_247] : memref<4x2x18x18xf32, #tpu.memory_space<vmem>>, vector<1x2x16x16xf32>
    %809 = vector.shape_cast %808 : vector<1x2x16x16xf32> to vector<2x16x16xf32>
    %c146 = arith.constant 146 : index
    %810 = memref.load %arg1[%c146] : memref<256xf32, #tpu.memory_space<smem>>
    %811 = vector.broadcast %810 : f32 to vector<2x16x16xf32>
    %812 = arith.mulf %809, %811 : vector<2x16x16xf32>
    %813 = arith.addf %795, %812 : vector<2x16x16xf32>
    %c150 = arith.constant 150 : index
    %814 = memref.load %arg1[%c150] : memref<256xf32, #tpu.memory_space<smem>>
    %815 = vector.broadcast %814 : f32 to vector<2x16x16xf32>
    %816 = arith.mulf %809, %815 : vector<2x16x16xf32>
    %817 = arith.addf %799, %816 : vector<2x16x16xf32>
    %c154 = arith.constant 154 : index
    %818 = memref.load %arg1[%c154] : memref<256xf32, #tpu.memory_space<smem>>
    %819 = vector.broadcast %818 : f32 to vector<2x16x16xf32>
    %820 = arith.mulf %809, %819 : vector<2x16x16xf32>
    %821 = arith.addf %803, %820 : vector<2x16x16xf32>
    %c158 = arith.constant 158 : index
    %822 = memref.load %arg1[%c158] : memref<256xf32, #tpu.memory_space<smem>>
    %823 = vector.broadcast %822 : f32 to vector<2x16x16xf32>
    %824 = arith.mulf %809, %823 : vector<2x16x16xf32>
    %825 = arith.addf %807, %824 : vector<2x16x16xf32>
    %c2_248 = arith.constant 2 : index
    %c0_249 = arith.constant 0 : index
    %c2_250 = arith.constant 2 : index
    %c0_251 = arith.constant 0 : index
    %826 = vector.load %arg5[%c2_248, %c0_249, %c2_250, %c0_251] : memref<4x2x18x18xf32, #tpu.memory_space<vmem>>, vector<1x2x16x16xf32>
    %827 = vector.shape_cast %826 : vector<1x2x16x16xf32> to vector<2x16x16xf32>
    %c162 = arith.constant 162 : index
    %828 = memref.load %arg1[%c162] : memref<256xf32, #tpu.memory_space<smem>>
    %829 = vector.broadcast %828 : f32 to vector<2x16x16xf32>
    %830 = arith.mulf %827, %829 : vector<2x16x16xf32>
    %831 = arith.addf %813, %830 : vector<2x16x16xf32>
    %c166 = arith.constant 166 : index
    %832 = memref.load %arg1[%c166] : memref<256xf32, #tpu.memory_space<smem>>
    %833 = vector.broadcast %832 : f32 to vector<2x16x16xf32>
    %834 = arith.mulf %827, %833 : vector<2x16x16xf32>
    %835 = arith.addf %817, %834 : vector<2x16x16xf32>
    %c170 = arith.constant 170 : index
    %836 = memref.load %arg1[%c170] : memref<256xf32, #tpu.memory_space<smem>>
    %837 = vector.broadcast %836 : f32 to vector<2x16x16xf32>
    %838 = arith.mulf %827, %837 : vector<2x16x16xf32>
    %839 = arith.addf %821, %838 : vector<2x16x16xf32>
    %c174 = arith.constant 174 : index
    %840 = memref.load %arg1[%c174] : memref<256xf32, #tpu.memory_space<smem>>
    %841 = vector.broadcast %840 : f32 to vector<2x16x16xf32>
    %842 = arith.mulf %827, %841 : vector<2x16x16xf32>
    %843 = arith.addf %825, %842 : vector<2x16x16xf32>
    %c2_252 = arith.constant 2 : index
    %c0_253 = arith.constant 0 : index
    %c2_254 = arith.constant 2 : index
    %c1_255 = arith.constant 1 : index
    %844 = vector.load %arg5[%c2_252, %c0_253, %c2_254, %c1_255] : memref<4x2x18x18xf32, #tpu.memory_space<vmem>>, vector<1x2x16x16xf32>
    %845 = vector.shape_cast %844 : vector<1x2x16x16xf32> to vector<2x16x16xf32>
    %c178 = arith.constant 178 : index
    %846 = memref.load %arg1[%c178] : memref<256xf32, #tpu.memory_space<smem>>
    %847 = vector.broadcast %846 : f32 to vector<2x16x16xf32>
    %848 = arith.mulf %845, %847 : vector<2x16x16xf32>
    %849 = arith.addf %831, %848 : vector<2x16x16xf32>
    %c182 = arith.constant 182 : index
    %850 = memref.load %arg1[%c182] : memref<256xf32, #tpu.memory_space<smem>>
    %851 = vector.broadcast %850 : f32 to vector<2x16x16xf32>
    %852 = arith.mulf %845, %851 : vector<2x16x16xf32>
    %853 = arith.addf %835, %852 : vector<2x16x16xf32>
    %c186 = arith.constant 186 : index
    %854 = memref.load %arg1[%c186] : memref<256xf32, #tpu.memory_space<smem>>
    %855 = vector.broadcast %854 : f32 to vector<2x16x16xf32>
    %856 = arith.mulf %845, %855 : vector<2x16x16xf32>
    %857 = arith.addf %839, %856 : vector<2x16x16xf32>
    %c190 = arith.constant 190 : index
    %858 = memref.load %arg1[%c190] : memref<256xf32, #tpu.memory_space<smem>>
    %859 = vector.broadcast %858 : f32 to vector<2x16x16xf32>
    %860 = arith.mulf %845, %859 : vector<2x16x16xf32>
    %861 = arith.addf %843, %860 : vector<2x16x16xf32>
    %c3_256 = arith.constant 3 : index
    %c0_257 = arith.constant 0 : index
    %c1_258 = arith.constant 1 : index
    %c0_259 = arith.constant 0 : index
    %862 = vector.load %arg5[%c3_256, %c0_257, %c1_258, %c0_259] : memref<4x2x18x18xf32, #tpu.memory_space<vmem>>, vector<1x2x16x16xf32>
    %863 = vector.shape_cast %862 : vector<1x2x16x16xf32> to vector<2x16x16xf32>
    %c131 = arith.constant 131 : index
    %864 = memref.load %arg1[%c131] : memref<256xf32, #tpu.memory_space<smem>>
    %865 = vector.broadcast %864 : f32 to vector<2x16x16xf32>
    %866 = arith.mulf %863, %865 : vector<2x16x16xf32>
    %867 = arith.addf %849, %866 : vector<2x16x16xf32>
    %c135 = arith.constant 135 : index
    %868 = memref.load %arg1[%c135] : memref<256xf32, #tpu.memory_space<smem>>
    %869 = vector.broadcast %868 : f32 to vector<2x16x16xf32>
    %870 = arith.mulf %863, %869 : vector<2x16x16xf32>
    %871 = arith.addf %853, %870 : vector<2x16x16xf32>
    %c139 = arith.constant 139 : index
    %872 = memref.load %arg1[%c139] : memref<256xf32, #tpu.memory_space<smem>>
    %873 = vector.broadcast %872 : f32 to vector<2x16x16xf32>
    %874 = arith.mulf %863, %873 : vector<2x16x16xf32>
    %875 = arith.addf %857, %874 : vector<2x16x16xf32>
    %c143 = arith.constant 143 : index
    %876 = memref.load %arg1[%c143] : memref<256xf32, #tpu.memory_space<smem>>
    %877 = vector.broadcast %876 : f32 to vector<2x16x16xf32>
    %878 = arith.mulf %863, %877 : vector<2x16x16xf32>
    %879 = arith.addf %861, %878 : vector<2x16x16xf32>
    %c3_260 = arith.constant 3 : index
    %c0_261 = arith.constant 0 : index
    %c1_262 = arith.constant 1 : index
    %c1_263 = arith.constant 1 : index
    %880 = vector.load %arg5[%c3_260, %c0_261, %c1_262, %c1_263] : memref<4x2x18x18xf32, #tpu.memory_space<vmem>>, vector<1x2x16x16xf32>
    %881 = vector.shape_cast %880 : vector<1x2x16x16xf32> to vector<2x16x16xf32>
    %c147 = arith.constant 147 : index
    %882 = memref.load %arg1[%c147] : memref<256xf32, #tpu.memory_space<smem>>
    %883 = vector.broadcast %882 : f32 to vector<2x16x16xf32>
    %884 = arith.mulf %881, %883 : vector<2x16x16xf32>
    %885 = arith.addf %867, %884 : vector<2x16x16xf32>
    %c151 = arith.constant 151 : index
    %886 = memref.load %arg1[%c151] : memref<256xf32, #tpu.memory_space<smem>>
    %887 = vector.broadcast %886 : f32 to vector<2x16x16xf32>
    %888 = arith.mulf %881, %887 : vector<2x16x16xf32>
    %889 = arith.addf %871, %888 : vector<2x16x16xf32>
    %c155 = arith.constant 155 : index
    %890 = memref.load %arg1[%c155] : memref<256xf32, #tpu.memory_space<smem>>
    %891 = vector.broadcast %890 : f32 to vector<2x16x16xf32>
    %892 = arith.mulf %881, %891 : vector<2x16x16xf32>
    %893 = arith.addf %875, %892 : vector<2x16x16xf32>
    %c159 = arith.constant 159 : index
    %894 = memref.load %arg1[%c159] : memref<256xf32, #tpu.memory_space<smem>>
    %895 = vector.broadcast %894 : f32 to vector<2x16x16xf32>
    %896 = arith.mulf %881, %895 : vector<2x16x16xf32>
    %897 = arith.addf %879, %896 : vector<2x16x16xf32>
    %c3_264 = arith.constant 3 : index
    %c0_265 = arith.constant 0 : index
    %c2_266 = arith.constant 2 : index
    %c0_267 = arith.constant 0 : index
    %898 = vector.load %arg5[%c3_264, %c0_265, %c2_266, %c0_267] : memref<4x2x18x18xf32, #tpu.memory_space<vmem>>, vector<1x2x16x16xf32>
    %899 = vector.shape_cast %898 : vector<1x2x16x16xf32> to vector<2x16x16xf32>
    %c163 = arith.constant 163 : index
    %900 = memref.load %arg1[%c163] : memref<256xf32, #tpu.memory_space<smem>>
    %901 = vector.broadcast %900 : f32 to vector<2x16x16xf32>
    %902 = arith.mulf %899, %901 : vector<2x16x16xf32>
    %903 = arith.addf %885, %902 : vector<2x16x16xf32>
    %c167 = arith.constant 167 : index
    %904 = memref.load %arg1[%c167] : memref<256xf32, #tpu.memory_space<smem>>
    %905 = vector.broadcast %904 : f32 to vector<2x16x16xf32>
    %906 = arith.mulf %899, %905 : vector<2x16x16xf32>
    %907 = arith.addf %889, %906 : vector<2x16x16xf32>
    %c171 = arith.constant 171 : index
    %908 = memref.load %arg1[%c171] : memref<256xf32, #tpu.memory_space<smem>>
    %909 = vector.broadcast %908 : f32 to vector<2x16x16xf32>
    %910 = arith.mulf %899, %909 : vector<2x16x16xf32>
    %911 = arith.addf %893, %910 : vector<2x16x16xf32>
    %c175 = arith.constant 175 : index
    %912 = memref.load %arg1[%c175] : memref<256xf32, #tpu.memory_space<smem>>
    %913 = vector.broadcast %912 : f32 to vector<2x16x16xf32>
    %914 = arith.mulf %899, %913 : vector<2x16x16xf32>
    %915 = arith.addf %897, %914 : vector<2x16x16xf32>
    %c3_268 = arith.constant 3 : index
    %c0_269 = arith.constant 0 : index
    %c2_270 = arith.constant 2 : index
    %c1_271 = arith.constant 1 : index
    %916 = vector.load %arg5[%c3_268, %c0_269, %c2_270, %c1_271] : memref<4x2x18x18xf32, #tpu.memory_space<vmem>>, vector<1x2x16x16xf32>
    %917 = vector.shape_cast %916 : vector<1x2x16x16xf32> to vector<2x16x16xf32>
    %c179 = arith.constant 179 : index
    %918 = memref.load %arg1[%c179] : memref<256xf32, #tpu.memory_space<smem>>
    %919 = vector.broadcast %918 : f32 to vector<2x16x16xf32>
    %920 = arith.mulf %917, %919 : vector<2x16x16xf32>
    %921 = arith.addf %903, %920 : vector<2x16x16xf32>
    %c183 = arith.constant 183 : index
    %922 = memref.load %arg1[%c183] : memref<256xf32, #tpu.memory_space<smem>>
    %923 = vector.broadcast %922 : f32 to vector<2x16x16xf32>
    %924 = arith.mulf %917, %923 : vector<2x16x16xf32>
    %925 = arith.addf %907, %924 : vector<2x16x16xf32>
    %c187 = arith.constant 187 : index
    %926 = memref.load %arg1[%c187] : memref<256xf32, #tpu.memory_space<smem>>
    %927 = vector.broadcast %926 : f32 to vector<2x16x16xf32>
    %928 = arith.mulf %917, %927 : vector<2x16x16xf32>
    %929 = arith.addf %911, %928 : vector<2x16x16xf32>
    %c191 = arith.constant 191 : index
    %930 = memref.load %arg1[%c191] : memref<256xf32, #tpu.memory_space<smem>>
    %931 = vector.broadcast %930 : f32 to vector<2x16x16xf32>
    %932 = arith.mulf %917, %931 : vector<2x16x16xf32>
    %933 = arith.addf %915, %932 : vector<2x16x16xf32>
    %c2_272 = arith.constant 2 : index
    %c0_273 = arith.constant 0 : index
    %c0_274 = arith.constant 0 : index
    %c0_275 = arith.constant 0 : index
    %934 = vector.load %arg4[%c2_272, %c0_273, %c0_274, %c0_275] : memref<16x2x16x16xf32, #tpu.memory_space<vmem>>, vector<1x2x16x16xf32>
    %935 = vector.shape_cast %934 : vector<1x2x16x16xf32> to vector<2x16x16xf32>
    %936 = vector.shape_cast %921 : vector<2x16x16xf32> to vector<1x2x16x16xf32>
    tpu.vector_store %arg4[%c2_272, %c0_273, %c0_274, %c0_275], %936 {strides = array<i32>} : memref<16x2x16x16xf32, #tpu.memory_space<vmem>>, vector<1x2x16x16xf32>,
    %c6_276 = arith.constant 6 : index
    %c0_277 = arith.constant 0 : index
    %c0_278 = arith.constant 0 : index
    %c0_279 = arith.constant 0 : index
    %937 = vector.load %arg4[%c6_276, %c0_277, %c0_278, %c0_279] : memref<16x2x16x16xf32, #tpu.memory_space<vmem>>, vector<1x2x16x16xf32>
    %938 = vector.shape_cast %937 : vector<1x2x16x16xf32> to vector<2x16x16xf32>
    %939 = vector.shape_cast %925 : vector<2x16x16xf32> to vector<1x2x16x16xf32>
    tpu.vector_store %arg4[%c6_276, %c0_277, %c0_278, %c0_279], %939 {strides = array<i32>} : memref<16x2x16x16xf32, #tpu.memory_space<vmem>>, vector<1x2x16x16xf32>,
    %c10_280 = arith.constant 10 : index
    %c0_281 = arith.constant 0 : index
    %c0_282 = arith.constant 0 : index
    %c0_283 = arith.constant 0 : index
    %940 = vector.load %arg4[%c10_280, %c0_281, %c0_282, %c0_283] : memref<16x2x16x16xf32, #tpu.memory_space<vmem>>, vector<1x2x16x16xf32>
    %941 = vector.shape_cast %940 : vector<1x2x16x16xf32> to vector<2x16x16xf32>
    %942 = vector.shape_cast %929 : vector<2x16x16xf32> to vector<1x2x16x16xf32>
    tpu.vector_store %arg4[%c10_280, %c0_281, %c0_282, %c0_283], %942 {strides = array<i32>} : memref<16x2x16x16xf32, #tpu.memory_space<vmem>>, vector<1x2x16x16xf32>,
    %c14_284 = arith.constant 14 : index
    %c0_285 = arith.constant 0 : index
    %c0_286 = arith.constant 0 : index
    %c0_287 = arith.constant 0 : index
    %943 = vector.load %arg4[%c14_284, %c0_285, %c0_286, %c0_287] : memref<16x2x16x16xf32, #tpu.memory_space<vmem>>, vector<1x2x16x16xf32>
    %944 = vector.shape_cast %943 : vector<1x2x16x16xf32> to vector<2x16x16xf32>
    %945 = vector.shape_cast %933 : vector<2x16x16xf32> to vector<1x2x16x16xf32>
    tpu.vector_store %arg4[%c14_284, %c0_285, %c0_286, %c0_287], %945 {strides = array<i32>} : memref<16x2x16x16xf32, #tpu.memory_space<vmem>>, vector<1x2x16x16xf32>,
    %c0_288 = arith.constant 0 : index
    %946 = memref.load %arg2[%c0_288] : memref<4xf32, #tpu.memory_space<smem>>
    %947 = vector.broadcast %946 : f32 to vector<2x16x16xf32>
    %c1_289 = arith.constant 1 : index
    %948 = memref.load %arg2[%c1_289] : memref<4xf32, #tpu.memory_space<smem>>
    %949 = vector.broadcast %948 : f32 to vector<2x16x16xf32>
    %c2_290 = arith.constant 2 : index
    %950 = memref.load %arg2[%c2_290] : memref<4xf32, #tpu.memory_space<smem>>
    %951 = vector.broadcast %950 : f32 to vector<2x16x16xf32>
    %c3_291 = arith.constant 3 : index
    %952 = memref.load %arg2[%c3_291] : memref<4xf32, #tpu.memory_space<smem>>
    %953 = vector.broadcast %952 : f32 to vector<2x16x16xf32>
    %c0_292 = arith.constant 0 : index
    %c0_293 = arith.constant 0 : index
    %c1_294 = arith.constant 1 : index
    %c1_295 = arith.constant 1 : index
    %954 = vector.load %arg5[%c0_292, %c0_293, %c1_294, %c1_295] : memref<4x2x18x18xf32, #tpu.memory_space<vmem>>, vector<1x2x16x16xf32>
    %955 = vector.shape_cast %954 : vector<1x2x16x16xf32> to vector<2x16x16xf32>
    %c192 = arith.constant 192 : index
    %956 = memref.load %arg1[%c192] : memref<256xf32, #tpu.memory_space<smem>>
    %957 = vector.broadcast %956 : f32 to vector<2x16x16xf32>
    %958 = arith.mulf %955, %957 : vector<2x16x16xf32>
    %959 = arith.addf %947, %958 : vector<2x16x16xf32>
    %c196 = arith.constant 196 : index
    %960 = memref.load %arg1[%c196] : memref<256xf32, #tpu.memory_space<smem>>
    %961 = vector.broadcast %960 : f32 to vector<2x16x16xf32>
    %962 = arith.mulf %955, %961 : vector<2x16x16xf32>
    %963 = arith.addf %949, %962 : vector<2x16x16xf32>
    %c200 = arith.constant 200 : index
    %964 = memref.load %arg1[%c200] : memref<256xf32, #tpu.memory_space<smem>>
    %965 = vector.broadcast %964 : f32 to vector<2x16x16xf32>
    %966 = arith.mulf %955, %965 : vector<2x16x16xf32>
    %967 = arith.addf %951, %966 : vector<2x16x16xf32>
    %c204 = arith.constant 204 : index
    %968 = memref.load %arg1[%c204] : memref<256xf32, #tpu.memory_space<smem>>
    %969 = vector.broadcast %968 : f32 to vector<2x16x16xf32>
    %970 = arith.mulf %955, %969 : vector<2x16x16xf32>
    %971 = arith.addf %953, %970 : vector<2x16x16xf32>
    %c0_296 = arith.constant 0 : index
    %c0_297 = arith.constant 0 : index
    %c1_298 = arith.constant 1 : index
    %c2_299 = arith.constant 2 : index
    %972 = vector.load %arg5[%c0_296, %c0_297, %c1_298, %c2_299] : memref<4x2x18x18xf32, #tpu.memory_space<vmem>>, vector<1x2x16x16xf32>
    %973 = vector.shape_cast %972 : vector<1x2x16x16xf32> to vector<2x16x16xf32>
    %c208 = arith.constant 208 : index
    %974 = memref.load %arg1[%c208] : memref<256xf32, #tpu.memory_space<smem>>
    %975 = vector.broadcast %974 : f32 to vector<2x16x16xf32>
    %976 = arith.mulf %973, %975 : vector<2x16x16xf32>
    %977 = arith.addf %959, %976 : vector<2x16x16xf32>
    %c212 = arith.constant 212 : index
    %978 = memref.load %arg1[%c212] : memref<256xf32, #tpu.memory_space<smem>>
    %979 = vector.broadcast %978 : f32 to vector<2x16x16xf32>
    %980 = arith.mulf %973, %979 : vector<2x16x16xf32>
    %981 = arith.addf %963, %980 : vector<2x16x16xf32>
    %c216 = arith.constant 216 : index
    %982 = memref.load %arg1[%c216] : memref<256xf32, #tpu.memory_space<smem>>
    %983 = vector.broadcast %982 : f32 to vector<2x16x16xf32>
    %984 = arith.mulf %973, %983 : vector<2x16x16xf32>
    %985 = arith.addf %967, %984 : vector<2x16x16xf32>
    %c220 = arith.constant 220 : index
    %986 = memref.load %arg1[%c220] : memref<256xf32, #tpu.memory_space<smem>>
    %987 = vector.broadcast %986 : f32 to vector<2x16x16xf32>
    %988 = arith.mulf %973, %987 : vector<2x16x16xf32>
    %989 = arith.addf %971, %988 : vector<2x16x16xf32>
    %c0_300 = arith.constant 0 : index
    %c0_301 = arith.constant 0 : index
    %c2_302 = arith.constant 2 : index
    %c1_303 = arith.constant 1 : index
    %990 = vector.load %arg5[%c0_300, %c0_301, %c2_302, %c1_303] : memref<4x2x18x18xf32, #tpu.memory_space<vmem>>, vector<1x2x16x16xf32>
    %991 = vector.shape_cast %990 : vector<1x2x16x16xf32> to vector<2x16x16xf32>
    %c224 = arith.constant 224 : index
    %992 = memref.load %arg1[%c224] : memref<256xf32, #tpu.memory_space<smem>>
    %993 = vector.broadcast %992 : f32 to vector<2x16x16xf32>
    %994 = arith.mulf %991, %993 : vector<2x16x16xf32>
    %995 = arith.addf %977, %994 : vector<2x16x16xf32>
    %c228 = arith.constant 228 : index
    %996 = memref.load %arg1[%c228] : memref<256xf32, #tpu.memory_space<smem>>
    %997 = vector.broadcast %996 : f32 to vector<2x16x16xf32>
    %998 = arith.mulf %991, %997 : vector<2x16x16xf32>
    %999 = arith.addf %981, %998 : vector<2x16x16xf32>
    %c232 = arith.constant 232 : index
    %1000 = memref.load %arg1[%c232] : memref<256xf32, #tpu.memory_space<smem>>
    %1001 = vector.broadcast %1000 : f32 to vector<2x16x16xf32>
    %1002 = arith.mulf %991, %1001 : vector<2x16x16xf32>
    %1003 = arith.addf %985, %1002 : vector<2x16x16xf32>
    %c236 = arith.constant 236 : index
    %1004 = memref.load %arg1[%c236] : memref<256xf32, #tpu.memory_space<smem>>
    %1005 = vector.broadcast %1004 : f32 to vector<2x16x16xf32>
    %1006 = arith.mulf %991, %1005 : vector<2x16x16xf32>
    %1007 = arith.addf %989, %1006 : vector<2x16x16xf32>
    %c0_304 = arith.constant 0 : index
    %c0_305 = arith.constant 0 : index
    %c2_306 = arith.constant 2 : index
    %c2_307 = arith.constant 2 : index
    %1008 = vector.load %arg5[%c0_304, %c0_305, %c2_306, %c2_307] : memref<4x2x18x18xf32, #tpu.memory_space<vmem>>, vector<1x2x16x16xf32>
    %1009 = vector.shape_cast %1008 : vector<1x2x16x16xf32> to vector<2x16x16xf32>
    %c240 = arith.constant 240 : index
    %1010 = memref.load %arg1[%c240] : memref<256xf32, #tpu.memory_space<smem>>
    %1011 = vector.broadcast %1010 : f32 to vector<2x16x16xf32>
    %1012 = arith.mulf %1009, %1011 : vector<2x16x16xf32>
    %1013 = arith.addf %995, %1012 : vector<2x16x16xf32>
    %c244 = arith.constant 244 : index
    %1014 = memref.load %arg1[%c244] : memref<256xf32, #tpu.memory_space<smem>>
    %1015 = vector.broadcast %1014 : f32 to vector<2x16x16xf32>
    %1016 = arith.mulf %1009, %1015 : vector<2x16x16xf32>
    %1017 = arith.addf %999, %1016 : vector<2x16x16xf32>
    %c248 = arith.constant 248 : index
    %1018 = memref.load %arg1[%c248] : memref<256xf32, #tpu.memory_space<smem>>
    %1019 = vector.broadcast %1018 : f32 to vector<2x16x16xf32>
    %1020 = arith.mulf %1009, %1019 : vector<2x16x16xf32>
    %1021 = arith.addf %1003, %1020 : vector<2x16x16xf32>
    %c252 = arith.constant 252 : index
    %1022 = memref.load %arg1[%c252] : memref<256xf32, #tpu.memory_space<smem>>
    %1023 = vector.broadcast %1022 : f32 to vector<2x16x16xf32>
    %1024 = arith.mulf %1009, %1023 : vector<2x16x16xf32>
    %1025 = arith.addf %1007, %1024 : vector<2x16x16xf32>
    %c1_308 = arith.constant 1 : index
    %c0_309 = arith.constant 0 : index
    %c1_310 = arith.constant 1 : index
    %c1_311 = arith.constant 1 : index
    %1026 = vector.load %arg5[%c1_308, %c0_309, %c1_310, %c1_311] : memref<4x2x18x18xf32, #tpu.memory_space<vmem>>, vector<1x2x16x16xf32>
    %1027 = vector.shape_cast %1026 : vector<1x2x16x16xf32> to vector<2x16x16xf32>
    %c193 = arith.constant 193 : index
    %1028 = memref.load %arg1[%c193] : memref<256xf32, #tpu.memory_space<smem>>
    %1029 = vector.broadcast %1028 : f32 to vector<2x16x16xf32>
    %1030 = arith.mulf %1027, %1029 : vector<2x16x16xf32>
    %1031 = arith.addf %1013, %1030 : vector<2x16x16xf32>
    %c197 = arith.constant 197 : index
    %1032 = memref.load %arg1[%c197] : memref<256xf32, #tpu.memory_space<smem>>
    %1033 = vector.broadcast %1032 : f32 to vector<2x16x16xf32>
    %1034 = arith.mulf %1027, %1033 : vector<2x16x16xf32>
    %1035 = arith.addf %1017, %1034 : vector<2x16x16xf32>
    %c201 = arith.constant 201 : index
    %1036 = memref.load %arg1[%c201] : memref<256xf32, #tpu.memory_space<smem>>
    %1037 = vector.broadcast %1036 : f32 to vector<2x16x16xf32>
    %1038 = arith.mulf %1027, %1037 : vector<2x16x16xf32>
    %1039 = arith.addf %1021, %1038 : vector<2x16x16xf32>
    %c205 = arith.constant 205 : index
    %1040 = memref.load %arg1[%c205] : memref<256xf32, #tpu.memory_space<smem>>
    %1041 = vector.broadcast %1040 : f32 to vector<2x16x16xf32>
    %1042 = arith.mulf %1027, %1041 : vector<2x16x16xf32>
    %1043 = arith.addf %1025, %1042 : vector<2x16x16xf32>
    %c1_312 = arith.constant 1 : index
    %c0_313 = arith.constant 0 : index
    %c1_314 = arith.constant 1 : index
    %c2_315 = arith.constant 2 : index
    %1044 = vector.load %arg5[%c1_312, %c0_313, %c1_314, %c2_315] : memref<4x2x18x18xf32, #tpu.memory_space<vmem>>, vector<1x2x16x16xf32>
    %1045 = vector.shape_cast %1044 : vector<1x2x16x16xf32> to vector<2x16x16xf32>
    %c209 = arith.constant 209 : index
    %1046 = memref.load %arg1[%c209] : memref<256xf32, #tpu.memory_space<smem>>
    %1047 = vector.broadcast %1046 : f32 to vector<2x16x16xf32>
    %1048 = arith.mulf %1045, %1047 : vector<2x16x16xf32>
    %1049 = arith.addf %1031, %1048 : vector<2x16x16xf32>
    %c213 = arith.constant 213 : index
    %1050 = memref.load %arg1[%c213] : memref<256xf32, #tpu.memory_space<smem>>
    %1051 = vector.broadcast %1050 : f32 to vector<2x16x16xf32>
    %1052 = arith.mulf %1045, %1051 : vector<2x16x16xf32>
    %1053 = arith.addf %1035, %1052 : vector<2x16x16xf32>
    %c217 = arith.constant 217 : index
    %1054 = memref.load %arg1[%c217] : memref<256xf32, #tpu.memory_space<smem>>
    %1055 = vector.broadcast %1054 : f32 to vector<2x16x16xf32>
    %1056 = arith.mulf %1045, %1055 : vector<2x16x16xf32>
    %1057 = arith.addf %1039, %1056 : vector<2x16x16xf32>
    %c221 = arith.constant 221 : index
    %1058 = memref.load %arg1[%c221] : memref<256xf32, #tpu.memory_space<smem>>
    %1059 = vector.broadcast %1058 : f32 to vector<2x16x16xf32>
    %1060 = arith.mulf %1045, %1059 : vector<2x16x16xf32>
    %1061 = arith.addf %1043, %1060 : vector<2x16x16xf32>
    %c1_316 = arith.constant 1 : index
    %c0_317 = arith.constant 0 : index
    %c2_318 = arith.constant 2 : index
    %c1_319 = arith.constant 1 : index
    %1062 = vector.load %arg5[%c1_316, %c0_317, %c2_318, %c1_319] : memref<4x2x18x18xf32, #tpu.memory_space<vmem>>, vector<1x2x16x16xf32>
    %1063 = vector.shape_cast %1062 : vector<1x2x16x16xf32> to vector<2x16x16xf32>
    %c225 = arith.constant 225 : index
    %1064 = memref.load %arg1[%c225] : memref<256xf32, #tpu.memory_space<smem>>
    %1065 = vector.broadcast %1064 : f32 to vector<2x16x16xf32>
    %1066 = arith.mulf %1063, %1065 : vector<2x16x16xf32>
    %1067 = arith.addf %1049, %1066 : vector<2x16x16xf32>
    %c229 = arith.constant 229 : index
    %1068 = memref.load %arg1[%c229] : memref<256xf32, #tpu.memory_space<smem>>
    %1069 = vector.broadcast %1068 : f32 to vector<2x16x16xf32>
    %1070 = arith.mulf %1063, %1069 : vector<2x16x16xf32>
    %1071 = arith.addf %1053, %1070 : vector<2x16x16xf32>
    %c233 = arith.constant 233 : index
    %1072 = memref.load %arg1[%c233] : memref<256xf32, #tpu.memory_space<smem>>
    %1073 = vector.broadcast %1072 : f32 to vector<2x16x16xf32>
    %1074 = arith.mulf %1063, %1073 : vector<2x16x16xf32>
    %1075 = arith.addf %1057, %1074 : vector<2x16x16xf32>
    %c237 = arith.constant 237 : index
    %1076 = memref.load %arg1[%c237] : memref<256xf32, #tpu.memory_space<smem>>
    %1077 = vector.broadcast %1076 : f32 to vector<2x16x16xf32>
    %1078 = arith.mulf %1063, %1077 : vector<2x16x16xf32>
    %1079 = arith.addf %1061, %1078 : vector<2x16x16xf32>
    %c1_320 = arith.constant 1 : index
    %c0_321 = arith.constant 0 : index
    %c2_322 = arith.constant 2 : index
    %c2_323 = arith.constant 2 : index
    %1080 = vector.load %arg5[%c1_320, %c0_321, %c2_322, %c2_323] : memref<4x2x18x18xf32, #tpu.memory_space<vmem>>, vector<1x2x16x16xf32>
    %1081 = vector.shape_cast %1080 : vector<1x2x16x16xf32> to vector<2x16x16xf32>
    %c241 = arith.constant 241 : index
    %1082 = memref.load %arg1[%c241] : memref<256xf32, #tpu.memory_space<smem>>
    %1083 = vector.broadcast %1082 : f32 to vector<2x16x16xf32>
    %1084 = arith.mulf %1081, %1083 : vector<2x16x16xf32>
    %1085 = arith.addf %1067, %1084 : vector<2x16x16xf32>
    %c245 = arith.constant 245 : index
    %1086 = memref.load %arg1[%c245] : memref<256xf32, #tpu.memory_space<smem>>
    %1087 = vector.broadcast %1086 : f32 to vector<2x16x16xf32>
    %1088 = arith.mulf %1081, %1087 : vector<2x16x16xf32>
    %1089 = arith.addf %1071, %1088 : vector<2x16x16xf32>
    %c249 = arith.constant 249 : index
    %1090 = memref.load %arg1[%c249] : memref<256xf32, #tpu.memory_space<smem>>
    %1091 = vector.broadcast %1090 : f32 to vector<2x16x16xf32>
    %1092 = arith.mulf %1081, %1091 : vector<2x16x16xf32>
    %1093 = arith.addf %1075, %1092 : vector<2x16x16xf32>
    %c253 = arith.constant 253 : index
    %1094 = memref.load %arg1[%c253] : memref<256xf32, #tpu.memory_space<smem>>
    %1095 = vector.broadcast %1094 : f32 to vector<2x16x16xf32>
    %1096 = arith.mulf %1081, %1095 : vector<2x16x16xf32>
    %1097 = arith.addf %1079, %1096 : vector<2x16x16xf32>
    %c2_324 = arith.constant 2 : index
    %c0_325 = arith.constant 0 : index
    %c1_326 = arith.constant 1 : index
    %c1_327 = arith.constant 1 : index
    %1098 = vector.load %arg5[%c2_324, %c0_325, %c1_326, %c1_327] : memref<4x2x18x18xf32, #tpu.memory_space<vmem>>, vector<1x2x16x16xf32>
    %1099 = vector.shape_cast %1098 : vector<1x2x16x16xf32> to vector<2x16x16xf32>
    %c194 = arith.constant 194 : index
    %1100 = memref.load %arg1[%c194] : memref<256xf32, #tpu.memory_space<smem>>
    %1101 = vector.broadcast %1100 : f32 to vector<2x16x16xf32>
    %1102 = arith.mulf %1099, %1101 : vector<2x16x16xf32>
    %1103 = arith.addf %1085, %1102 : vector<2x16x16xf32>
    %c198 = arith.constant 198 : index
    %1104 = memref.load %arg1[%c198] : memref<256xf32, #tpu.memory_space<smem>>
    %1105 = vector.broadcast %1104 : f32 to vector<2x16x16xf32>
    %1106 = arith.mulf %1099, %1105 : vector<2x16x16xf32>
    %1107 = arith.addf %1089, %1106 : vector<2x16x16xf32>
    %c202 = arith.constant 202 : index
    %1108 = memref.load %arg1[%c202] : memref<256xf32, #tpu.memory_space<smem>>
    %1109 = vector.broadcast %1108 : f32 to vector<2x16x16xf32>
    %1110 = arith.mulf %1099, %1109 : vector<2x16x16xf32>
    %1111 = arith.addf %1093, %1110 : vector<2x16x16xf32>
    %c206 = arith.constant 206 : index
    %1112 = memref.load %arg1[%c206] : memref<256xf32, #tpu.memory_space<smem>>
    %1113 = vector.broadcast %1112 : f32 to vector<2x16x16xf32>
    %1114 = arith.mulf %1099, %1113 : vector<2x16x16xf32>
    %1115 = arith.addf %1097, %1114 : vector<2x16x16xf32>
    %c2_328 = arith.constant 2 : index
    %c0_329 = arith.constant 0 : index
    %c1_330 = arith.constant 1 : index
    %c2_331 = arith.constant 2 : index
    %1116 = vector.load %arg5[%c2_328, %c0_329, %c1_330, %c2_331] : memref<4x2x18x18xf32, #tpu.memory_space<vmem>>, vector<1x2x16x16xf32>
    %1117 = vector.shape_cast %1116 : vector<1x2x16x16xf32> to vector<2x16x16xf32>
    %c210 = arith.constant 210 : index
    %1118 = memref.load %arg1[%c210] : memref<256xf32, #tpu.memory_space<smem>>
    %1119 = vector.broadcast %1118 : f32 to vector<2x16x16xf32>
    %1120 = arith.mulf %1117, %1119 : vector<2x16x16xf32>
    %1121 = arith.addf %1103, %1120 : vector<2x16x16xf32>
    %c214 = arith.constant 214 : index
    %1122 = memref.load %arg1[%c214] : memref<256xf32, #tpu.memory_space<smem>>
    %1123 = vector.broadcast %1122 : f32 to vector<2x16x16xf32>
    %1124 = arith.mulf %1117, %1123 : vector<2x16x16xf32>
    %1125 = arith.addf %1107, %1124 : vector<2x16x16xf32>
    %c218 = arith.constant 218 : index
    %1126 = memref.load %arg1[%c218] : memref<256xf32, #tpu.memory_space<smem>>
    %1127 = vector.broadcast %1126 : f32 to vector<2x16x16xf32>
    %1128 = arith.mulf %1117, %1127 : vector<2x16x16xf32>
    %1129 = arith.addf %1111, %1128 : vector<2x16x16xf32>
    %c222 = arith.constant 222 : index
    %1130 = memref.load %arg1[%c222] : memref<256xf32, #tpu.memory_space<smem>>
    %1131 = vector.broadcast %1130 : f32 to vector<2x16x16xf32>
    %1132 = arith.mulf %1117, %1131 : vector<2x16x16xf32>
    %1133 = arith.addf %1115, %1132 : vector<2x16x16xf32>
    %c2_332 = arith.constant 2 : index
    %c0_333 = arith.constant 0 : index
    %c2_334 = arith.constant 2 : index
    %c1_335 = arith.constant 1 : index
    %1134 = vector.load %arg5[%c2_332, %c0_333, %c2_334, %c1_335] : memref<4x2x18x18xf32, #tpu.memory_space<vmem>>, vector<1x2x16x16xf32>
    %1135 = vector.shape_cast %1134 : vector<1x2x16x16xf32> to vector<2x16x16xf32>
    %c226 = arith.constant 226 : index
    %1136 = memref.load %arg1[%c226] : memref<256xf32, #tpu.memory_space<smem>>
    %1137 = vector.broadcast %1136 : f32 to vector<2x16x16xf32>
    %1138 = arith.mulf %1135, %1137 : vector<2x16x16xf32>
    %1139 = arith.addf %1121, %1138 : vector<2x16x16xf32>
    %c230 = arith.constant 230 : index
    %1140 = memref.load %arg1[%c230] : memref<256xf32, #tpu.memory_space<smem>>
    %1141 = vector.broadcast %1140 : f32 to vector<2x16x16xf32>
    %1142 = arith.mulf %1135, %1141 : vector<2x16x16xf32>
    %1143 = arith.addf %1125, %1142 : vector<2x16x16xf32>
    %c234 = arith.constant 234 : index
    %1144 = memref.load %arg1[%c234] : memref<256xf32, #tpu.memory_space<smem>>
    %1145 = vector.broadcast %1144 : f32 to vector<2x16x16xf32>
    %1146 = arith.mulf %1135, %1145 : vector<2x16x16xf32>
    %1147 = arith.addf %1129, %1146 : vector<2x16x16xf32>
    %c238 = arith.constant 238 : index
    %1148 = memref.load %arg1[%c238] : memref<256xf32, #tpu.memory_space<smem>>
    %1149 = vector.broadcast %1148 : f32 to vector<2x16x16xf32>
    %1150 = arith.mulf %1135, %1149 : vector<2x16x16xf32>
    %1151 = arith.addf %1133, %1150 : vector<2x16x16xf32>
    %c2_336 = arith.constant 2 : index
    %c0_337 = arith.constant 0 : index
    %c2_338 = arith.constant 2 : index
    %c2_339 = arith.constant 2 : index
    %1152 = vector.load %arg5[%c2_336, %c0_337, %c2_338, %c2_339] : memref<4x2x18x18xf32, #tpu.memory_space<vmem>>, vector<1x2x16x16xf32>
    %1153 = vector.shape_cast %1152 : vector<1x2x16x16xf32> to vector<2x16x16xf32>
    %c242 = arith.constant 242 : index
    %1154 = memref.load %arg1[%c242] : memref<256xf32, #tpu.memory_space<smem>>
    %1155 = vector.broadcast %1154 : f32 to vector<2x16x16xf32>
    %1156 = arith.mulf %1153, %1155 : vector<2x16x16xf32>
    %1157 = arith.addf %1139, %1156 : vector<2x16x16xf32>
    %c246 = arith.constant 246 : index
    %1158 = memref.load %arg1[%c246] : memref<256xf32, #tpu.memory_space<smem>>
    %1159 = vector.broadcast %1158 : f32 to vector<2x16x16xf32>
    %1160 = arith.mulf %1153, %1159 : vector<2x16x16xf32>
    %1161 = arith.addf %1143, %1160 : vector<2x16x16xf32>
    %c250 = arith.constant 250 : index
    %1162 = memref.load %arg1[%c250] : memref<256xf32, #tpu.memory_space<smem>>
    %1163 = vector.broadcast %1162 : f32 to vector<2x16x16xf32>
    %1164 = arith.mulf %1153, %1163 : vector<2x16x16xf32>
    %1165 = arith.addf %1147, %1164 : vector<2x16x16xf32>
    %c254 = arith.constant 254 : index
    %1166 = memref.load %arg1[%c254] : memref<256xf32, #tpu.memory_space<smem>>
    %1167 = vector.broadcast %1166 : f32 to vector<2x16x16xf32>
    %1168 = arith.mulf %1153, %1167 : vector<2x16x16xf32>
    %1169 = arith.addf %1151, %1168 : vector<2x16x16xf32>
    %c3_340 = arith.constant 3 : index
    %c0_341 = arith.constant 0 : index
    %c1_342 = arith.constant 1 : index
    %c1_343 = arith.constant 1 : index
    %1170 = vector.load %arg5[%c3_340, %c0_341, %c1_342, %c1_343] : memref<4x2x18x18xf32, #tpu.memory_space<vmem>>, vector<1x2x16x16xf32>
    %1171 = vector.shape_cast %1170 : vector<1x2x16x16xf32> to vector<2x16x16xf32>
    %c195 = arith.constant 195 : index
    %1172 = memref.load %arg1[%c195] : memref<256xf32, #tpu.memory_space<smem>>
    %1173 = vector.broadcast %1172 : f32 to vector<2x16x16xf32>
    %1174 = arith.mulf %1171, %1173 : vector<2x16x16xf32>
    %1175 = arith.addf %1157, %1174 : vector<2x16x16xf32>
    %c199 = arith.constant 199 : index
    %1176 = memref.load %arg1[%c199] : memref<256xf32, #tpu.memory_space<smem>>
    %1177 = vector.broadcast %1176 : f32 to vector<2x16x16xf32>
    %1178 = arith.mulf %1171, %1177 : vector<2x16x16xf32>
    %1179 = arith.addf %1161, %1178 : vector<2x16x16xf32>
    %c203 = arith.constant 203 : index
    %1180 = memref.load %arg1[%c203] : memref<256xf32, #tpu.memory_space<smem>>
    %1181 = vector.broadcast %1180 : f32 to vector<2x16x16xf32>
    %1182 = arith.mulf %1171, %1181 : vector<2x16x16xf32>
    %1183 = arith.addf %1165, %1182 : vector<2x16x16xf32>
    %c207 = arith.constant 207 : index
    %1184 = memref.load %arg1[%c207] : memref<256xf32, #tpu.memory_space<smem>>
    %1185 = vector.broadcast %1184 : f32 to vector<2x16x16xf32>
    %1186 = arith.mulf %1171, %1185 : vector<2x16x16xf32>
    %1187 = arith.addf %1169, %1186 : vector<2x16x16xf32>
    %c3_344 = arith.constant 3 : index
    %c0_345 = arith.constant 0 : index
    %c1_346 = arith.constant 1 : index
    %c2_347 = arith.constant 2 : index
    %1188 = vector.load %arg5[%c3_344, %c0_345, %c1_346, %c2_347] : memref<4x2x18x18xf32, #tpu.memory_space<vmem>>, vector<1x2x16x16xf32>
    %1189 = vector.shape_cast %1188 : vector<1x2x16x16xf32> to vector<2x16x16xf32>
    %c211 = arith.constant 211 : index
    %1190 = memref.load %arg1[%c211] : memref<256xf32, #tpu.memory_space<smem>>
    %1191 = vector.broadcast %1190 : f32 to vector<2x16x16xf32>
    %1192 = arith.mulf %1189, %1191 : vector<2x16x16xf32>
    %1193 = arith.addf %1175, %1192 : vector<2x16x16xf32>
    %c215 = arith.constant 215 : index
    %1194 = memref.load %arg1[%c215] : memref<256xf32, #tpu.memory_space<smem>>
    %1195 = vector.broadcast %1194 : f32 to vector<2x16x16xf32>
    %1196 = arith.mulf %1189, %1195 : vector<2x16x16xf32>
    %1197 = arith.addf %1179, %1196 : vector<2x16x16xf32>
    %c219 = arith.constant 219 : index
    %1198 = memref.load %arg1[%c219] : memref<256xf32, #tpu.memory_space<smem>>
    %1199 = vector.broadcast %1198 : f32 to vector<2x16x16xf32>
    %1200 = arith.mulf %1189, %1199 : vector<2x16x16xf32>
    %1201 = arith.addf %1183, %1200 : vector<2x16x16xf32>
    %c223 = arith.constant 223 : index
    %1202 = memref.load %arg1[%c223] : memref<256xf32, #tpu.memory_space<smem>>
    %1203 = vector.broadcast %1202 : f32 to vector<2x16x16xf32>
    %1204 = arith.mulf %1189, %1203 : vector<2x16x16xf32>
    %1205 = arith.addf %1187, %1204 : vector<2x16x16xf32>
    %c3_348 = arith.constant 3 : index
    %c0_349 = arith.constant 0 : index
    %c2_350 = arith.constant 2 : index
    %c1_351 = arith.constant 1 : index
    %1206 = vector.load %arg5[%c3_348, %c0_349, %c2_350, %c1_351] : memref<4x2x18x18xf32, #tpu.memory_space<vmem>>, vector<1x2x16x16xf32>
    %1207 = vector.shape_cast %1206 : vector<1x2x16x16xf32> to vector<2x16x16xf32>
    %c227 = arith.constant 227 : index
    %1208 = memref.load %arg1[%c227] : memref<256xf32, #tpu.memory_space<smem>>
    %1209 = vector.broadcast %1208 : f32 to vector<2x16x16xf32>
    %1210 = arith.mulf %1207, %1209 : vector<2x16x16xf32>
    %1211 = arith.addf %1193, %1210 : vector<2x16x16xf32>
    %c231 = arith.constant 231 : index
    %1212 = memref.load %arg1[%c231] : memref<256xf32, #tpu.memory_space<smem>>
    %1213 = vector.broadcast %1212 : f32 to vector<2x16x16xf32>
    %1214 = arith.mulf %1207, %1213 : vector<2x16x16xf32>
    %1215 = arith.addf %1197, %1214 : vector<2x16x16xf32>
    %c235 = arith.constant 235 : index
    %1216 = memref.load %arg1[%c235] : memref<256xf32, #tpu.memory_space<smem>>
    %1217 = vector.broadcast %1216 : f32 to vector<2x16x16xf32>
    %1218 = arith.mulf %1207, %1217 : vector<2x16x16xf32>
    %1219 = arith.addf %1201, %1218 : vector<2x16x16xf32>
    %c239 = arith.constant 239 : index
    %1220 = memref.load %arg1[%c239] : memref<256xf32, #tpu.memory_space<smem>>
    %1221 = vector.broadcast %1220 : f32 to vector<2x16x16xf32>
    %1222 = arith.mulf %1207, %1221 : vector<2x16x16xf32>
    %1223 = arith.addf %1205, %1222 : vector<2x16x16xf32>
    %c3_352 = arith.constant 3 : index
    %c0_353 = arith.constant 0 : index
    %c2_354 = arith.constant 2 : index
    %c2_355 = arith.constant 2 : index
    %1224 = vector.load %arg5[%c3_352, %c0_353, %c2_354, %c2_355] : memref<4x2x18x18xf32, #tpu.memory_space<vmem>>, vector<1x2x16x16xf32>
    %1225 = vector.shape_cast %1224 : vector<1x2x16x16xf32> to vector<2x16x16xf32>
    %c243 = arith.constant 243 : index
    %1226 = memref.load %arg1[%c243] : memref<256xf32, #tpu.memory_space<smem>>
    %1227 = vector.broadcast %1226 : f32 to vector<2x16x16xf32>
    %1228 = arith.mulf %1225, %1227 : vector<2x16x16xf32>
    %1229 = arith.addf %1211, %1228 : vector<2x16x16xf32>
    %c247 = arith.constant 247 : index
    %1230 = memref.load %arg1[%c247] : memref<256xf32, #tpu.memory_space<smem>>
    %1231 = vector.broadcast %1230 : f32 to vector<2x16x16xf32>
    %1232 = arith.mulf %1225, %1231 : vector<2x16x16xf32>
    %1233 = arith.addf %1215, %1232 : vector<2x16x16xf32>
    %c251 = arith.constant 251 : index
    %1234 = memref.load %arg1[%c251] : memref<256xf32, #tpu.memory_space<smem>>
    %1235 = vector.broadcast %1234 : f32 to vector<2x16x16xf32>
    %1236 = arith.mulf %1225, %1235 : vector<2x16x16xf32>
    %1237 = arith.addf %1219, %1236 : vector<2x16x16xf32>
    %c255 = arith.constant 255 : index
    %1238 = memref.load %arg1[%c255] : memref<256xf32, #tpu.memory_space<smem>>
    %1239 = vector.broadcast %1238 : f32 to vector<2x16x16xf32>
    %1240 = arith.mulf %1225, %1239 : vector<2x16x16xf32>
    %1241 = arith.addf %1223, %1240 : vector<2x16x16xf32>
    %c3_356 = arith.constant 3 : index
    %c0_357 = arith.constant 0 : index
    %c0_358 = arith.constant 0 : index
    %c0_359 = arith.constant 0 : index
    %1242 = vector.load %arg4[%c3_356, %c0_357, %c0_358, %c0_359] : memref<16x2x16x16xf32, #tpu.memory_space<vmem>>, vector<1x2x16x16xf32>
    %1243 = vector.shape_cast %1242 : vector<1x2x16x16xf32> to vector<2x16x16xf32>
    %1244 = vector.shape_cast %1229 : vector<2x16x16xf32> to vector<1x2x16x16xf32>
    tpu.vector_store %arg4[%c3_356, %c0_357, %c0_358, %c0_359], %1244 {strides = array<i32>} : memref<16x2x16x16xf32, #tpu.memory_space<vmem>>, vector<1x2x16x16xf32>,
    %c7_360 = arith.constant 7 : index
    %c0_361 = arith.constant 0 : index
    %c0_362 = arith.constant 0 : index
    %c0_363 = arith.constant 0 : index
    %1245 = vector.load %arg4[%c7_360, %c0_361, %c0_362, %c0_363] : memref<16x2x16x16xf32, #tpu.memory_space<vmem>>, vector<1x2x16x16xf32>
    %1246 = vector.shape_cast %1245 : vector<1x2x16x16xf32> to vector<2x16x16xf32>
    %1247 = vector.shape_cast %1233 : vector<2x16x16xf32> to vector<1x2x16x16xf32>
    tpu.vector_store %arg4[%c7_360, %c0_361, %c0_362, %c0_363], %1247 {strides = array<i32>} : memref<16x2x16x16xf32, #tpu.memory_space<vmem>>, vector<1x2x16x16xf32>,
    %c11_364 = arith.constant 11 : index
    %c0_365 = arith.constant 0 : index
    %c0_366 = arith.constant 0 : index
    %c0_367 = arith.constant 0 : index
    %1248 = vector.load %arg4[%c11_364, %c0_365, %c0_366, %c0_367] : memref<16x2x16x16xf32, #tpu.memory_space<vmem>>, vector<1x2x16x16xf32>
    %1249 = vector.shape_cast %1248 : vector<1x2x16x16xf32> to vector<2x16x16xf32>
    %1250 = vector.shape_cast %1237 : vector<2x16x16xf32> to vector<1x2x16x16xf32>
    tpu.vector_store %arg4[%c11_364, %c0_365, %c0_366, %c0_367], %1250 {strides = array<i32>} : memref<16x2x16x16xf32, #tpu.memory_space<vmem>>, vector<1x2x16x16xf32>,
    %c15_368 = arith.constant 15 : index
    %c0_369 = arith.constant 0 : index
    %c0_370 = arith.constant 0 : index
    %c0_371 = arith.constant 0 : index
    %1251 = vector.load %arg4[%c15_368, %c0_369, %c0_370, %c0_371] : memref<16x2x16x16xf32, #tpu.memory_space<vmem>>, vector<1x2x16x16xf32>
    %1252 = vector.shape_cast %1251 : vector<1x2x16x16xf32> to vector<2x16x16xf32>
    %1253 = vector.shape_cast %1241 : vector<2x16x16xf32> to vector<1x2x16x16xf32>
    tpu.vector_store %arg4[%c15_368, %c0_369, %c0_370, %c0_371], %1253 {strides = array<i32>} : memref<16x2x16x16xf32, #tpu.memory_space<vmem>>, vector<1x2x16x16xf32>,
    return
  }
  func.func @transform_0(%arg0: i32) -> i32 {
    %c0_i32 = arith.constant 0 : i32
    %c0_i32_0 = arith.constant 0 : i32
    return %c0_i32 : i32
  }
  func.func @transform_1(%arg0: i32) -> i32 {
    %c0_i32 = arith.constant 0 : i32
    %c0_i32_0 = arith.constant 0 : i32
    return %c0_i32 : i32
  }
  func.func @transform_2(%arg0: i32) -> (i32, i32, i32, i32) {
    %c0_i32 = arith.constant 0 : i32
    %c0_i32_0 = arith.constant 0 : i32
    %c0_i32_1 = arith.constant 0 : i32
    %c0_i32_2 = arith.constant 0 : i32
    return %c0_i32, %arg0, %c0_i32_0, %c0_i32_1 : i32, i32, i32, i32
  }
  func.func @transform_3(%arg0: i32) -> (i32, i32, i32, i32) {
    %c0_i32 = arith.constant 0 : i32
    %c0_i32_0 = arith.constant 0 : i32
    %c0_i32_1 = arith.constant 0 : i32
    %c0_i32_2 = arith.constant 0 : i32
    return %c0_i32, %arg0, %c0_i32_0, %c0_i32_1 : i32, i32, i32, i32
  }
}

</mosaic_0001>

<llo_original>
// kernel: tpu_custom_call.1
$region0: #{tpu_custom_call.1}
  #allocation0 [shape = 'u32[]', space=smem, size = 0x4, offset = 0x4, fixed_abs, tag = 'smem constant byte address 0x4 - core index']
  #allocation1 [shape = 'u32[144,128]{1,0:T(1,128)}', space=vmem, size = 0x12000, scoped, tag = 'internal scratch']
  #allocation2 [shape = 'f32[4,2,18,18]{3,2,1,0:T(8,128)}', space=vmem, size = 0x18000, scoped, tag = 'scratch operand']
  %s0 = inlined_call_operand.hbm [shape: f32[256], index: 0, kind: input, shape index: {}]
  %s1 = inlined_call_operand.vmem [shape: f32[4], index: 1, kind: input, shape index: {}]
  %s2 = inlined_call_operand.hbm [shape: f32[4,2,16,16], index: 2, kind: input, shape index: {}]
  %s3 = inlined_call_operand.hbm [shape: f32[16,2,16,16], index: 3, kind: output, shape index: {}]
  %s4 = sld [smem:[#allocation0]]
  $region34: #{tpu_custom_call.1} parent=0
    _
  %s6 = ssub.s32 1, %s4
  %s7 = scalar_select 0, %s6, %s4
  $region1: #{tpu_custom_call.1} parent=0
    #allocation3 [shape = 'u8[1024]{0}', space=smem, size = 0x400, scoped, tag = 'input window, operand 0, single buffered']
    #allocation4 [shape = 's32[1]{0}', space=sflag, size = 0x4, scoped, tag = 'scoped memory for tpu_custom_call.1']
    #allocation5 [shape = 's32[1]{0}', space=sflag, size = 0x4, scoped, tag = 'scoped memory for tpu_custom_call.1']
    #allocation6 [shape = 's32[1]{0}', space=sflag, size = 0x4, scoped, tag = 'scoped memory for tpu_custom_call.1']
    #allocation7 [shape = 's32[1]{0}', space=sflag, size = 0x4, scoped, tag = 'scoped memory for tpu_custom_call.1']
    #allocation8 [shape = 'u8[512]{0}', space=smem, size = 0x200, scoped, tag = 'input window, operand 1, single buffered']
    #allocation9 [shape = 'u8[65536]{0}', space=vmem, size = 0x10000, scoped, tag = 'input window, operand 2, single buffered']
    #allocation10 [shape = 'u8[262144]{0}', space=vmem, size = 0x40000, scoped, tag = 'output window, operand 0, single buffered']
    %8 = vsyncpa [#allocation6], 0
    %9 = vsyncpa [#allocation7], 0
    %10 = vsyncpa [#allocation4], 0
    %11 = vsyncpa [#allocation5], 0
    // Predicated region
    $region2: #{tpu_custom_call.1} parent=1 // pred_check
      _
    $region3: #{tpu_custom_call.1} parent=1 // pred_check_branch
      %13 = sbr.rel (0) target = $region5
    $region4: #{tpu_custom_call.1} parent=1 // pred_region
      %s15 = ssub.s32 32, 32
      %16 = vsyncadd [#allocation6], %s15
      %19 = dma.hbm_to_smem %s0, 32, [#allocation3], [#allocation6]
    $region5: #{tpu_custom_call.1} parent=1 // pred_fallthru
      _
    // Predicated region
    $region6: #{tpu_custom_call.1} parent=1 // pred_check
      _
    $region7: #{tpu_custom_call.1} parent=1 // pred_check_branch
      %21 = sbr.rel (0) target = $region9
    $region8: #{tpu_custom_call.1} parent=1 // pred_region
      %s23 = ssub.s32 16, 16
      %24 = vsyncadd [#allocation7], %s23
      %s26 = sshll.u32 %s1, 4
      %s27 = int_to_ptr.vmem [resolvable:$true] %s26
      %29 = dma.vmem_to_smem %s27, 16, [#allocation8], [#allocation7]
    $region9: #{tpu_custom_call.1} parent=1 // pred_fallthru
      _
    // Predicated region
    $region10: #{tpu_custom_call.1} parent=1 // pred_check
      _
    $region11: #{tpu_custom_call.1} parent=1 // pred_check_branch
      %31 = sbr.rel (0) target = $region13
    $region12: #{tpu_custom_call.1} parent=1 // pred_region
      %s33 = ssub.s32 2048, 2048
      %34 = vsyncadd [#allocation4], %s33
      %s35 = sshll.u32 [#allocation9], 4
      %s36 = int_to_ptr.vmem [resolvable:$true] %s35
      %41 = dma.hbm_to_vmem [thread:$0]  %s2, 2048, %s36, [#allocation4], 128, 128, 8
    $region13: #{tpu_custom_call.1} parent=1 // pred_fallthru
      _
    // Predicated region
    $region14: #{tpu_custom_call.1} parent=1 // pred_check
      _
    $region15: #{tpu_custom_call.1} parent=1 // pred_check_branch
      %43 = sbr.rel (0) target = $region17
    $region16: #{tpu_custom_call.1} parent=1 // pred_region
      %44 = dma.done [#allocation6], 32
    $region17: #{tpu_custom_call.1} parent=1 // pred_fallthru
      _
    // Predicated region
    $region18: #{tpu_custom_call.1} parent=1 // pred_check
      _
    $region19: #{tpu_custom_call.1} parent=1 // pred_check_branch
      %46 = sbr.rel (0) target = $region21
    $region20: #{tpu_custom_call.1} parent=1 // pred_region
      %47 = dma.done [#allocation7], 16
    $region21: #{tpu_custom_call.1} parent=1 // pred_fallthru
      _
    // Predicated region
    $region22: #{tpu_custom_call.1} parent=1 // pred_check
      _
    $region23: #{tpu_custom_call.1} parent=1 // pred_check_branch
      %49 = sbr.rel (0) target = $region25
    $region24: #{tpu_custom_call.1} parent=1 // pred_region
      %50 = dma.done [#allocation4], 2048
    $region25: #{tpu_custom_call.1} parent=1 // pred_fallthru
      _
    %51 = sfence
    %vm52 = vcmask 146432
    %53 = vst.msk [vmem:[#allocation2] sm:$0xff] %vm52, 0.0
    %54 = vst.msk [vmem:[#allocation2 + $0x8] sm:$0xff] %vm52, 0.0
    %vm55 = vcmask 140288
    %56 = vst.msk [vmem:[#allocation2 + $0x10] sm:$0x3] %vm55, 0.0
    %57 = vst.msk [vmem:[#allocation2 + $0x18] sm:$0xff] %vm52, 0.0
    %58 = vst.msk [vmem:[#allocation2 + $0x20] sm:$0xff] %vm52, 0.0
    %59 = vst.msk [vmem:[#allocation2 + $0x28] sm:$0x3] %vm55, 0.0
    %60 = vst.msk [vmem:[#allocation2 + $0x30] sm:$0xff] %vm52, 0.0
    %61 = vst.msk [vmem:[#allocation2 + $0x38] sm:$0xff] %vm52, 0.0
    %62 = vst.msk [vmem:[#allocation2 + $0x40] sm:$0x3] %vm55, 0.0
    %63 = vst.msk [vmem:[#allocation2 + $0x48] sm:$0xff] %vm52, 0.0
    %64 = vst.msk [vmem:[#allocation2 + $0x50] sm:$0xff] %vm52, 0.0
    %65 = vst.msk [vmem:[#allocation2 + $0x58] sm:$0x3] %vm55, 0.0
    %66 = vst.msk [vmem:[#allocation2 + $0x60] sm:$0xff] %vm52, 0.0
    %67 = vst.msk [vmem:[#allocation2 + $0x68] sm:$0xff] %vm52, 0.0
    %68 = vst.msk [vmem:[#allocation2 + $0x70] sm:$0x3] %vm55, 0.0
    %69 = vst.msk [vmem:[#allocation2 + $0x78] sm:$0xff] %vm52, 0.0
    %70 = vst.msk [vmem:[#allocation2 + $0x80] sm:$0xff] %vm52, 0.0
    %71 = vst.msk [vmem:[#allocation2 + $0x88] sm:$0x3] %vm55, 0.0
    %72 = vst.msk [vmem:[#allocation2 + $0x90] sm:$0xff] %vm52, 0.0
    %73 = vst.msk [vmem:[#allocation2 + $0x98] sm:$0xff] %vm52, 0.0
    %74 = vst.msk [vmem:[#allocation2 + $0xa0] sm:$0x3] %vm55, 0.0
    %75 = vst.msk [vmem:[#allocation2 + $0xa8] sm:$0xff] %vm52, 0.0
    %76 = vst.msk [vmem:[#allocation2 + $0xb0] sm:$0xff] %vm52, 0.0
    %77 = vst.msk [vmem:[#allocation2 + $0xb8] sm:$0x3] %vm55, 0.0
    %v78 = vld [vmem:[#allocation9] sm:$0xff]
    %v79 = vld [vmem:[#allocation9 + $0x8] sm:$0xff]
    %v80 = vld [vmem:[#allocation9 + $0x10] sm:$0xff]
    %v81 = vld [vmem:[#allocation9 + $0x18] sm:$0xff]
    %86 = vrot.lane.b32.xlu0 %v78, 1
    %v87 = vpop.permute.xlu0 %86
    %88 = vrot.lane.b32.xlu0 %v79, 1
    %v89 = vpop.permute.xlu0 %88
    %90 = vrot.lane.b32.xlu0 %v80, 1
    %v91 = vpop.permute.xlu0 %90
    %92 = vrot.lane.b32.xlu0 %v81, 1
    %v93 = vpop.permute.xlu0 %92
    %vm98 = vcmask 138248
    %99 = vst.msk [vmem:[#allocation2 + $0x1] sm:$0xff] %vm98, %v87
    %100 = vst.msk [vmem:[#allocation2 + $0x9] sm:$0xff] %vm98, %v89
    %101 = vst.msk [vmem:[#allocation2 + $0x19] sm:$0xff] %vm98, %v91
    %102 = vst.msk [vmem:[#allocation2 + $0x21] sm:$0xff] %vm98, %v93
    %s103 = scalar_lea.vmem [#allocation9], 32
    %v104 = vld [vmem:[%s103] sm:$0xff]
    %v105 = vld [vmem:[%s103 + $0x8] sm:$0xff]
    %v106 = vld [vmem:[%s103 + $0x10] sm:$0xff]
    %v107 = vld [vmem:[%s103 + $0x18] sm:$0xff]
    %112 = vrot.lane.b32.xlu0 %v104, 1
    %v113 = vpop.permute.xlu0 %112
    %114 = vrot.lane.b32.xlu0 %v105, 1
    %v115 = vpop.permute.xlu0 %114
    %116 = vrot.lane.b32.xlu0 %v106, 1
    %v117 = vpop.permute.xlu0 %116
    %118 = vrot.lane.b32.xlu0 %v107, 1
    %v119 = vpop.permute.xlu0 %118
    %s124 = scalar_lea.vmem [#allocation2], 48
    %125 = vst.msk [vmem:[%s124 + $0x1] sm:$0xff] %vm98, %v113
    %126 = vst.msk [vmem:[%s124 + $0x9] sm:$0xff] %vm98, %v115
    %127 = vst.msk [vmem:[%s124 + $0x19] sm:$0xff] %vm98, %v117
    %128 = vst.msk [vmem:[%s124 + $0x21] sm:$0xff] %vm98, %v119
    %s129 = scalar_lea.vmem [#allocation9], 64
    %v130 = vld [vmem:[%s129] sm:$0xff]
    %v131 = vld [vmem:[%s129 + $0x8] sm:$0xff]
    %v132 = vld [vmem:[%s129 + $0x10] sm:$0xff]
    %v133 = vld [vmem:[%s129 + $0x18] sm:$0xff]
    %138 = vrot.lane.b32.xlu0 %v130, 1
    %v139 = vpop.permute.xlu0 %138
    %140 = vrot.lane.b32.xlu0 %v131, 1
    %v141 = vpop.permute.xlu0 %140
    %142 = vrot.lane.b32.xlu0 %v132, 1
    %v143 = vpop.permute.xlu0 %142
    %144 = vrot.lane.b32.xlu0 %v133, 1
    %v145 = vpop.permute.xlu0 %144
    %s150 = scalar_lea.vmem [#allocation2], 96
    %151 = vst.msk [vmem:[%s150 + $0x1] sm:$0xff] %vm98, %v139
    %152 = vst.msk [vmem:[%s150 + $0x9] sm:$0xff] %vm98, %v141
    %153 = vst.msk [vmem:[%s150 + $0x19] sm:$0xff] %vm98, %v143
    %154 = vst.msk [vmem:[%s150 + $0x21] sm:$0xff] %vm98, %v145
    %s155 = scalar_lea.vmem [#allocation9], 96
    %v156 = vld [vmem:[%s155] sm:$0xff]
    %v157 = vld [vmem:[%s155 + $0x8] sm:$0xff]
    %v158 = vld [vmem:[%s155 + $0x10] sm:$0xff]
    %v159 = vld [vmem:[%s155 + $0x18] sm:$0xff]
    %164 = vrot.lane.b32.xlu0 %v156, 1
    %v165 = vpop.permute.xlu0 %164
    %166 = vrot.lane.b32.xlu0 %v157, 1
    %v167 = vpop.permute.xlu0 %166
    %168 = vrot.lane.b32.xlu0 %v158, 1
    %v169 = vpop.permute.xlu0 %168
    %170 = vrot.lane.b32.xlu0 %v159, 1
    %v171 = vpop.permute.xlu0 %170
    %s176 = scalar_lea.vmem [#allocation2], 144
    %177 = vst.msk [vmem:[%s176 + $0x1] sm:$0xff] %vm98, %v165
    %178 = vst.msk [vmem:[%s176 + $0x9] sm:$0xff] %vm98, %v167
    %179 = vst.msk [vmem:[%s176 + $0x19] sm:$0xff] %vm98, %v169
    %180 = vst.msk [vmem:[%s176 + $0x21] sm:$0xff] %vm98, %v171
    %s181 = sld [smem:[#allocation8]]
    %v182 = vstv %s181
    %s183 = sld [smem:[#allocation8 + $0x1]]
    %v184 = vstv %s183
    %s185 = sld [smem:[#allocation8 + $0x2]]
    %v186 = vstv %s185
    %s187 = sld [smem:[#allocation8 + $0x3]]
    %v188 = vstv %s187
    %v189 = vld [vmem:[#allocation2] sm:$0xff]
    %v190 = vld [vmem:[#allocation2 + $0x8] sm:$0xff]
    %v191 = vld [vmem:[#allocation2 + $0x18] sm:$0xff]
    %v192 = vld [vmem:[#allocation2 + $0x20] sm:$0xff]
    %s193 = sld [smem:[#allocation3]]
    %v194 = vstv %s193
    %v195 = vmul.f32 %v189, %v194
    %v196 = vmul.f32 %v190, %v194
    %v197 = vmul.f32 %v191, %v194
    %v198 = vmul.f32 %v192, %v194
    %v199 = vadd.f32 %v182, %v195
    %v200 = vadd.f32 %v182, %v196
    %v201 = vadd.f32 %v182, %v197
    %v202 = vadd.f32 %v182, %v198
    %s203 = sld [smem:[#allocation3 + $0x4]]
    %v204 = vstv %s203
    %v205 = vmul.f32 %v189, %v204
    %v206 = vmul.f32 %v190, %v204
    %v207 = vmul.f32 %v191, %v204
    %v208 = vmul.f32 %v192, %v204
    %v209 = vadd.f32 %v184, %v205
    %v210 = vadd.f32 %v184, %v206
    %v211 = vadd.f32 %v184, %v207
    %v212 = vadd.f32 %v184, %v208
    %s213 = sld [smem:[#allocation3 + $0x8]]
    %v214 = vstv %s213
    %v215 = vmul.f32 %v189, %v214
    %v216 = vmul.f32 %v190, %v214
    %v217 = vmul.f32 %v191, %v214
    %v218 = vmul.f32 %v192, %v214
    %v219 = vadd.f32 %v186, %v215
    %v220 = vadd.f32 %v186, %v216
    %v221 = vadd.f32 %v186, %v217
    %v222 = vadd.f32 %v186, %v218
    %s223 = sld [smem:[#allocation3 + $0xc]]
    %v224 = vstv %s223
    %v225 = vmul.f32 %v189, %v224
    %v226 = vmul.f32 %v190, %v224
    %v227 = vmul.f32 %v191, %v224
    %v228 = vmul.f32 %v192, %v224
    %v229 = vadd.f32 %v188, %v225
    %v230 = vadd.f32 %v188, %v226
    %v231 = vadd.f32 %v188, %v227
    %v232 = vadd.f32 %v188, %v228
    %s233 = sld [smem:[#allocation3 + $0x10]]
    %v234 = vstv %s233
    %v235 = vmul.f32 %v189, %v234
    %v236 = vmul.f32 %v190, %v234
    %v237 = vmul.f32 %v191, %v234
    %v238 = vmul.f32 %v192, %v234
    %243 = vrot.lane.b32.xlu0 %v235, 127
    %v244 = vpop.permute.xlu0 %243
    %245 = vrot.lane.b32.xlu0 %v236, 127
    %v246 = vpop.permute.xlu0 %245
    %247 = vrot.lane.b32.xlu0 %v237, 127
    %v248 = vpop.permute.xlu0 %247
    %249 = vrot.lane.b32.xlu0 %v238, 127
    %v250 = vpop.permute.xlu0 %249
    %v255 = vadd.f32 %v199, %v244
    %v256 = vadd.f32 %v200, %v246
    %v257 = vadd.f32 %v201, %v248
    %v258 = vadd.f32 %v202, %v250
    %s259 = sld [smem:[#allocation3 + $0x14]]
    %v260 = vstv %s259
    %v261 = vmul.f32 %v189, %v260
    %v262 = vmul.f32 %v190, %v260
    %v263 = vmul.f32 %v191, %v260
    %v264 = vmul.f32 %v192, %v260
    %269 = vrot.lane.b32.xlu0 %v261, 127
    %v270 = vpop.permute.xlu0 %269
    %271 = vrot.lane.b32.xlu0 %v262, 127
    %v272 = vpop.permute.xlu0 %271
    %273 = vrot.lane.b32.xlu0 %v263, 127
    %v274 = vpop.permute.xlu0 %273
    %275 = vrot.lane.b32.xlu0 %v264, 127
    %v276 = vpop.permute.xlu0 %275
    %v281 = vadd.f32 %v209, %v270
    %v282 = vadd.f32 %v210, %v272
    %v283 = vadd.f32 %v211, %v274
    %v284 = vadd.f32 %v212, %v276
    %s285 = sld [smem:[#allocation3 + $0x18]]
    %v286 = vstv %s285
    %v287 = vmul.f32 %v189, %v286
    %v288 = vmul.f32 %v190, %v286
    %v289 = vmul.f32 %v191, %v286
    %v290 = vmul.f32 %v192, %v286
    %295 = vrot.lane.b32.xlu0 %v287, 127
    %v296 = vpop.permute.xlu0 %295
    %297 = vrot.lane.b32.xlu0 %v288, 127
    %v298 = vpop.permute.xlu0 %297
    %299 = vrot.lane.b32.xlu0 %v289, 127
    %v300 = vpop.permute.xlu0 %299
    %301 = vrot.lane.b32.xlu0 %v290, 127
    %v302 = vpop.permute.xlu0 %301
    %v307 = vadd.f32 %v219, %v296
    %v308 = vadd.f32 %v220, %v298
    %v309 = vadd.f32 %v221, %v300
    %v310 = vadd.f32 %v222, %v302
    %s311 = sld [smem:[#allocation3 + $0x1c]]
    %v312 = vstv %s311
    %v313 = vmul.f32 %v189, %v312
    %v314 = vmul.f32 %v190, %v312
    %v315 = vmul.f32 %v191, %v312
    %v316 = vmul.f32 %v192, %v312
    %321 = vrot.lane.b32.xlu0 %v313, 127
    %v322 = vpop.permute.xlu0 %321
    %323 = vrot.lane.b32.xlu0 %v314, 127
    %v324 = vpop.permute.xlu0 %323
    %325 = vrot.lane.b32.xlu0 %v315, 127
    %v326 = vpop.permute.xlu0 %325
    %327 = vrot.lane.b32.xlu0 %v316, 127
    %v328 = vpop.permute.xlu0 %327
    %v333 = vadd.f32 %v229, %v322
    %v334 = vadd.f32 %v230, %v324
    %v335 = vadd.f32 %v231, %v326
    %v336 = vadd.f32 %v232, %v328
    %v337 = vld [vmem:[#allocation2 + $0x1] sm:$0xff]
    %v338 = vld [vmem:[#allocation2 + $0x9] sm:$0xff]
    %v339 = vld [vmem:[#allocation2 + $0x19] sm:$0xff]
    %v340 = vld [vmem:[#allocation2 + $0x21] sm:$0xff]
    %s341 = sld [smem:[#allocation3 + $0x20]]
    %v342 = vstv %s341
    %v343 = vmul.f32 %v337, %v342
    %v344 = vmul.f32 %v338, %v342
    %v345 = vmul.f32 %v339, %v342
    %v346 = vmul.f32 %v340, %v342
    %v347 = vadd.f32 %v255, %v343
    %v348 = vadd.f32 %v256, %v344
    %v349 = vadd.f32 %v257, %v345
    %v350 = vadd.f32 %v258, %v346
    %s351 = sld [smem:[#allocation3 + $0x24]]
    %v352 = vstv %s351
    %v353 = vmul.f32 %v337, %v352
    %v354 = vmul.f32 %v338, %v352
    %v355 = vmul.f32 %v339, %v352
    %v356 = vmul.f32 %v340, %v352
    %v357 = vadd.f32 %v281, %v353
    %v358 = vadd.f32 %v282, %v354
    %v359 = vadd.f32 %v283, %v355
    %v360 = vadd.f32 %v284, %v356
    %s361 = sld [smem:[#allocation3 + $0x28]]
    %v362 = vstv %s361
    %v363 = vmul.f32 %v337, %v362
    %v364 = vmul.f32 %v338, %v362
    %v365 = vmul.f32 %v339, %v362
    %v366 = vmul.f32 %v340, %v362
    %v367 = vadd.f32 %v307, %v363
    %v368 = vadd.f32 %v308, %v364
    %v369 = vadd.f32 %v309, %v365
    %v370 = vadd.f32 %v310, %v366
    %s371 = sld [smem:[#allocation3 + $0x2c]]
    %v372 = vstv %s371
    %v373 = vmul.f32 %v337, %v372
    %v374 = vmul.f32 %v338, %v372
    %v375 = vmul.f32 %v339, %v372
    %v376 = vmul.f32 %v340, %v372
    %v377 = vadd.f32 %v333, %v373
    %v378 = vadd.f32 %v334, %v374
    %v379 = vadd.f32 %v335, %v375
    %v380 = vadd.f32 %v336, %v376
    %s381 = sld [smem:[#allocation3 + $0x30]]
    %v382 = vstv %s381
    %v383 = vmul.f32 %v337, %v382
    %v384 = vmul.f32 %v338, %v382
    %v385 = vmul.f32 %v339, %v382
    %v386 = vmul.f32 %v340, %v382
    %391 = vrot.lane.b32.xlu0 %v383, 127
    %v392 = vpop.permute.xlu0 %391
    %393 = vrot.lane.b32.xlu0 %v384, 127
    %v394 = vpop.permute.xlu0 %393
    %395 = vrot.lane.b32.xlu0 %v385, 127
    %v396 = vpop.permute.xlu0 %395
    %397 = vrot.lane.b32.xlu0 %v386, 127
    %v398 = vpop.permute.xlu0 %397
    %v403 = vadd.f32 %v347, %v392
    %v404 = vadd.f32 %v348, %v394
    %v405 = vadd.f32 %v349, %v396
    %v406 = vadd.f32 %v350, %v398
    %s407 = sld [smem:[#allocation3 + $0x34]]
    %v408 = vstv %s407
    %v409 = vmul.f32 %v337, %v408
    %v410 = vmul.f32 %v338, %v408
    %v411 = vmul.f32 %v339, %v408
    %v412 = vmul.f32 %v340, %v408
    %417 = vrot.lane.b32.xlu0 %v409, 127
    %v418 = vpop.permute.xlu0 %417
    %419 = vrot.lane.b32.xlu0 %v410, 127
    %v420 = vpop.permute.xlu0 %419
    %421 = vrot.lane.b32.xlu0 %v411, 127
    %v422 = vpop.permute.xlu0 %421
    %423 = vrot.lane.b32.xlu0 %v412, 127
    %v424 = vpop.permute.xlu0 %423
    %v429 = vadd.f32 %v357, %v418
    %v430 = vadd.f32 %v358, %v420
    %v431 = vadd.f32 %v359, %v422
    %v432 = vadd.f32 %v360, %v424
    %s433 = sld [smem:[#allocation3 + $0x38]]
    %v434 = vstv %s433
    %v435 = vmul.f32 %v337, %v434
    %v436 = vmul.f32 %v338, %v434
    %v437 = vmul.f32 %v339, %v434
    %v438 = vmul.f32 %v340, %v434
    %443 = vrot.lane.b32.xlu0 %v435, 127
    %v444 = vpop.permute.xlu0 %443
    %445 = vrot.lane.b32.xlu0 %v436, 127
    %v446 = vpop.permute.xlu0 %445
    %447 = vrot.lane.b32.xlu0 %v437, 127
    %v448 = vpop.permute.xlu0 %447
    %449 = vrot.lane.b32.xlu0 %v438, 127
    %v450 = vpop.permute.xlu0 %449
    %v455 = vadd.f32 %v367, %v444
    %v456 = vadd.f32 %v368, %v446
    %v457 = vadd.f32 %v369, %v448
    %v458 = vadd.f32 %v370, %v450
    %s459 = sld [smem:[#allocation3 + $0x3c]]
    %v460 = vstv %s459
    %v461 = vmul.f32 %v337, %v460
    %v462 = vmul.f32 %v338, %v460
    %v463 = vmul.f32 %v339, %v460
    %v464 = vmul.f32 %v340, %v460
    %469 = vrot.lane.b32.xlu0 %v461, 127
    %v470 = vpop.permute.xlu0 %469
    %471 = vrot.lane.b32.xlu0 %v462, 127
    %v472 = vpop.permute.xlu0 %471
    %473 = vrot.lane.b32.xlu0 %v463, 127
    %v474 = vpop.permute.xlu0 %473
    %475 = vrot.lane.b32.xlu0 %v464, 127
    %v476 = vpop.permute.xlu0 %475
    %v481 = vadd.f32 %v377, %v470
    %v482 = vadd.f32 %v378, %v472
    %v483 = vadd.f32 %v379, %v474
    %v484 = vadd.f32 %v380, %v476
    %v485 = vld [vmem:[%s124] sm:$0xff]
    %v486 = vld [vmem:[%s124 + $0x8] sm:$0xff]
    %v487 = vld [vmem:[%s124 + $0x18] sm:$0xff]
    %v488 = vld [vmem:[%s124 + $0x20] sm:$0xff]
    %s489 = sld [smem:[#allocation3 + $0x1]]
    %v490 = vstv %s489
    %v491 = vmul.f32 %v485, %v490
    %v492 = vmul.f32 %v486, %v490
    %v493 = vmul.f32 %v487, %v490
    %v494 = vmul.f32 %v488, %v490
    %v495 = vadd.f32 %v403, %v491
    %v496 = vadd.f32 %v404, %v492
    %v497 = vadd.f32 %v405, %v493
    %v498 = vadd.f32 %v406, %v494
    %s499 = sld [smem:[#allocation3 + $0x5]]
    %v500 = vstv %s499
    %v501 = vmul.f32 %v485, %v500
    %v502 = vmul.f32 %v486, %v500
    %v503 = vmul.f32 %v487, %v500
    %v504 = vmul.f32 %v488, %v500
    %v505 = vadd.f32 %v429, %v501
    %v506 = vadd.f32 %v430, %v502
    %v507 = vadd.f32 %v431, %v503
    %v508 = vadd.f32 %v432, %v504
    %s509 = sld [smem:[#allocation3 + $0x9]]
    %v510 = vstv %s509
    %v511 = vmul.f32 %v485, %v510
    %v512 = vmul.f32 %v486, %v510
    %v513 = vmul.f32 %v487, %v510
    %v514 = vmul.f32 %v488, %v510
    %v515 = vadd.f32 %v455, %v511
    %v516 = vadd.f32 %v456, %v512
    %v517 = vadd.f32 %v457, %v513
    %v518 = vadd.f32 %v458, %v514
    %s519 = sld [smem:[#allocation3 + $0xd]]
    %v520 = vstv %s519
    %v521 = vmul.f32 %v485, %v520
    %v522 = vmul.f32 %v486, %v520
    %v523 = vmul.f32 %v487, %v520
    %v524 = vmul.f32 %v488, %v520
    %v525 = vadd.f32 %v481, %v521
    %v526 = vadd.f32 %v482, %v522
    %v527 = vadd.f32 %v483, %v523
    %v528 = vadd.f32 %v484, %v524
    %s529 = sld [smem:[#allocation3 + $0x11]]
    %v530 = vstv %s529
    %v531 = vmul.f32 %v485, %v530
    %v532 = vmul.f32 %v486, %v530
    %v533 = vmul.f32 %v487, %v530
    %v534 = vmul.f32 %v488, %v530
    %539 = vrot.lane.b32.xlu0 %v531, 127
    %v540 = vpop.permute.xlu0 %539
    %541 = vrot.lane.b32.xlu0 %v532, 127
    %v542 = vpop.permute.xlu0 %541
    %543 = vrot.lane.b32.xlu0 %v533, 127
    %v544 = vpop.permute.xlu0 %543
    %545 = vrot.lane.b32.xlu0 %v534, 127
    %v546 = vpop.permute.xlu0 %545
    %v551 = vadd.f32 %v495, %v540
    %v552 = vadd.f32 %v496, %v542
    %v553 = vadd.f32 %v497, %v544
    %v554 = vadd.f32 %v498, %v546
    %s555 = sld [smem:[#allocation3 + $0x15]]
    %v556 = vstv %s555
    %v557 = vmul.f32 %v485, %v556
    %v558 = vmul.f32 %v486, %v556
    %v559 = vmul.f32 %v487, %v556
    %v560 = vmul.f32 %v488, %v556
    %565 = vrot.lane.b32.xlu0 %v557, 127
    %v566 = vpop.permute.xlu0 %565
    %567 = vrot.lane.b32.xlu0 %v558, 127
    %v568 = vpop.permute.xlu0 %567
    %569 = vrot.lane.b32.xlu0 %v559, 127
    %v570 = vpop.permute.xlu0 %569
    %571 = vrot.lane.b32.xlu0 %v560, 127
    %v572 = vpop.permute.xlu0 %571
    %v577 = vadd.f32 %v505, %v566
    %v578 = vadd.f32 %v506, %v568
    %v579 = vadd.f32 %v507, %v570
    %v580 = vadd.f32 %v508, %v572
    %s581 = sld [smem:[#allocation3 + $0x19]]
    %v582 = vstv %s581
    %v583 = vmul.f32 %v485, %v582
    %v584 = vmul.f32 %v486, %v582
    %v585 = vmul.f32 %v487, %v582
    %v586 = vmul.f32 %v488, %v582
    %591 = vrot.lane.b32.xlu0 %v583, 127
    %v592 = vpop.permute.xlu0 %591
    %593 = vrot.lane.b32.xlu0 %v584, 127
    %v594 = vpop.permute.xlu0 %593
    %595 = vrot.lane.b32.xlu0 %v585, 127
    %v596 = vpop.permute.xlu0 %595
    %597 = vrot.lane.b32.xlu0 %v586, 127
    %v598 = vpop.permute.xlu0 %597
    %v603 = vadd.f32 %v515, %v592
    %v604 = vadd.f32 %v516, %v594
    %v605 = vadd.f32 %v517, %v596
    %v606 = vadd.f32 %v518, %v598
    %s607 = sld [smem:[#allocation3 + $0x1d]]
    %v608 = vstv %s607
    %v609 = vmul.f32 %v485, %v608
    %v610 = vmul.f32 %v486, %v608
    %v611 = vmul.f32 %v487, %v608
    %v612 = vmul.f32 %v488, %v608
    %617 = vrot.lane.b32.xlu0 %v609, 127
    %v618 = vpop.permute.xlu0 %617
    %619 = vrot.lane.b32.xlu0 %v610, 127
    %v620 = vpop.permute.xlu0 %619
    %621 = vrot.lane.b32.xlu0 %v611, 127
    %v622 = vpop.permute.xlu0 %621
    %623 = vrot.lane.b32.xlu0 %v612, 127
    %v624 = vpop.permute.xlu0 %623
    %v629 = vadd.f32 %v525, %v618
    %v630 = vadd.f32 %v526, %v620
    %v631 = vadd.f32 %v527, %v622
    %v632 = vadd.f32 %v528, %v624
    %v633 = vld [vmem:[%s124 + $0x1] sm:$0xff]
    %v634 = vld [vmem:[%s124 + $0x9] sm:$0xff]
    %v635 = vld [vmem:[%s124 + $0x19] sm:$0xff]
    %v636 = vld [vmem:[%s124 + $0x21] sm:$0xff]
    %s637 = sld [smem:[#allocation3 + $0x21]]
    %v638 = vstv %s637
    %v639 = vmul.f32 %v633, %v638
    %v640 = vmul.f32 %v634, %v638
    %v641 = vmul.f32 %v635, %v638
    %v642 = vmul.f32 %v636, %v638
    %v643 = vadd.f32 %v551, %v639
    %v644 = vadd.f32 %v552, %v640
    %v645 = vadd.f32 %v553, %v641
    %v646 = vadd.f32 %v554, %v642
    %s647 = sld [smem:[#allocation3 + $0x25]]
    %v648 = vstv %s647
    %v649 = vmul.f32 %v633, %v648
    %v650 = vmul.f32 %v634, %v648
    %v651 = vmul.f32 %v635, %v648
    %v652 = vmul.f32 %v636, %v648
    %v653 = vadd.f32 %v577, %v649
    %v654 = vadd.f32 %v578, %v650
    %v655 = vadd.f32 %v579, %v651
    %v656 = vadd.f32 %v580, %v652
    %s657 = sld [smem:[#allocation3 + $0x29]]
    %v658 = vstv %s657
    %v659 = vmul.f32 %v633, %v658
    %v660 = vmul.f32 %v634, %v658
    %v661 = vmul.f32 %v635, %v658
    %v662 = vmul.f32 %v636, %v658
    %v663 = vadd.f32 %v603, %v659
    %v664 = vadd.f32 %v604, %v660
    %v665 = vadd.f32 %v605, %v661
    %v666 = vadd.f32 %v606, %v662
    %s667 = sld [smem:[#allocation3 + $0x2d]]
    %v668 = vstv %s667
    %v669 = vmul.f32 %v633, %v668
    %v670 = vmul.f32 %v634, %v668
    %v671 = vmul.f32 %v635, %v668
    %v672 = vmul.f32 %v636, %v668
    %v673 = vadd.f32 %v629, %v669
    %v674 = vadd.f32 %v630, %v670
    %v675 = vadd.f32 %v631, %v671
    %v676 = vadd.f32 %v632, %v672
    %s677 = sld [smem:[#allocation3 + $0x31]]
    %v678 = vstv %s677
    %v679 = vmul.f32 %v633, %v678
    %v680 = vmul.f32 %v634, %v678
    %v681 = vmul.f32 %v635, %v678
    %v682 = vmul.f32 %v636, %v678
    %687 = vrot.lane.b32.xlu0 %v679, 127
    %v688 = vpop.permute.xlu0 %687
    %689 = vrot.lane.b32.xlu0 %v680, 127
    %v690 = vpop.permute.xlu0 %689
    %691 = vrot.lane.b32.xlu0 %v681, 127
    %v692 = vpop.permute.xlu0 %691
    %693 = vrot.lane.b32.xlu0 %v682, 127
    %v694 = vpop.permute.xlu0 %693
    %v699 = vadd.f32 %v643, %v688
    %v700 = vadd.f32 %v644, %v690
    %v701 = vadd.f32 %v645, %v692
    %v702 = vadd.f32 %v646, %v694
    %s703 = sld [smem:[#allocation3 + $0x35]]
    %v704 = vstv %s703
    %v705 = vmul.f32 %v633, %v704
    %v706 = vmul.f32 %v634, %v704
    %v707 = vmul.f32 %v635, %v704
    %v708 = vmul.f32 %v636, %v704
    %713 = vrot.lane.b32.xlu0 %v705, 127
    %v714 = vpop.permute.xlu0 %713
    %715 = vrot.lane.b32.xlu0 %v706, 127
    %v716 = vpop.permute.xlu0 %715
    %717 = vrot.lane.b32.xlu0 %v707, 127
    %v718 = vpop.permute.xlu0 %717
    %719 = vrot.lane.b32.xlu0 %v708, 127
    %v720 = vpop.permute.xlu0 %719
    %v725 = vadd.f32 %v653, %v714
    %v726 = vadd.f32 %v654, %v716
    %v727 = vadd.f32 %v655, %v718
    %v728 = vadd.f32 %v656, %v720
    %s729 = sld [smem:[#allocation3 + $0x39]]
    %v730 = vstv %s729
    %v731 = vmul.f32 %v633, %v730
    %v732 = vmul.f32 %v634, %v730
    %v733 = vmul.f32 %v635, %v730
    %v734 = vmul.f32 %v636, %v730
    %739 = vrot.lane.b32.xlu0 %v731, 127
    %v740 = vpop.permute.xlu0 %739
    %741 = vrot.lane.b32.xlu0 %v732, 127
    %v742 = vpop.permute.xlu0 %741
    %743 = vrot.lane.b32.xlu0 %v733, 127
    %v744 = vpop.permute.xlu0 %743
    %745 = vrot.lane.b32.xlu0 %v734, 127
    %v746 = vpop.permute.xlu0 %745
    %v751 = vadd.f32 %v663, %v740
    %v752 = vadd.f32 %v664, %v742
    %v753 = vadd.f32 %v665, %v744
    %v754 = vadd.f32 %v666, %v746
    %s755 = sld [smem:[#allocation3 + $0x3d]]
    %v756 = vstv %s755
    %v757 = vmul.f32 %v633, %v756
    %v758 = vmul.f32 %v634, %v756
    %v759 = vmul.f32 %v635, %v756
    %v760 = vmul.f32 %v636, %v756
    %765 = vrot.lane.b32.xlu0 %v757, 127
    %v766 = vpop.permute.xlu0 %765
    %767 = vrot.lane.b32.xlu0 %v758, 127
    %v768 = vpop.permute.xlu0 %767
    %769 = vrot.lane.b32.xlu0 %v759, 127
    %v770 = vpop.permute.xlu0 %769
    %771 = vrot.lane.b32.xlu0 %v760, 127
    %v772 = vpop.permute.xlu0 %771
    %v777 = vadd.f32 %v673, %v766
    %v778 = vadd.f32 %v674, %v768
    %v779 = vadd.f32 %v675, %v770
    %v780 = vadd.f32 %v676, %v772
    %v781 = vld [vmem:[%s150] sm:$0xff]
    %v782 = vld [vmem:[%s150 + $0x8] sm:$0xff]
    %v783 = vld [vmem:[%s150 + $0x18] sm:$0xff]
    %v784 = vld [vmem:[%s150 + $0x20] sm:$0xff]
    %s785 = sld [smem:[#allocation3 + $0x2]]
    %v786 = vstv %s785
    %v787 = vmul.f32 %v781, %v786
    %v788 = vmul.f32 %v782, %v786
    %v789 = vmul.f32 %v783, %v786
    %v790 = vmul.f32 %v784, %v786
    %v791 = vadd.f32 %v699, %v787
    %v792 = vadd.f32 %v700, %v788
    %v793 = vadd.f32 %v701, %v789
    %v794 = vadd.f32 %v702, %v790
    %s795 = sld [smem:[#allocation3 + $0x6]]
    %v796 = vstv %s795
    %v797 = vmul.f32 %v781, %v796
    %v798 = vmul.f32 %v782, %v796
    %v799 = vmul.f32 %v783, %v796
    %v800 = vmul.f32 %v784, %v796
    %v801 = vadd.f32 %v725, %v797
    %v802 = vadd.f32 %v726, %v798
    %v803 = vadd.f32 %v727, %v799
    %v804 = vadd.f32 %v728, %v800
    %s805 = sld [smem:[#allocation3 + $0xa]]
    %v806 = vstv %s805
    %v807 = vmul.f32 %v781, %v806
    %v808 = vmul.f32 %v782, %v806
    %v809 = vmul.f32 %v783, %v806
    %v810 = vmul.f32 %v784, %v806
    %v811 = vadd.f32 %v751, %v807
    %v812 = vadd.f32 %v752, %v808
    %v813 = vadd.f32 %v753, %v809
    %v814 = vadd.f32 %v754, %v810
    %s815 = sld [smem:[#allocation3 + $0xe]]
    %v816 = vstv %s815
    %v817 = vmul.f32 %v781, %v816
    %v818 = vmul.f32 %v782, %v816
    %v819 = vmul.f32 %v783, %v816
    %v820 = vmul.f32 %v784, %v816
    %v821 = vadd.f32 %v777, %v817
    %v822 = vadd.f32 %v778, %v818
    %v823 = vadd.f32 %v779, %v819
    %v824 = vadd.f32 %v780, %v820
    %s825 = sld [smem:[#allocation3 + $0x12]]
    %v826 = vstv %s825
    %v827 = vmul.f32 %v781, %v826
    %v828 = vmul.f32 %v782, %v826
    %v829 = vmul.f32 %v783, %v826
    %v830 = vmul.f32 %v784, %v826
    %835 = vrot.lane.b32.xlu0 %v827, 127
    %v836 = vpop.permute.xlu0 %835
    %837 = vrot.lane.b32.xlu0 %v828, 127
    %v838 = vpop.permute.xlu0 %837
    %839 = vrot.lane.b32.xlu0 %v829, 127
    %v840 = vpop.permute.xlu0 %839
    %841 = vrot.lane.b32.xlu0 %v830, 127
    %v842 = vpop.permute.xlu0 %841
    %v847 = vadd.f32 %v791, %v836
    %v848 = vadd.f32 %v792, %v838
    %v849 = vadd.f32 %v793, %v840
    %v850 = vadd.f32 %v794, %v842
    %s851 = sld [smem:[#allocation3 + $0x16]]
    %v852 = vstv %s851
    %v853 = vmul.f32 %v781, %v852
    %v854 = vmul.f32 %v782, %v852
    %v855 = vmul.f32 %v783, %v852
    %v856 = vmul.f32 %v784, %v852
    %861 = vrot.lane.b32.xlu0 %v853, 127
    %v862 = vpop.permute.xlu0 %861
    %863 = vrot.lane.b32.xlu0 %v854, 127
    %v864 = vpop.permute.xlu0 %863
    %865 = vrot.lane.b32.xlu0 %v855, 127
    %v866 = vpop.permute.xlu0 %865
    %867 = vrot.lane.b32.xlu0 %v856, 127
    %v868 = vpop.permute.xlu0 %867
    %v873 = vadd.f32 %v801, %v862
    %v874 = vadd.f32 %v802, %v864
    %v875 = vadd.f32 %v803, %v866
    %v876 = vadd.f32 %v804, %v868
    %s877 = sld [smem:[#allocation3 + $0x1a]]
    %v878 = vstv %s877
    %v879 = vmul.f32 %v781, %v878
    %v880 = vmul.f32 %v782, %v878
    %v881 = vmul.f32 %v783, %v878
    %v882 = vmul.f32 %v784, %v878
    %887 = vrot.lane.b32.xlu0 %v879, 127
    %v888 = vpop.permute.xlu0 %887
    %889 = vrot.lane.b32.xlu0 %v880, 127
    %v890 = vpop.permute.xlu0 %889
    %891 = vrot.lane.b32.xlu0 %v881, 127
    %v892 = vpop.permute.xlu0 %891
    %893 = vrot.lane.b32.xlu0 %v882, 127
    %v894 = vpop.permute.xlu0 %893
    %v899 = vadd.f32 %v811, %v888
    %v900 = vadd.f32 %v812, %v890
    %v901 = vadd.f32 %v813, %v892
    %v902 = vadd.f32 %v814, %v894
    %s903 = sld [smem:[#allocation3 + $0x1e]]
    %v904 = vstv %s903
    %v905 = vmul.f32 %v781, %v904
    %v906 = vmul.f32 %v782, %v904
    %v907 = vmul.f32 %v783, %v904
    %v908 = vmul.f32 %v784, %v904
    %913 = vrot.lane.b32.xlu0 %v905, 127
    %v914 = vpop.permute.xlu0 %913
    %915 = vrot.lane.b32.xlu0 %v906, 127
    %v916 = vpop.permute.xlu0 %915
    %917 = vrot.lane.b32.xlu0 %v907, 127
    %v918 = vpop.permute.xlu0 %917
    %919 = vrot.lane.b32.xlu0 %v908, 127
    %v920 = vpop.permute.xlu0 %919
    %v925 = vadd.f32 %v821, %v914
    %v926 = vadd.f32 %v822, %v916
    %v927 = vadd.f32 %v823, %v918
    %v928 = vadd.f32 %v824, %v920
    %v929 = vld [vmem:[%s150 + $0x1] sm:$0xff]
    %v930 = vld [vmem:[%s150 + $0x9] sm:$0xff]
    %v931 = vld [vmem:[%s150 + $0x19] sm:$0xff]
    %v932 = vld [vmem:[%s150 + $0x21] sm:$0xff]
    %s933 = sld [smem:[#allocation3 + $0x22]]
    %v934 = vstv %s933
    %v935 = vmul.f32 %v929, %v934
    %v936 = vmul.f32 %v930, %v934
    %v937 = vmul.f32 %v931, %v934
    %v938 = vmul.f32 %v932, %v934
    %v939 = vadd.f32 %v847, %v935
    %v940 = vadd.f32 %v848, %v936
    %v941 = vadd.f32 %v849, %v937
    %v942 = vadd.f32 %v850, %v938
    %s943 = sld [smem:[#allocation3 + $0x26]]
    %v944 = vstv %s943
    %v945 = vmul.f32 %v929, %v944
    %v946 = vmul.f32 %v930, %v944
    %v947 = vmul.f32 %v931, %v944
    %v948 = vmul.f32 %v932, %v944
    %v949 = vadd.f32 %v873, %v945
    %v950 = vadd.f32 %v874, %v946
    %v951 = vadd.f32 %v875, %v947
    %v952 = vadd.f32 %v876, %v948
    %s953 = sld [smem:[#allocation3 + $0x2a]]
    %v954 = vstv %s953
    %v955 = vmul.f32 %v929, %v954
    %v956 = vmul.f32 %v930, %v954
    %v957 = vmul.f32 %v931, %v954
    %v958 = vmul.f32 %v932, %v954
    %v959 = vadd.f32 %v899, %v955
    %v960 = vadd.f32 %v900, %v956
    %v961 = vadd.f32 %v901, %v957
    %v962 = vadd.f32 %v902, %v958
    %s963 = sld [smem:[#allocation3 + $0x2e]]
    %v964 = vstv %s963
    %v965 = vmul.f32 %v929, %v964
    %v966 = vmul.f32 %v930, %v964
    %v967 = vmul.f32 %v931, %v964
    %v968 = vmul.f32 %v932, %v964
    %v969 = vadd.f32 %v925, %v965
    %v970 = vadd.f32 %v926, %v966
    %v971 = vadd.f32 %v927, %v967
    %v972 = vadd.f32 %v928, %v968
    %s973 = sld [smem:[#allocation3 + $0x32]]
    %v974 = vstv %s973
    %v975 = vmul.f32 %v929, %v974
    %v976 = vmul.f32 %v930, %v974
    %v977 = vmul.f32 %v931, %v974
    %v978 = vmul.f32 %v932, %v974
    %983 = vrot.lane.b32.xlu0 %v975, 127
    %v984 = vpop.permute.xlu0 %983
    %985 = vrot.lane.b32.xlu0 %v976, 127
    %v986 = vpop.permute.xlu0 %985
    %987 = vrot.lane.b32.xlu0 %v977, 127
    %v988 = vpop.permute.xlu0 %987
    %989 = vrot.lane.b32.xlu0 %v978, 127
    %v990 = vpop.permute.xlu0 %989
    %v995 = vadd.f32 %v939, %v984
    %v996 = vadd.f32 %v940, %v986
    %v997 = vadd.f32 %v941, %v988
    %v998 = vadd.f32 %v942, %v990
    %s999 = sld [smem:[#allocation3 + $0x36]]
    %v1000 = vstv %s999
    %v1001 = vmul.f32 %v929, %v1000
    %v1002 = vmul.f32 %v930, %v1000
    %v1003 = vmul.f32 %v931, %v1000
    %v1004 = vmul.f32 %v932, %v1000
    %1009 = vrot.lane.b32.xlu0 %v1001, 127
    %v1010 = vpop.permute.xlu0 %1009
    %1011 = vrot.lane.b32.xlu0 %v1002, 127
    %v1012 = vpop.permute.xlu0 %1011
    %1013 = vrot.lane.b32.xlu0 %v1003, 127
    %v1014 = vpop.permute.xlu0 %1013
    %1015 = vrot.lane.b32.xlu0 %v1004, 127
    %v1016 = vpop.permute.xlu0 %1015
    %v1021 = vadd.f32 %v949, %v1010
    %v1022 = vadd.f32 %v950, %v1012
    %v1023 = vadd.f32 %v951, %v1014
    %v1024 = vadd.f32 %v952, %v1016
    %s1025 = sld [smem:[#allocation3 + $0x3a]]
    %v1026 = vstv %s1025
    %v1027 = vmul.f32 %v929, %v1026
    %v1028 = vmul.f32 %v930, %v1026
    %v1029 = vmul.f32 %v931, %v1026
    %v1030 = vmul.f32 %v932, %v1026
    %1035 = vrot.lane.b32.xlu0 %v1027, 127
    %v1036 = vpop.permute.xlu0 %1035
    %1037 = vrot.lane.b32.xlu0 %v1028, 127
    %v1038 = vpop.permute.xlu0 %1037
    %1039 = vrot.lane.b32.xlu0 %v1029, 127
    %v1040 = vpop.permute.xlu0 %1039
    %1041 = vrot.lane.b32.xlu0 %v1030, 127
    %v1042 = vpop.permute.xlu0 %1041
    %v1047 = vadd.f32 %v959, %v1036
    %v1048 = vadd.f32 %v960, %v1038
    %v1049 = vadd.f32 %v961, %v1040
    %v1050 = vadd.f32 %v962, %v1042
    %s1051 = sld [smem:[#allocation3 + $0x3e]]
    %v1052 = vstv %s1051
    %v1053 = vmul.f32 %v929, %v1052
    %v1054 = vmul.f32 %v930, %v1052
    %v1055 = vmul.f32 %v931, %v1052
    %v1056 = vmul.f32 %v932, %v1052
    %1061 = vrot.lane.b32.xlu0 %v1053, 127
    %v1062 = vpop.permute.xlu0 %1061
    %1063 = vrot.lane.b32.xlu0 %v1054, 127
    %v1064 = vpop.permute.xlu0 %1063
    %1065 = vrot.lane.b32.xlu0 %v1055, 127
    %v1066 = vpop.permute.xlu0 %1065
    %1067 = vrot.lane.b32.xlu0 %v1056, 127
    %v1068 = vpop.permute.xlu0 %1067
    %v1073 = vadd.f32 %v969, %v1062
    %v1074 = vadd.f32 %v970, %v1064
    %v1075 = vadd.f32 %v971, %v1066
    %v1076 = vadd.f32 %v972, %v1068
    %v1077 = vld [vmem:[%s176] sm:$0xff]
    %v1078 = vld [vmem:[%s176 + $0x8] sm:$0xff]
    %v1079 = vld [vmem:[%s176 + $0x18] sm:$0xff]
    %v1080 = vld [vmem:[%s176 + $0x20] sm:$0xff]
    %s1081 = sld [smem:[#allocation3 + $0x3]]
    %v1082 = vstv %s1081
    %v1083 = vmul.f32 %v1077, %v1082
    %v1084 = vmul.f32 %v1078, %v1082
    %v1085 = vmul.f32 %v1079, %v1082
    %v1086 = vmul.f32 %v1080, %v1082
    %v1087 = vadd.f32 %v995, %v1083
    %v1088 = vadd.f32 %v996, %v1084
    %v1089 = vadd.f32 %v997, %v1085
    %v1090 = vadd.f32 %v998, %v1086
    %s1091 = sld [smem:[#allocation3 + $0x7]]
    %v1092 = vstv %s1091
    %v1093 = vmul.f32 %v1077, %v1092
    %v1094 = vmul.f32 %v1078, %v1092
    %v1095 = vmul.f32 %v1079, %v1092
    %v1096 = vmul.f32 %v1080, %v1092
    %v1097 = vadd.f32 %v1021, %v1093
    %v1098 = vadd.f32 %v1022, %v1094
    %v1099 = vadd.f32 %v1023, %v1095
    %v1100 = vadd.f32 %v1024, %v1096
    %s1101 = sld [smem:[#allocation3 + $0xb]]
    %v1102 = vstv %s1101
    %v1103 = vmul.f32 %v1077, %v1102
    %v1104 = vmul.f32 %v1078, %v1102
    %v1105 = vmul.f32 %v1079, %v1102
    %v1106 = vmul.f32 %v1080, %v1102
    %v1107 = vadd.f32 %v1047, %v1103
    %v1108 = vadd.f32 %v1048, %v1104
    %v1109 = vadd.f32 %v1049, %v1105
    %v1110 = vadd.f32 %v1050, %v1106
    %s1111 = sld [smem:[#allocation3 + $0xf]]
    %v1112 = vstv %s1111
    %v1113 = vmul.f32 %v1077, %v1112
    %v1114 = vmul.f32 %v1078, %v1112
    %v1115 = vmul.f32 %v1079, %v1112
    %v1116 = vmul.f32 %v1080, %v1112
    %v1117 = vadd.f32 %v1073, %v1113
    %v1118 = vadd.f32 %v1074, %v1114
    %v1119 = vadd.f32 %v1075, %v1115
    %v1120 = vadd.f32 %v1076, %v1116
    %s1121 = sld [smem:[#allocation3 + $0x13]]
    %v1122 = vstv %s1121
    %v1123 = vmul.f32 %v1077, %v1122
    %v1124 = vmul.f32 %v1078, %v1122
    %v1125 = vmul.f32 %v1079, %v1122
    %v1126 = vmul.f32 %v1080, %v1122
    %1131 = vrot.lane.b32.xlu0 %v1123, 127
    %v1132 = vpop.permute.xlu0 %1131
    %1133 = vrot.lane.b32.xlu0 %v1124, 127
    %v1134 = vpop.permute.xlu0 %1133
    %1135 = vrot.lane.b32.xlu0 %v1125, 127
    %v1136 = vpop.permute.xlu0 %1135
    %1137 = vrot.lane.b32.xlu0 %v1126, 127
    %v1138 = vpop.permute.xlu0 %1137
    %v1143 = vadd.f32 %v1087, %v1132
    %v1144 = vadd.f32 %v1088, %v1134
    %v1145 = vadd.f32 %v1089, %v1136
    %v1146 = vadd.f32 %v1090, %v1138
    %s1147 = sld [smem:[#allocation3 + $0x17]]
    %v1148 = vstv %s1147
    %v1149 = vmul.f32 %v1077, %v1148
    %v1150 = vmul.f32 %v1078, %v1148
    %v1151 = vmul.f32 %v1079, %v1148
    %v1152 = vmul.f32 %v1080, %v1148
    %1157 = vrot.lane.b32.xlu0 %v1149, 127
    %v1158 = vpop.permute.xlu0 %1157
    %1159 = vrot.lane.b32.xlu0 %v1150, 127
    %v1160 = vpop.permute.xlu0 %1159
    %1161 = vrot.lane.b32.xlu0 %v1151, 127
    %v1162 = vpop.permute.xlu0 %1161
    %1163 = vrot.lane.b32.xlu0 %v1152, 127
    %v1164 = vpop.permute.xlu0 %1163
    %v1169 = vadd.f32 %v1097, %v1158
    %v1170 = vadd.f32 %v1098, %v1160
    %v1171 = vadd.f32 %v1099, %v1162
    %v1172 = vadd.f32 %v1100, %v1164
    %s1173 = sld [smem:[#allocation3 + $0x1b]]
    %v1174 = vstv %s1173
    %v1175 = vmul.f32 %v1077, %v1174
    %v1176 = vmul.f32 %v1078, %v1174
    %v1177 = vmul.f32 %v1079, %v1174
    %v1178 = vmul.f32 %v1080, %v1174
    %1183 = vrot.lane.b32.xlu0 %v1175, 127
    %v1184 = vpop.permute.xlu0 %1183
    %1185 = vrot.lane.b32.xlu0 %v1176, 127
    %v1186 = vpop.permute.xlu0 %1185
    %1187 = vrot.lane.b32.xlu0 %v1177, 127
    %v1188 = vpop.permute.xlu0 %1187
    %1189 = vrot.lane.b32.xlu0 %v1178, 127
    %v1190 = vpop.permute.xlu0 %1189
    %v1195 = vadd.f32 %v1107, %v1184
    %v1196 = vadd.f32 %v1108, %v1186
    %v1197 = vadd.f32 %v1109, %v1188
    %v1198 = vadd.f32 %v1110, %v1190
    %s1199 = sld [smem:[#allocation3 + $0x1f]]
    %v1200 = vstv %s1199
    %v1201 = vmul.f32 %v1077, %v1200
    %v1202 = vmul.f32 %v1078, %v1200
    %v1203 = vmul.f32 %v1079, %v1200
    %v1204 = vmul.f32 %v1080, %v1200
    %1209 = vrot.lane.b32.xlu0 %v1201, 127
    %v1210 = vpop.permute.xlu0 %1209
    %1211 = vrot.lane.b32.xlu0 %v1202, 127
    %v1212 = vpop.permute.xlu0 %1211
    %1213 = vrot.lane.b32.xlu0 %v1203, 127
    %v1214 = vpop.permute.xlu0 %1213
    %1215 = vrot.lane.b32.xlu0 %v1204, 127
    %v1216 = vpop.permute.xlu0 %1215
    %v1221 = vadd.f32 %v1117, %v1210
    %v1222 = vadd.f32 %v1118, %v1212
    %v1223 = vadd.f32 %v1119, %v1214
    %v1224 = vadd.f32 %v1120, %v1216
    %v1225 = vld [vmem:[%s176 + $0x1] sm:$0xff]
    %v1226 = vld [vmem:[%s176 + $0x9] sm:$0xff]
    %v1227 = vld [vmem:[%s176 + $0x19] sm:$0xff]
    %v1228 = vld [vmem:[%s176 + $0x21] sm:$0xff]
    %s1229 = sld [smem:[#allocation3 + $0x23]]
    %v1230 = vstv %s1229
    %v1231 = vmul.f32 %v1225, %v1230
    %v1232 = vmul.f32 %v1226, %v1230
    %v1233 = vmul.f32 %v1227, %v1230
    %v1234 = vmul.f32 %v1228, %v1230
    %v1235 = vadd.f32 %v1143, %v1231
    %v1236 = vadd.f32 %v1144, %v1232
    %v1237 = vadd.f32 %v1145, %v1233
    %v1238 = vadd.f32 %v1146, %v1234
    %s1239 = sld [smem:[#allocation3 + $0x27]]
    %v1240 = vstv %s1239
    %v1241 = vmul.f32 %v1225, %v1240
    %v1242 = vmul.f32 %v1226, %v1240
    %v1243 = vmul.f32 %v1227, %v1240
    %v1244 = vmul.f32 %v1228, %v1240
    %v1245 = vadd.f32 %v1169, %v1241
    %v1246 = vadd.f32 %v1170, %v1242
    %v1247 = vadd.f32 %v1171, %v1243
    %v1248 = vadd.f32 %v1172, %v1244
    %s1249 = sld [smem:[#allocation3 + $0x2b]]
    %v1250 = vstv %s1249
    %v1251 = vmul.f32 %v1225, %v1250
    %v1252 = vmul.f32 %v1226, %v1250
    %v1253 = vmul.f32 %v1227, %v1250
    %v1254 = vmul.f32 %v1228, %v1250
    %v1255 = vadd.f32 %v1195, %v1251
    %v1256 = vadd.f32 %v1196, %v1252
    %v1257 = vadd.f32 %v1197, %v1253
    %v1258 = vadd.f32 %v1198, %v1254
    %s1259 = sld [smem:[#allocation3 + $0x2f]]
    %v1260 = vstv %s1259
    %v1261 = vmul.f32 %v1225, %v1260
    %v1262 = vmul.f32 %v1226, %v1260
    %v1263 = vmul.f32 %v1227, %v1260
    %v1264 = vmul.f32 %v1228, %v1260
    %v1265 = vadd.f32 %v1221, %v1261
    %v1266 = vadd.f32 %v1222, %v1262
    %v1267 = vadd.f32 %v1223, %v1263
    %v1268 = vadd.f32 %v1224, %v1264
    %s1269 = sld [smem:[#allocation3 + $0x33]]
    %v1270 = vstv %s1269
    %v1271 = vmul.f32 %v1225, %v1270
    %v1272 = vmul.f32 %v1226, %v1270
    %v1273 = vmul.f32 %v1227, %v1270
    %v1274 = vmul.f32 %v1228, %v1270
    %1279 = vrot.lane.b32.xlu0 %v1271, 127
    %v1280 = vpop.permute.xlu0 %1279
    %1281 = vrot.lane.b32.xlu0 %v1272, 127
    %v1282 = vpop.permute.xlu0 %1281
    %1283 = vrot.lane.b32.xlu0 %v1273, 127
    %v1284 = vpop.permute.xlu0 %1283
    %1285 = vrot.lane.b32.xlu0 %v1274, 127
    %v1286 = vpop.permute.xlu0 %1285
    %v1291 = vadd.f32 %v1235, %v1280
    %v1292 = vadd.f32 %v1236, %v1282
    %v1293 = vadd.f32 %v1237, %v1284
    %v1294 = vadd.f32 %v1238, %v1286
    %s1295 = sld [smem:[#allocation3 + $0x37]]
    %v1296 = vstv %s1295
    %v1297 = vmul.f32 %v1225, %v1296
    %v1298 = vmul.f32 %v1226, %v1296
    %v1299 = vmul.f32 %v1227, %v1296
    %v1300 = vmul.f32 %v1228, %v1296
    %1305 = vrot.lane.b32.xlu0 %v1297, 127
    %v1306 = vpop.permute.xlu0 %1305
    %1307 = vrot.lane.b32.xlu0 %v1298, 127
    %v1308 = vpop.permute.xlu0 %1307
    %1309 = vrot.lane.b32.xlu0 %v1299, 127
    %v1310 = vpop.permute.xlu0 %1309
    %1311 = vrot.lane.b32.xlu0 %v1300, 127
    %v1312 = vpop.permute.xlu0 %1311
    %v1317 = vadd.f32 %v1245, %v1306
    %v1318 = vadd.f32 %v1246, %v1308
    %v1319 = vadd.f32 %v1247, %v1310
    %v1320 = vadd.f32 %v1248, %v1312
    %s1321 = sld [smem:[#allocation3 + $0x3b]]
    %v1322 = vstv %s1321
    %v1323 = vmul.f32 %v1225, %v1322
    %v1324 = vmul.f32 %v1226, %v1322
    %v1325 = vmul.f32 %v1227, %v1322
    %v1326 = vmul.f32 %v1228, %v1322
    %1331 = vrot.lane.b32.xlu0 %v1323, 127
    %v1332 = vpop.permute.xlu0 %1331
    %1333 = vrot.lane.b32.xlu0 %v1324, 127
    %v1334 = vpop.permute.xlu0 %1333
    %1335 = vrot.lane.b32.xlu0 %v1325, 127
    %v1336 = vpop.permute.xlu0 %1335
    %1337 = vrot.lane.b32.xlu0 %v1326, 127
    %v1338 = vpop.permute.xlu0 %1337
    %v1343 = vadd.f32 %v1255, %v1332
    %v1344 = vadd.f32 %v1256, %v1334
    %v1345 = vadd.f32 %v1257, %v1336
    %v1346 = vadd.f32 %v1258, %v1338
    %s1347 = sld [smem:[#allocation3 + $0x3f]]
    %v1348 = vstv %s1347
    %v1349 = vmul.f32 %v1225, %v1348
    %v1350 = vmul.f32 %v1226, %v1348
    %v1351 = vmul.f32 %v1227, %v1348
    %v1352 = vmul.f32 %v1228, %v1348
    %1357 = vrot.lane.b32.xlu0 %v1349, 127
    %v1358 = vpop.permute.xlu0 %1357
    %1359 = vrot.lane.b32.xlu0 %v1350, 127
    %v1360 = vpop.permute.xlu0 %1359
    %1361 = vrot.lane.b32.xlu0 %v1351, 127
    %v1362 = vpop.permute.xlu0 %1361
    %1363 = vrot.lane.b32.xlu0 %v1352, 127
    %v1364 = vpop.permute.xlu0 %1363
    %v1369 = vadd.f32 %v1265, %v1358
    %v1370 = vadd.f32 %v1266, %v1360
    %v1371 = vadd.f32 %v1267, %v1362
    %v1372 = vadd.f32 %v1268, %v1364
    %vm1373 = vcmask 130048
    %1374 = vst.msk [vmem:[#allocation10] sm:$0xff] %vm1373, %v1291
    %1375 = vst.msk [vmem:[#allocation10 + $0x8] sm:$0xff] %vm1373, %v1292
    %1376 = vst.msk [vmem:[#allocation10 + $0x10] sm:$0xff] %vm1373, %v1293
    %1377 = vst.msk [vmem:[#allocation10 + $0x18] sm:$0xff] %vm1373, %v1294
    %s1378 = scalar_lea.vmem [#allocation10], 128
    %1379 = vst.msk [vmem:[%s1378] sm:$0xff] %vm1373, %v1317
    %1380 = vst.msk [vmem:[%s1378 + $0x8] sm:$0xff] %vm1373, %v1318
    %1381 = vst.msk [vmem:[%s1378 + $0x10] sm:$0xff] %vm1373, %v1319
    %1382 = vst.msk [vmem:[%s1378 + $0x18] sm:$0xff] %vm1373, %v1320
    %s1383 = scalar_lea.vmem [#allocation10], 256
    %1384 = vst.msk [vmem:[%s1383] sm:$0xff] %vm1373, %v1343
    %1385 = vst.msk [vmem:[%s1383 + $0x8] sm:$0xff] %vm1373, %v1344
    %1386 = vst.msk [vmem:[%s1383 + $0x10] sm:$0xff] %vm1373, %v1345
    %1387 = vst.msk [vmem:[%s1383 + $0x18] sm:$0xff] %vm1373, %v1346
    %s1388 = scalar_lea.vmem [#allocation10], 384
    %1389 = vst.msk [vmem:[%s1388] sm:$0xff] %vm1373, %v1369
    %1390 = vst.msk [vmem:[%s1388 + $0x8] sm:$0xff] %vm1373, %v1370
    %1391 = vst.msk [vmem:[%s1388 + $0x10] sm:$0xff] %vm1373, %v1371
    %1392 = vst.msk [vmem:[%s1388 + $0x18] sm:$0xff] %vm1373, %v1372
    %s1393 = sld [smem:[#allocation8]]
    %v1394 = vstv %s1393
    %s1395 = sld [smem:[#allocation8 + $0x1]]
    %v1396 = vstv %s1395
    %s1397 = sld [smem:[#allocation8 + $0x2]]
    %v1398 = vstv %s1397
    %s1399 = sld [smem:[#allocation8 + $0x3]]
    %v1400 = vstv %s1399
    %v1401 = vld [vmem:[#allocation2] sm:$0xff]
    %v1402 = vld [vmem:[#allocation2 + $0x8] sm:$0xff]
    %v1403 = vld [vmem:[#allocation2 + $0x18] sm:$0xff]
    %v1404 = vld [vmem:[#allocation2 + $0x20] sm:$0xff]
    %s1405 = sld [smem:[#allocation3 + $0x40]]
    %v1406 = vstv %s1405
    %v1407 = vmul.f32 %v1401, %v1406
    %v1408 = vmul.f32 %v1402, %v1406
    %v1409 = vmul.f32 %v1403, %v1406
    %v1410 = vmul.f32 %v1404, %v1406
    %v1411 = vadd.f32 %v1394, %v1407
    %v1412 = vadd.f32 %v1394, %v1408
    %v1413 = vadd.f32 %v1394, %v1409
    %v1414 = vadd.f32 %v1394, %v1410
    %s1415 = sld [smem:[#allocation3 + $0x44]]
    %v1416 = vstv %s1415
    %v1417 = vmul.f32 %v1401, %v1416
    %v1418 = vmul.f32 %v1402, %v1416
    %v1419 = vmul.f32 %v1403, %v1416
    %v1420 = vmul.f32 %v1404, %v1416
    %v1421 = vadd.f32 %v1396, %v1417
    %v1422 = vadd.f32 %v1396, %v1418
    %v1423 = vadd.f32 %v1396, %v1419
    %v1424 = vadd.f32 %v1396, %v1420
    %s1425 = sld [smem:[#allocation3 + $0x48]]
    %v1426 = vstv %s1425
    %v1427 = vmul.f32 %v1401, %v1426
    %v1428 = vmul.f32 %v1402, %v1426
    %v1429 = vmul.f32 %v1403, %v1426
    %v1430 = vmul.f32 %v1404, %v1426
    %v1431 = vadd.f32 %v1398, %v1427
    %v1432 = vadd.f32 %v1398, %v1428
    %v1433 = vadd.f32 %v1398, %v1429
    %v1434 = vadd.f32 %v1398, %v1430
    %s1435 = sld [smem:[#allocation3 + $0x4c]]
    %v1436 = vstv %s1435
    %v1437 = vmul.f32 %v1401, %v1436
    %v1438 = vmul.f32 %v1402, %v1436
    %v1439 = vmul.f32 %v1403, %v1436
    %v1440 = vmul.f32 %v1404, %v1436
    %v1441 = vadd.f32 %v1400, %v1437
    %v1442 = vadd.f32 %v1400, %v1438
    %v1443 = vadd.f32 %v1400, %v1439
    %v1444 = vadd.f32 %v1400, %v1440
    %s1445 = sld [smem:[#allocation3 + $0x50]]
    %v1446 = vstv %s1445
    %v1447 = vmul.f32 %v1401, %v1446
    %v1448 = vmul.f32 %v1402, %v1446
    %v1449 = vmul.f32 %v1403, %v1446
    %v1450 = vmul.f32 %v1404, %v1446
    %1455 = vrot.lane.b32.xlu0 %v1447, 127
    %v1456 = vpop.permute.xlu0 %1455
    %1457 = vrot.lane.b32.xlu0 %v1448, 127
    %v1458 = vpop.permute.xlu0 %1457
    %1459 = vrot.lane.b32.xlu0 %v1449, 127
    %v1460 = vpop.permute.xlu0 %1459
    %1461 = vrot.lane.b32.xlu0 %v1450, 127
    %v1462 = vpop.permute.xlu0 %1461
    %v1467 = vadd.f32 %v1411, %v1456
    %v1468 = vadd.f32 %v1412, %v1458
    %v1469 = vadd.f32 %v1413, %v1460
    %v1470 = vadd.f32 %v1414, %v1462
    %s1471 = sld [smem:[#allocation3 + $0x54]]
    %v1472 = vstv %s1471
    %v1473 = vmul.f32 %v1401, %v1472
    %v1474 = vmul.f32 %v1402, %v1472
    %v1475 = vmul.f32 %v1403, %v1472
    %v1476 = vmul.f32 %v1404, %v1472
    %1481 = vrot.lane.b32.xlu0 %v1473, 127
    %v1482 = vpop.permute.xlu0 %1481
    %1483 = vrot.lane.b32.xlu0 %v1474, 127
    %v1484 = vpop.permute.xlu0 %1483
    %1485 = vrot.lane.b32.xlu0 %v1475, 127
    %v1486 = vpop.permute.xlu0 %1485
    %1487 = vrot.lane.b32.xlu0 %v1476, 127
    %v1488 = vpop.permute.xlu0 %1487
    %v1493 = vadd.f32 %v1421, %v1482
    %v1494 = vadd.f32 %v1422, %v1484
    %v1495 = vadd.f32 %v1423, %v1486
    %v1496 = vadd.f32 %v1424, %v1488
    %s1497 = sld [smem:[#allocation3 + $0x58]]
    %v1498 = vstv %s1497
    %v1499 = vmul.f32 %v1401, %v1498
    %v1500 = vmul.f32 %v1402, %v1498
    %v1501 = vmul.f32 %v1403, %v1498
    %v1502 = vmul.f32 %v1404, %v1498
    %1507 = vrot.lane.b32.xlu0 %v1499, 127
    %v1508 = vpop.permute.xlu0 %1507
    %1509 = vrot.lane.b32.xlu0 %v1500, 127
    %v1510 = vpop.permute.xlu0 %1509
    %1511 = vrot.lane.b32.xlu0 %v1501, 127
    %v1512 = vpop.permute.xlu0 %1511
    %1513 = vrot.lane.b32.xlu0 %v1502, 127
    %v1514 = vpop.permute.xlu0 %1513
    %v1519 = vadd.f32 %v1431, %v1508
    %v1520 = vadd.f32 %v1432, %v1510
    %v1521 = vadd.f32 %v1433, %v1512
    %v1522 = vadd.f32 %v1434, %v1514
    %s1523 = sld [smem:[#allocation3 + $0x5c]]
    %v1524 = vstv %s1523
    %v1525 = vmul.f32 %v1401, %v1524
    %v1526 = vmul.f32 %v1402, %v1524
    %v1527 = vmul.f32 %v1403, %v1524
    %v1528 = vmul.f32 %v1404, %v1524
    %1533 = vrot.lane.b32.xlu0 %v1525, 127
    %v1534 = vpop.permute.xlu0 %1533
    %1535 = vrot.lane.b32.xlu0 %v1526, 127
    %v1536 = vpop.permute.xlu0 %1535
    %1537 = vrot.lane.b32.xlu0 %v1527, 127
    %v1538 = vpop.permute.xlu0 %1537
    %1539 = vrot.lane.b32.xlu0 %v1528, 127
    %v1540 = vpop.permute.xlu0 %1539
    %v1545 = vadd.f32 %v1441, %v1534
    %v1546 = vadd.f32 %v1442, %v1536
    %v1547 = vadd.f32 %v1443, %v1538
    %v1548 = vadd.f32 %v1444, %v1540
    %v1549 = vld [vmem:[#allocation2 + $0x1] sm:$0xff]
    %v1550 = vld [vmem:[#allocation2 + $0x9] sm:$0xff]
    %v1551 = vld [vmem:[#allocation2 + $0x19] sm:$0xff]
    %v1552 = vld [vmem:[#allocation2 + $0x21] sm:$0xff]
    %s1553 = sld [smem:[#allocation3 + $0x60]]
    %v1554 = vstv %s1553
    %v1555 = vmul.f32 %v1549, %v1554
    %v1556 = vmul.f32 %v1550, %v1554
    %v1557 = vmul.f32 %v1551, %v1554
    %v1558 = vmul.f32 %v1552, %v1554
    %v1559 = vadd.f32 %v1467, %v1555
    %v1560 = vadd.f32 %v1468, %v1556
    %v1561 = vadd.f32 %v1469, %v1557
    %v1562 = vadd.f32 %v1470, %v1558
    %s1563 = sld [smem:[#allocation3 + $0x64]]
    %v1564 = vstv %s1563
    %v1565 = vmul.f32 %v1549, %v1564
    %v1566 = vmul.f32 %v1550, %v1564
    %v1567 = vmul.f32 %v1551, %v1564
    %v1568 = vmul.f32 %v1552, %v1564
    %v1569 = vadd.f32 %v1493, %v1565
    %v1570 = vadd.f32 %v1494, %v1566
    %v1571 = vadd.f32 %v1495, %v1567
    %v1572 = vadd.f32 %v1496, %v1568
    %s1573 = sld [smem:[#allocation3 + $0x68]]
    %v1574 = vstv %s1573
    %v1575 = vmul.f32 %v1549, %v1574
    %v1576 = vmul.f32 %v1550, %v1574
    %v1577 = vmul.f32 %v1551, %v1574
    %v1578 = vmul.f32 %v1552, %v1574
    %v1579 = vadd.f32 %v1519, %v1575
    %v1580 = vadd.f32 %v1520, %v1576
    %v1581 = vadd.f32 %v1521, %v1577
    %v1582 = vadd.f32 %v1522, %v1578
    %s1583 = sld [smem:[#allocation3 + $0x6c]]
    %v1584 = vstv %s1583
    %v1585 = vmul.f32 %v1549, %v1584
    %v1586 = vmul.f32 %v1550, %v1584
    %v1587 = vmul.f32 %v1551, %v1584
    %v1588 = vmul.f32 %v1552, %v1584
    %v1589 = vadd.f32 %v1545, %v1585
    %v1590 = vadd.f32 %v1546, %v1586
    %v1591 = vadd.f32 %v1547, %v1587
    %v1592 = vadd.f32 %v1548, %v1588
    %s1593 = sld [smem:[#allocation3 + $0x70]]
    %v1594 = vstv %s1593
    %v1595 = vmul.f32 %v1549, %v1594
    %v1596 = vmul.f32 %v1550, %v1594
    %v1597 = vmul.f32 %v1551, %v1594
    %v1598 = vmul.f32 %v1552, %v1594
    %1603 = vrot.lane.b32.xlu0 %v1595, 127
    %v1604 = vpop.permute.xlu0 %1603
    %1605 = vrot.lane.b32.xlu0 %v1596, 127
    %v1606 = vpop.permute.xlu0 %1605
    %1607 = vrot.lane.b32.xlu0 %v1597, 127
    %v1608 = vpop.permute.xlu0 %1607
    %1609 = vrot.lane.b32.xlu0 %v1598, 127
    %v1610 = vpop.permute.xlu0 %1609
    %v1615 = vadd.f32 %v1559, %v1604
    %v1616 = vadd.f32 %v1560, %v1606
    %v1617 = vadd.f32 %v1561, %v1608
    %v1618 = vadd.f32 %v1562, %v1610
    %s1619 = sld [smem:[#allocation3 + $0x74]]
    %v1620 = vstv %s1619
    %v1621 = vmul.f32 %v1549, %v1620
    %v1622 = vmul.f32 %v1550, %v1620
    %v1623 = vmul.f32 %v1551, %v1620
    %v1624 = vmul.f32 %v1552, %v1620
    %1629 = vrot.lane.b32.xlu0 %v1621, 127
    %v1630 = vpop.permute.xlu0 %1629
    %1631 = vrot.lane.b32.xlu0 %v1622, 127
    %v1632 = vpop.permute.xlu0 %1631
    %1633 = vrot.lane.b32.xlu0 %v1623, 127
    %v1634 = vpop.permute.xlu0 %1633
    %1635 = vrot.lane.b32.xlu0 %v1624, 127
    %v1636 = vpop.permute.xlu0 %1635
    %v1641 = vadd.f32 %v1569, %v1630
    %v1642 = vadd.f32 %v1570, %v1632
    %v1643 = vadd.f32 %v1571, %v1634
    %v1644 = vadd.f32 %v1572, %v1636
    %s1645 = sld [smem:[#allocation3 + $0x78]]
    %v1646 = vstv %s1645
    %v1647 = vmul.f32 %v1549, %v1646
    %v1648 = vmul.f32 %v1550, %v1646
    %v1649 = vmul.f32 %v1551, %v1646
    %v1650 = vmul.f32 %v1552, %v1646
    %1655 = vrot.lane.b32.xlu0 %v1647, 127
    %v1656 = vpop.permute.xlu0 %1655
    %1657 = vrot.lane.b32.xlu0 %v1648, 127
    %v1658 = vpop.permute.xlu0 %1657
    %1659 = vrot.lane.b32.xlu0 %v1649, 127
    %v1660 = vpop.permute.xlu0 %1659
    %1661 = vrot.lane.b32.xlu0 %v1650, 127
    %v1662 = vpop.permute.xlu0 %1661
    %v1667 = vadd.f32 %v1579, %v1656
    %v1668 = vadd.f32 %v1580, %v1658
    %v1669 = vadd.f32 %v1581, %v1660
    %v1670 = vadd.f32 %v1582, %v1662
    %s1671 = sld [smem:[#allocation3 + $0x7c]]
    %v1672 = vstv %s1671
    %v1673 = vmul.f32 %v1549, %v1672
    %v1674 = vmul.f32 %v1550, %v1672
    %v1675 = vmul.f32 %v1551, %v1672
    %v1676 = vmul.f32 %v1552, %v1672
    %1681 = vrot.lane.b32.xlu0 %v1673, 127
    %v1682 = vpop.permute.xlu0 %1681
    %1683 = vrot.lane.b32.xlu0 %v1674, 127
    %v1684 = vpop.permute.xlu0 %1683
    %1685 = vrot.lane.b32.xlu0 %v1675, 127
    %v1686 = vpop.permute.xlu0 %1685
    %1687 = vrot.lane.b32.xlu0 %v1676, 127
    %v1688 = vpop.permute.xlu0 %1687
    %v1693 = vadd.f32 %v1589, %v1682
    %v1694 = vadd.f32 %v1590, %v1684
    %v1695 = vadd.f32 %v1591, %v1686
    %v1696 = vadd.f32 %v1592, %v1688
    %v1697 = vld [vmem:[%s124] sm:$0xff]
    %v1698 = vld [vmem:[%s124 + $0x8] sm:$0xff]
    %v1699 = vld [vmem:[%s124 + $0x18] sm:$0xff]
    %v1700 = vld [vmem:[%s124 + $0x20] sm:$0xff]
    %s1701 = sld [smem:[#allocation3 + $0x41]]
    %v1702 = vstv %s1701
    %v1703 = vmul.f32 %v1697, %v1702
    %v1704 = vmul.f32 %v1698, %v1702
    %v1705 = vmul.f32 %v1699, %v1702
    %v1706 = vmul.f32 %v1700, %v1702
    %v1707 = vadd.f32 %v1615, %v1703
    %v1708 = vadd.f32 %v1616, %v1704
    %v1709 = vadd.f32 %v1617, %v1705
    %v1710 = vadd.f32 %v1618, %v1706
    %s1711 = sld [smem:[#allocation3 + $0x45]]
    %v1712 = vstv %s1711
    %v1713 = vmul.f32 %v1697, %v1712
    %v1714 = vmul.f32 %v1698, %v1712
    %v1715 = vmul.f32 %v1699, %v1712
    %v1716 = vmul.f32 %v1700, %v1712
    %v1717 = vadd.f32 %v1641, %v1713
    %v1718 = vadd.f32 %v1642, %v1714
    %v1719 = vadd.f32 %v1643, %v1715
    %v1720 = vadd.f32 %v1644, %v1716
    %s1721 = sld [smem:[#allocation3 + $0x49]]
    %v1722 = vstv %s1721
    %v1723 = vmul.f32 %v1697, %v1722
    %v1724 = vmul.f32 %v1698, %v1722
    %v1725 = vmul.f32 %v1699, %v1722
    %v1726 = vmul.f32 %v1700, %v1722
    %v1727 = vadd.f32 %v1667, %v1723
    %v1728 = vadd.f32 %v1668, %v1724
    %v1729 = vadd.f32 %v1669, %v1725
    %v1730 = vadd.f32 %v1670, %v1726
    %s1731 = sld [smem:[#allocation3 + $0x4d]]
    %v1732 = vstv %s1731
    %v1733 = vmul.f32 %v1697, %v1732
    %v1734 = vmul.f32 %v1698, %v1732
    %v1735 = vmul.f32 %v1699, %v1732
    %v1736 = vmul.f32 %v1700, %v1732
    %v1737 = vadd.f32 %v1693, %v1733
    %v1738 = vadd.f32 %v1694, %v1734
    %v1739 = vadd.f32 %v1695, %v1735
    %v1740 = vadd.f32 %v1696, %v1736
    %s1741 = sld [smem:[#allocation3 + $0x51]]
    %v1742 = vstv %s1741
    %v1743 = vmul.f32 %v1697, %v1742
    %v1744 = vmul.f32 %v1698, %v1742
    %v1745 = vmul.f32 %v1699, %v1742
    %v1746 = vmul.f32 %v1700, %v1742
    %1751 = vrot.lane.b32.xlu0 %v1743, 127
    %v1752 = vpop.permute.xlu0 %1751
    %1753 = vrot.lane.b32.xlu0 %v1744, 127
    %v1754 = vpop.permute.xlu0 %1753
    %1755 = vrot.lane.b32.xlu0 %v1745, 127
    %v1756 = vpop.permute.xlu0 %1755
    %1757 = vrot.lane.b32.xlu0 %v1746, 127
    %v1758 = vpop.permute.xlu0 %1757
    %v1763 = vadd.f32 %v1707, %v1752
    %v1764 = vadd.f32 %v1708, %v1754
    %v1765 = vadd.f32 %v1709, %v1756
    %v1766 = vadd.f32 %v1710, %v1758
    %s1767 = sld [smem:[#allocation3 + $0x55]]
    %v1768 = vstv %s1767
    %v1769 = vmul.f32 %v1697, %v1768
    %v1770 = vmul.f32 %v1698, %v1768
    %v1771 = vmul.f32 %v1699, %v1768
    %v1772 = vmul.f32 %v1700, %v1768
    %1777 = vrot.lane.b32.xlu0 %v1769, 127
    %v1778 = vpop.permute.xlu0 %1777
    %1779 = vrot.lane.b32.xlu0 %v1770, 127
    %v1780 = vpop.permute.xlu0 %1779
    %1781 = vrot.lane.b32.xlu0 %v1771, 127
    %v1782 = vpop.permute.xlu0 %1781
    %1783 = vrot.lane.b32.xlu0 %v1772, 127
    %v1784 = vpop.permute.xlu0 %1783
    %v1789 = vadd.f32 %v1717, %v1778
    %v1790 = vadd.f32 %v1718, %v1780
    %v1791 = vadd.f32 %v1719, %v1782
    %v1792 = vadd.f32 %v1720, %v1784
    %s1793 = sld [smem:[#allocation3 + $0x59]]
    %v1794 = vstv %s1793
    %v1795 = vmul.f32 %v1697, %v1794
    %v1796 = vmul.f32 %v1698, %v1794
    %v1797 = vmul.f32 %v1699, %v1794
    %v1798 = vmul.f32 %v1700, %v1794
    %1803 = vrot.lane.b32.xlu0 %v1795, 127
    %v1804 = vpop.permute.xlu0 %1803
    %1805 = vrot.lane.b32.xlu0 %v1796, 127
    %v1806 = vpop.permute.xlu0 %1805
    %1807 = vrot.lane.b32.xlu0 %v1797, 127
    %v1808 = vpop.permute.xlu0 %1807
    %1809 = vrot.lane.b32.xlu0 %v1798, 127
    %v1810 = vpop.permute.xlu0 %1809
    %v1815 = vadd.f32 %v1727, %v1804
    %v1816 = vadd.f32 %v1728, %v1806
    %v1817 = vadd.f32 %v1729, %v1808
    %v1818 = vadd.f32 %v1730, %v1810
    %s1819 = sld [smem:[#allocation3 + $0x5d]]
    %v1820 = vstv %s1819
    %v1821 = vmul.f32 %v1697, %v1820
    %v1822 = vmul.f32 %v1698, %v1820
    %v1823 = vmul.f32 %v1699, %v1820
    %v1824 = vmul.f32 %v1700, %v1820
    %1829 = vrot.lane.b32.xlu0 %v1821, 127
    %v1830 = vpop.permute.xlu0 %1829
    %1831 = vrot.lane.b32.xlu0 %v1822, 127
    %v1832 = vpop.permute.xlu0 %1831
    %1833 = vrot.lane.b32.xlu0 %v1823, 127
    %v1834 = vpop.permute.xlu0 %1833
    %1835 = vrot.lane.b32.xlu0 %v1824, 127
    %v1836 = vpop.permute.xlu0 %1835
    %v1841 = vadd.f32 %v1737, %v1830
    %v1842 = vadd.f32 %v1738, %v1832
    %v1843 = vadd.f32 %v1739, %v1834
    %v1844 = vadd.f32 %v1740, %v1836
    %v1845 = vld [vmem:[%s124 + $0x1] sm:$0xff]
    %v1846 = vld [vmem:[%s124 + $0x9] sm:$0xff]
    %v1847 = vld [vmem:[%s124 + $0x19] sm:$0xff]
    %v1848 = vld [vmem:[%s124 + $0x21] sm:$0xff]
    %s1849 = sld [smem:[#allocation3 + $0x61]]
    %v1850 = vstv %s1849
    %v1851 = vmul.f32 %v1845, %v1850
    %v1852 = vmul.f32 %v1846, %v1850
    %v1853 = vmul.f32 %v1847, %v1850
    %v1854 = vmul.f32 %v1848, %v1850
    %v1855 = vadd.f32 %v1763, %v1851
    %v1856 = vadd.f32 %v1764, %v1852
    %v1857 = vadd.f32 %v1765, %v1853
    %v1858 = vadd.f32 %v1766, %v1854
    %s1859 = sld [smem:[#allocation3 + $0x65]]
    %v1860 = vstv %s1859
    %v1861 = vmul.f32 %v1845, %v1860
    %v1862 = vmul.f32 %v1846, %v1860
    %v1863 = vmul.f32 %v1847, %v1860
    %v1864 = vmul.f32 %v1848, %v1860
    %v1865 = vadd.f32 %v1789, %v1861
    %v1866 = vadd.f32 %v1790, %v1862
    %v1867 = vadd.f32 %v1791, %v1863
    %v1868 = vadd.f32 %v1792, %v1864
    %s1869 = sld [smem:[#allocation3 + $0x69]]
    %v1870 = vstv %s1869
    %v1871 = vmul.f32 %v1845, %v1870
    %v1872 = vmul.f32 %v1846, %v1870
    %v1873 = vmul.f32 %v1847, %v1870
    %v1874 = vmul.f32 %v1848, %v1870
    %v1875 = vadd.f32 %v1815, %v1871
    %v1876 = vadd.f32 %v1816, %v1872
    %v1877 = vadd.f32 %v1817, %v1873
    %v1878 = vadd.f32 %v1818, %v1874
    %s1879 = sld [smem:[#allocation3 + $0x6d]]
    %v1880 = vstv %s1879
    %v1881 = vmul.f32 %v1845, %v1880
    %v1882 = vmul.f32 %v1846, %v1880
    %v1883 = vmul.f32 %v1847, %v1880
    %v1884 = vmul.f32 %v1848, %v1880
    %v1885 = vadd.f32 %v1841, %v1881
    %v1886 = vadd.f32 %v1842, %v1882
    %v1887 = vadd.f32 %v1843, %v1883
    %v1888 = vadd.f32 %v1844, %v1884
    %s1889 = sld [smem:[#allocation3 + $0x71]]
    %v1890 = vstv %s1889
    %v1891 = vmul.f32 %v1845, %v1890
    %v1892 = vmul.f32 %v1846, %v1890
    %v1893 = vmul.f32 %v1847, %v1890
    %v1894 = vmul.f32 %v1848, %v1890
    %1899 = vrot.lane.b32.xlu0 %v1891, 127
    %v1900 = vpop.permute.xlu0 %1899
    %1901 = vrot.lane.b32.xlu0 %v1892, 127
    %v1902 = vpop.permute.xlu0 %1901
    %1903 = vrot.lane.b32.xlu0 %v1893, 127
    %v1904 = vpop.permute.xlu0 %1903
    %1905 = vrot.lane.b32.xlu0 %v1894, 127
    %v1906 = vpop.permute.xlu0 %1905
    %v1911 = vadd.f32 %v1855, %v1900
    %v1912 = vadd.f32 %v1856, %v1902
    %v1913 = vadd.f32 %v1857, %v1904
    %v1914 = vadd.f32 %v1858, %v1906
    %s1915 = sld [smem:[#allocation3 + $0x75]]
    %v1916 = vstv %s1915
    %v1917 = vmul.f32 %v1845, %v1916
    %v1918 = vmul.f32 %v1846, %v1916
    %v1919 = vmul.f32 %v1847, %v1916
    %v1920 = vmul.f32 %v1848, %v1916
    %1925 = vrot.lane.b32.xlu0 %v1917, 127
    %v1926 = vpop.permute.xlu0 %1925
    %1927 = vrot.lane.b32.xlu0 %v1918, 127
    %v1928 = vpop.permute.xlu0 %1927
    %1929 = vrot.lane.b32.xlu0 %v1919, 127
    %v1930 = vpop.permute.xlu0 %1929
    %1931 = vrot.lane.b32.xlu0 %v1920, 127
    %v1932 = vpop.permute.xlu0 %1931
    %v1937 = vadd.f32 %v1865, %v1926
    %v1938 = vadd.f32 %v1866, %v1928
    %v1939 = vadd.f32 %v1867, %v1930
    %v1940 = vadd.f32 %v1868, %v1932
    %s1941 = sld [smem:[#allocation3 + $0x79]]
    %v1942 = vstv %s1941
    %v1943 = vmul.f32 %v1845, %v1942
    %v1944 = vmul.f32 %v1846, %v1942
    %v1945 = vmul.f32 %v1847, %v1942
    %v1946 = vmul.f32 %v1848, %v1942
    %1951 = vrot.lane.b32.xlu0 %v1943, 127
    %v1952 = vpop.permute.xlu0 %1951
    %1953 = vrot.lane.b32.xlu0 %v1944, 127
    %v1954 = vpop.permute.xlu0 %1953
    %1955 = vrot.lane.b32.xlu0 %v1945, 127
    %v1956 = vpop.permute.xlu0 %1955
    %1957 = vrot.lane.b32.xlu0 %v1946, 127
    %v1958 = vpop.permute.xlu0 %1957
    %v1963 = vadd.f32 %v1875, %v1952
    %v1964 = vadd.f32 %v1876, %v1954
    %v1965 = vadd.f32 %v1877, %v1956
    %v1966 = vadd.f32 %v1878, %v1958
    %s1967 = sld [smem:[#allocation3 + $0x7d]]
    %v1968 = vstv %s1967
    %v1969 = vmul.f32 %v1845, %v1968
    %v1970 = vmul.f32 %v1846, %v1968
    %v1971 = vmul.f32 %v1847, %v1968
    %v1972 = vmul.f32 %v1848, %v1968
    %1977 = vrot.lane.b32.xlu0 %v1969, 127
    %v1978 = vpop.permute.xlu0 %1977
    %1979 = vrot.lane.b32.xlu0 %v1970, 127
    %v1980 = vpop.permute.xlu0 %1979
    %1981 = vrot.lane.b32.xlu0 %v1971, 127
    %v1982 = vpop.permute.xlu0 %1981
    %1983 = vrot.lane.b32.xlu0 %v1972, 127
    %v1984 = vpop.permute.xlu0 %1983
    %v1989 = vadd.f32 %v1885, %v1978
    %v1990 = vadd.f32 %v1886, %v1980
    %v1991 = vadd.f32 %v1887, %v1982
    %v1992 = vadd.f32 %v1888, %v1984
    %v1993 = vld [vmem:[%s150] sm:$0xff]
    %v1994 = vld [vmem:[%s150 + $0x8] sm:$0xff]
    %v1995 = vld [vmem:[%s150 + $0x18] sm:$0xff]
    %v1996 = vld [vmem:[%s150 + $0x20] sm:$0xff]
    %s1997 = sld [smem:[#allocation3 + $0x42]]
    %v1998 = vstv %s1997
    %v1999 = vmul.f32 %v1993, %v1998
    %v2000 = vmul.f32 %v1994, %v1998
    %v2001 = vmul.f32 %v1995, %v1998
    %v2002 = vmul.f32 %v1996, %v1998
    %v2003 = vadd.f32 %v1911, %v1999
    %v2004 = vadd.f32 %v1912, %v2000
    %v2005 = vadd.f32 %v1913, %v2001
    %v2006 = vadd.f32 %v1914, %v2002
    %s2007 = sld [smem:[#allocation3 + $0x46]]
    %v2008 = vstv %s2007
    %v2009 = vmul.f32 %v1993, %v2008
    %v2010 = vmul.f32 %v1994, %v2008
    %v2011 = vmul.f32 %v1995, %v2008
    %v2012 = vmul.f32 %v1996, %v2008
    %v2013 = vadd.f32 %v1937, %v2009
    %v2014 = vadd.f32 %v1938, %v2010
    %v2015 = vadd.f32 %v1939, %v2011
    %v2016 = vadd.f32 %v1940, %v2012
    %s2017 = sld [smem:[#allocation3 + $0x4a]]
    %v2018 = vstv %s2017
    %v2019 = vmul.f32 %v1993, %v2018
    %v2020 = vmul.f32 %v1994, %v2018
    %v2021 = vmul.f32 %v1995, %v2018
    %v2022 = vmul.f32 %v1996, %v2018
    %v2023 = vadd.f32 %v1963, %v2019
    %v2024 = vadd.f32 %v1964, %v2020
    %v2025 = vadd.f32 %v1965, %v2021
    %v2026 = vadd.f32 %v1966, %v2022
    %s2027 = sld [smem:[#allocation3 + $0x4e]]
    %v2028 = vstv %s2027
    %v2029 = vmul.f32 %v1993, %v2028
    %v2030 = vmul.f32 %v1994, %v2028
    %v2031 = vmul.f32 %v1995, %v2028
    %v2032 = vmul.f32 %v1996, %v2028
    %v2033 = vadd.f32 %v1989, %v2029
    %v2034 = vadd.f32 %v1990, %v2030
    %v2035 = vadd.f32 %v1991, %v2031
    %v2036 = vadd.f32 %v1992, %v2032
    %s2037 = sld [smem:[#allocation3 + $0x52]]
    %v2038 = vstv %s2037
    %v2039 = vmul.f32 %v1993, %v2038
    %v2040 = vmul.f32 %v1994, %v2038
    %v2041 = vmul.f32 %v1995, %v2038
    %v2042 = vmul.f32 %v1996, %v2038
    %2047 = vrot.lane.b32.xlu0 %v2039, 127
    %v2048 = vpop.permute.xlu0 %2047
    %2049 = vrot.lane.b32.xlu0 %v2040, 127
    %v2050 = vpop.permute.xlu0 %2049
    %2051 = vrot.lane.b32.xlu0 %v2041, 127
    %v2052 = vpop.permute.xlu0 %2051
    %2053 = vrot.lane.b32.xlu0 %v2042, 127
    %v2054 = vpop.permute.xlu0 %2053
    %v2059 = vadd.f32 %v2003, %v2048
    %v2060 = vadd.f32 %v2004, %v2050
    %v2061 = vadd.f32 %v2005, %v2052
    %v2062 = vadd.f32 %v2006, %v2054
    %s2063 = sld [smem:[#allocation3 + $0x56]]
    %v2064 = vstv %s2063
    %v2065 = vmul.f32 %v1993, %v2064
    %v2066 = vmul.f32 %v1994, %v2064
    %v2067 = vmul.f32 %v1995, %v2064
    %v2068 = vmul.f32 %v1996, %v2064
    %2073 = vrot.lane.b32.xlu0 %v2065, 127
    %v2074 = vpop.permute.xlu0 %2073
    %2075 = vrot.lane.b32.xlu0 %v2066, 127
    %v2076 = vpop.permute.xlu0 %2075
    %2077 = vrot.lane.b32.xlu0 %v2067, 127
    %v2078 = vpop.permute.xlu0 %2077
    %2079 = vrot.lane.b32.xlu0 %v2068, 127
    %v2080 = vpop.permute.xlu0 %2079
    %v2085 = vadd.f32 %v2013, %v2074
    %v2086 = vadd.f32 %v2014, %v2076
    %v2087 = vadd.f32 %v2015, %v2078
    %v2088 = vadd.f32 %v2016, %v2080
    %s2089 = sld [smem:[#allocation3 + $0x5a]]
    %v2090 = vstv %s2089
    %v2091 = vmul.f32 %v1993, %v2090
    %v2092 = vmul.f32 %v1994, %v2090
    %v2093 = vmul.f32 %v1995, %v2090
    %v2094 = vmul.f32 %v1996, %v2090
    %2099 = vrot.lane.b32.xlu0 %v2091, 127
    %v2100 = vpop.permute.xlu0 %2099
    %2101 = vrot.lane.b32.xlu0 %v2092, 127
    %v2102 = vpop.permute.xlu0 %2101
    %2103 = vrot.lane.b32.xlu0 %v2093, 127
    %v2104 = vpop.permute.xlu0 %2103
    %2105 = vrot.lane.b32.xlu0 %v2094, 127
    %v2106 = vpop.permute.xlu0 %2105
    %v2111 = vadd.f32 %v2023, %v2100
    %v2112 = vadd.f32 %v2024, %v2102
    %v2113 = vadd.f32 %v2025, %v2104
    %v2114 = vadd.f32 %v2026, %v2106
    %s2115 = sld [smem:[#allocation3 + $0x5e]]
    %v2116 = vstv %s2115
    %v2117 = vmul.f32 %v1993, %v2116
    %v2118 = vmul.f32 %v1994, %v2116
    %v2119 = vmul.f32 %v1995, %v2116
    %v2120 = vmul.f32 %v1996, %v2116
    %2125 = vrot.lane.b32.xlu0 %v2117, 127
    %v2126 = vpop.permute.xlu0 %2125
    %2127 = vrot.lane.b32.xlu0 %v2118, 127
    %v2128 = vpop.permute.xlu0 %2127
    %2129 = vrot.lane.b32.xlu0 %v2119, 127
    %v2130 = vpop.permute.xlu0 %2129
    %2131 = vrot.lane.b32.xlu0 %v2120, 127
    %v2132 = vpop.permute.xlu0 %2131
    %v2137 = vadd.f32 %v2033, %v2126
    %v2138 = vadd.f32 %v2034, %v2128
    %v2139 = vadd.f32 %v2035, %v2130
    %v2140 = vadd.f32 %v2036, %v2132
    %v2141 = vld [vmem:[%s150 + $0x1] sm:$0xff]
    %v2142 = vld [vmem:[%s150 + $0x9] sm:$0xff]
    %v2143 = vld [vmem:[%s150 + $0x19] sm:$0xff]
    %v2144 = vld [vmem:[%s150 + $0x21] sm:$0xff]
    %s2145 = sld [smem:[#allocation3 + $0x62]]
    %v2146 = vstv %s2145
    %v2147 = vmul.f32 %v2141, %v2146
    %v2148 = vmul.f32 %v2142, %v2146
    %v2149 = vmul.f32 %v2143, %v2146
    %v2150 = vmul.f32 %v2144, %v2146
    %v2151 = vadd.f32 %v2059, %v2147
    %v2152 = vadd.f32 %v2060, %v2148
    %v2153 = vadd.f32 %v2061, %v2149
    %v2154 = vadd.f32 %v2062, %v2150
    %s2155 = sld [smem:[#allocation3 + $0x66]]
    %v2156 = vstv %s2155
    %v2157 = vmul.f32 %v2141, %v2156
    %v2158 = vmul.f32 %v2142, %v2156
    %v2159 = vmul.f32 %v2143, %v2156
    %v2160 = vmul.f32 %v2144, %v2156
    %v2161 = vadd.f32 %v2085, %v2157
    %v2162 = vadd.f32 %v2086, %v2158
    %v2163 = vadd.f32 %v2087, %v2159
    %v2164 = vadd.f32 %v2088, %v2160
    %s2165 = sld [smem:[#allocation3 + $0x6a]]
    %v2166 = vstv %s2165
    %v2167 = vmul.f32 %v2141, %v2166
    %v2168 = vmul.f32 %v2142, %v2166
    %v2169 = vmul.f32 %v2143, %v2166
    %v2170 = vmul.f32 %v2144, %v2166
    %v2171 = vadd.f32 %v2111, %v2167
    %v2172 = vadd.f32 %v2112, %v2168
    %v2173 = vadd.f32 %v2113, %v2169
    %v2174 = vadd.f32 %v2114, %v2170
    %s2175 = sld [smem:[#allocation3 + $0x6e]]
    %v2176 = vstv %s2175
    %v2177 = vmul.f32 %v2141, %v2176
    %v2178 = vmul.f32 %v2142, %v2176
    %v2179 = vmul.f32 %v2143, %v2176
    %v2180 = vmul.f32 %v2144, %v2176
    %v2181 = vadd.f32 %v2137, %v2177
    %v2182 = vadd.f32 %v2138, %v2178
    %v2183 = vadd.f32 %v2139, %v2179
    %v2184 = vadd.f32 %v2140, %v2180
    %s2185 = sld [smem:[#allocation3 + $0x72]]
    %v2186 = vstv %s2185
    %v2187 = vmul.f32 %v2141, %v2186
    %v2188 = vmul.f32 %v2142, %v2186
    %v2189 = vmul.f32 %v2143, %v2186
    %v2190 = vmul.f32 %v2144, %v2186
    %2195 = vrot.lane.b32.xlu0 %v2187, 127
    %v2196 = vpop.permute.xlu0 %2195
    %2197 = vrot.lane.b32.xlu0 %v2188, 127
    %v2198 = vpop.permute.xlu0 %2197
    %2199 = vrot.lane.b32.xlu0 %v2189, 127
    %v2200 = vpop.permute.xlu0 %2199
    %2201 = vrot.lane.b32.xlu0 %v2190, 127
    %v2202 = vpop.permute.xlu0 %2201
    %v2207 = vadd.f32 %v2151, %v2196
    %v2208 = vadd.f32 %v2152, %v2198
    %v2209 = vadd.f32 %v2153, %v2200
    %v2210 = vadd.f32 %v2154, %v2202
    %s2211 = sld [smem:[#allocation3 + $0x76]]
    %v2212 = vstv %s2211
    %v2213 = vmul.f32 %v2141, %v2212
    %v2214 = vmul.f32 %v2142, %v2212
    %v2215 = vmul.f32 %v2143, %v2212
    %v2216 = vmul.f32 %v2144, %v2212
    %2221 = vrot.lane.b32.xlu0 %v2213, 127
    %v2222 = vpop.permute.xlu0 %2221
    %2223 = vrot.lane.b32.xlu0 %v2214, 127
    %v2224 = vpop.permute.xlu0 %2223
    %2225 = vrot.lane.b32.xlu0 %v2215, 127
    %v2226 = vpop.permute.xlu0 %2225
    %2227 = vrot.lane.b32.xlu0 %v2216, 127
    %v2228 = vpop.permute.xlu0 %2227
    %v2233 = vadd.f32 %v2161, %v2222
    %v2234 = vadd.f32 %v2162, %v2224
    %v2235 = vadd.f32 %v2163, %v2226
    %v2236 = vadd.f32 %v2164, %v2228
    %s2237 = sld [smem:[#allocation3 + $0x7a]]
    %v2238 = vstv %s2237
    %v2239 = vmul.f32 %v2141, %v2238
    %v2240 = vmul.f32 %v2142, %v2238
    %v2241 = vmul.f32 %v2143, %v2238
    %v2242 = vmul.f32 %v2144, %v2238
    %2247 = vrot.lane.b32.xlu0 %v2239, 127
    %v2248 = vpop.permute.xlu0 %2247
    %2249 = vrot.lane.b32.xlu0 %v2240, 127
    %v2250 = vpop.permute.xlu0 %2249
    %2251 = vrot.lane.b32.xlu0 %v2241, 127
    %v2252 = vpop.permute.xlu0 %2251
    %2253 = vrot.lane.b32.xlu0 %v2242, 127
    %v2254 = vpop.permute.xlu0 %2253
    %v2259 = vadd.f32 %v2171, %v2248
    %v2260 = vadd.f32 %v2172, %v2250
    %v2261 = vadd.f32 %v2173, %v2252
    %v2262 = vadd.f32 %v2174, %v2254
    %s2263 = sld [smem:[#allocation3 + $0x7e]]
    %v2264 = vstv %s2263
    %v2265 = vmul.f32 %v2141, %v2264
    %v2266 = vmul.f32 %v2142, %v2264
    %v2267 = vmul.f32 %v2143, %v2264
    %v2268 = vmul.f32 %v2144, %v2264
    %2273 = vrot.lane.b32.xlu0 %v2265, 127
    %v2274 = vpop.permute.xlu0 %2273
    %2275 = vrot.lane.b32.xlu0 %v2266, 127
    %v2276 = vpop.permute.xlu0 %2275
    %2277 = vrot.lane.b32.xlu0 %v2267, 127
    %v2278 = vpop.permute.xlu0 %2277
    %2279 = vrot.lane.b32.xlu0 %v2268, 127
    %v2280 = vpop.permute.xlu0 %2279
    %v2285 = vadd.f32 %v2181, %v2274
    %v2286 = vadd.f32 %v2182, %v2276
    %v2287 = vadd.f32 %v2183, %v2278
    %v2288 = vadd.f32 %v2184, %v2280
    %v2289 = vld [vmem:[%s176] sm:$0xff]
    %v2290 = vld [vmem:[%s176 + $0x8] sm:$0xff]
    %v2291 = vld [vmem:[%s176 + $0x18] sm:$0xff]
    %v2292 = vld [vmem:[%s176 + $0x20] sm:$0xff]
    %s2293 = sld [smem:[#allocation3 + $0x43]]
    %v2294 = vstv %s2293
    %v2295 = vmul.f32 %v2289, %v2294
    %v2296 = vmul.f32 %v2290, %v2294
    %v2297 = vmul.f32 %v2291, %v2294
    %v2298 = vmul.f32 %v2292, %v2294
    %v2299 = vadd.f32 %v2207, %v2295
    %v2300 = vadd.f32 %v2208, %v2296
    %v2301 = vadd.f32 %v2209, %v2297
    %v2302 = vadd.f32 %v2210, %v2298
    %s2303 = sld [smem:[#allocation3 + $0x47]]
    %v2304 = vstv %s2303
    %v2305 = vmul.f32 %v2289, %v2304
    %v2306 = vmul.f32 %v2290, %v2304
    %v2307 = vmul.f32 %v2291, %v2304
    %v2308 = vmul.f32 %v2292, %v2304
    %v2309 = vadd.f32 %v2233, %v2305
    %v2310 = vadd.f32 %v2234, %v2306
    %v2311 = vadd.f32 %v2235, %v2307
    %v2312 = vadd.f32 %v2236, %v2308
    %s2313 = sld [smem:[#allocation3 + $0x4b]]
    %v2314 = vstv %s2313
    %v2315 = vmul.f32 %v2289, %v2314
    %v2316 = vmul.f32 %v2290, %v2314
    %v2317 = vmul.f32 %v2291, %v2314
    %v2318 = vmul.f32 %v2292, %v2314
    %v2319 = vadd.f32 %v2259, %v2315
    %v2320 = vadd.f32 %v2260, %v2316
    %v2321 = vadd.f32 %v2261, %v2317
    %v2322 = vadd.f32 %v2262, %v2318
    %s2323 = sld [smem:[#allocation3 + $0x4f]]
    %v2324 = vstv %s2323
    %v2325 = vmul.f32 %v2289, %v2324
    %v2326 = vmul.f32 %v2290, %v2324
    %v2327 = vmul.f32 %v2291, %v2324
    %v2328 = vmul.f32 %v2292, %v2324
    %v2329 = vadd.f32 %v2285, %v2325
    %v2330 = vadd.f32 %v2286, %v2326
    %v2331 = vadd.f32 %v2287, %v2327
    %v2332 = vadd.f32 %v2288, %v2328
    %s2333 = sld [smem:[#allocation3 + $0x53]]
    %v2334 = vstv %s2333
    %v2335 = vmul.f32 %v2289, %v2334
    %v2336 = vmul.f32 %v2290, %v2334
    %v2337 = vmul.f32 %v2291, %v2334
    %v2338 = vmul.f32 %v2292, %v2334
    %2343 = vrot.lane.b32.xlu0 %v2335, 127
    %v2344 = vpop.permute.xlu0 %2343
    %2345 = vrot.lane.b32.xlu0 %v2336, 127
    %v2346 = vpop.permute.xlu0 %2345
    %2347 = vrot.lane.b32.xlu0 %v2337, 127
    %v2348 = vpop.permute.xlu0 %2347
    %2349 = vrot.lane.b32.xlu0 %v2338, 127
    %v2350 = vpop.permute.xlu0 %2349
    %v2355 = vadd.f32 %v2299, %v2344
    %v2356 = vadd.f32 %v2300, %v2346
    %v2357 = vadd.f32 %v2301, %v2348
    %v2358 = vadd.f32 %v2302, %v2350
    %s2359 = sld [smem:[#allocation3 + $0x57]]
    %v2360 = vstv %s2359
    %v2361 = vmul.f32 %v2289, %v2360
    %v2362 = vmul.f32 %v2290, %v2360
    %v2363 = vmul.f32 %v2291, %v2360
    %v2364 = vmul.f32 %v2292, %v2360
    %2369 = vrot.lane.b32.xlu0 %v2361, 127
    %v2370 = vpop.permute.xlu0 %2369
    %2371 = vrot.lane.b32.xlu0 %v2362, 127
    %v2372 = vpop.permute.xlu0 %2371
    %2373 = vrot.lane.b32.xlu0 %v2363, 127
    %v2374 = vpop.permute.xlu0 %2373
    %2375 = vrot.lane.b32.xlu0 %v2364, 127
    %v2376 = vpop.permute.xlu0 %2375
    %v2381 = vadd.f32 %v2309, %v2370
    %v2382 = vadd.f32 %v2310, %v2372
    %v2383 = vadd.f32 %v2311, %v2374
    %v2384 = vadd.f32 %v2312, %v2376
    %s2385 = sld [smem:[#allocation3 + $0x5b]]
    %v2386 = vstv %s2385
    %v2387 = vmul.f32 %v2289, %v2386
    %v2388 = vmul.f32 %v2290, %v2386
    %v2389 = vmul.f32 %v2291, %v2386
    %v2390 = vmul.f32 %v2292, %v2386
    %2395 = vrot.lane.b32.xlu0 %v2387, 127
    %v2396 = vpop.permute.xlu0 %2395
    %2397 = vrot.lane.b32.xlu0 %v2388, 127
    %v2398 = vpop.permute.xlu0 %2397
    %2399 = vrot.lane.b32.xlu0 %v2389, 127
    %v2400 = vpop.permute.xlu0 %2399
    %2401 = vrot.lane.b32.xlu0 %v2390, 127
    %v2402 = vpop.permute.xlu0 %2401
    %v2407 = vadd.f32 %v2319, %v2396
    %v2408 = vadd.f32 %v2320, %v2398
    %v2409 = vadd.f32 %v2321, %v2400
    %v2410 = vadd.f32 %v2322, %v2402
    %s2411 = sld [smem:[#allocation3 + $0x5f]]
    %v2412 = vstv %s2411
    %v2413 = vmul.f32 %v2289, %v2412
    %v2414 = vmul.f32 %v2290, %v2412
    %v2415 = vmul.f32 %v2291, %v2412
    %v2416 = vmul.f32 %v2292, %v2412
    %2421 = vrot.lane.b32.xlu0 %v2413, 127
    %v2422 = vpop.permute.xlu0 %2421
    %2423 = vrot.lane.b32.xlu0 %v2414, 127
    %v2424 = vpop.permute.xlu0 %2423
    %2425 = vrot.lane.b32.xlu0 %v2415, 127
    %v2426 = vpop.permute.xlu0 %2425
    %2427 = vrot.lane.b32.xlu0 %v2416, 127
    %v2428 = vpop.permute.xlu0 %2427
    %v2433 = vadd.f32 %v2329, %v2422
    %v2434 = vadd.f32 %v2330, %v2424
    %v2435 = vadd.f32 %v2331, %v2426
    %v2436 = vadd.f32 %v2332, %v2428
    %v2437 = vld [vmem:[%s176 + $0x1] sm:$0xff]
    %v2438 = vld [vmem:[%s176 + $0x9] sm:$0xff]
    %v2439 = vld [vmem:[%s176 + $0x19] sm:$0xff]
    %v2440 = vld [vmem:[%s176 + $0x21] sm:$0xff]
    %s2441 = sld [smem:[#allocation3 + $0x63]]
    %v2442 = vstv %s2441
    %v2443 = vmul.f32 %v2437, %v2442
    %v2444 = vmul.f32 %v2438, %v2442
    %v2445 = vmul.f32 %v2439, %v2442
    %v2446 = vmul.f32 %v2440, %v2442
    %v2447 = vadd.f32 %v2355, %v2443
    %v2448 = vadd.f32 %v2356, %v2444
    %v2449 = vadd.f32 %v2357, %v2445
    %v2450 = vadd.f32 %v2358, %v2446
    %s2451 = sld [smem:[#allocation3 + $0x67]]
    %v2452 = vstv %s2451
    %v2453 = vmul.f32 %v2437, %v2452
    %v2454 = vmul.f32 %v2438, %v2452
    %v2455 = vmul.f32 %v2439, %v2452
    %v2456 = vmul.f32 %v2440, %v2452
    %v2457 = vadd.f32 %v2381, %v2453
    %v2458 = vadd.f32 %v2382, %v2454
    %v2459 = vadd.f32 %v2383, %v2455
    %v2460 = vadd.f32 %v2384, %v2456
    %s2461 = sld [smem:[#allocation3 + $0x6b]]
    %v2462 = vstv %s2461
    %v2463 = vmul.f32 %v2437, %v2462
    %v2464 = vmul.f32 %v2438, %v2462
    %v2465 = vmul.f32 %v2439, %v2462
    %v2466 = vmul.f32 %v2440, %v2462
    %v2467 = vadd.f32 %v2407, %v2463
    %v2468 = vadd.f32 %v2408, %v2464
    %v2469 = vadd.f32 %v2409, %v2465
    %v2470 = vadd.f32 %v2410, %v2466
    %s2471 = sld [smem:[#allocation3 + $0x6f]]
    %v2472 = vstv %s2471
    %v2473 = vmul.f32 %v2437, %v2472
    %v2474 = vmul.f32 %v2438, %v2472
    %v2475 = vmul.f32 %v2439, %v2472
    %v2476 = vmul.f32 %v2440, %v2472
    %v2477 = vadd.f32 %v2433, %v2473
    %v2478 = vadd.f32 %v2434, %v2474
    %v2479 = vadd.f32 %v2435, %v2475
    %v2480 = vadd.f32 %v2436, %v2476
    %s2481 = sld [smem:[#allocation3 + $0x73]]
    %v2482 = vstv %s2481
    %v2483 = vmul.f32 %v2437, %v2482
    %v2484 = vmul.f32 %v2438, %v2482
    %v2485 = vmul.f32 %v2439, %v2482
    %v2486 = vmul.f32 %v2440, %v2482
    %2491 = vrot.lane.b32.xlu0 %v2483, 127
    %v2492 = vpop.permute.xlu0 %2491
    %2493 = vrot.lane.b32.xlu0 %v2484, 127
    %v2494 = vpop.permute.xlu0 %2493
    %2495 = vrot.lane.b32.xlu0 %v2485, 127
    %v2496 = vpop.permute.xlu0 %2495
    %2497 = vrot.lane.b32.xlu0 %v2486, 127
    %v2498 = vpop.permute.xlu0 %2497
    %v2503 = vadd.f32 %v2447, %v2492
    %v2504 = vadd.f32 %v2448, %v2494
    %v2505 = vadd.f32 %v2449, %v2496
    %v2506 = vadd.f32 %v2450, %v2498
    %s2507 = sld [smem:[#allocation3 + $0x77]]
    %v2508 = vstv %s2507
    %v2509 = vmul.f32 %v2437, %v2508
    %v2510 = vmul.f32 %v2438, %v2508
    %v2511 = vmul.f32 %v2439, %v2508
    %v2512 = vmul.f32 %v2440, %v2508
    %2517 = vrot.lane.b32.xlu0 %v2509, 127
    %v2518 = vpop.permute.xlu0 %2517
    %2519 = vrot.lane.b32.xlu0 %v2510, 127
    %v2520 = vpop.permute.xlu0 %2519
    %2521 = vrot.lane.b32.xlu0 %v2511, 127
    %v2522 = vpop.permute.xlu0 %2521
    %2523 = vrot.lane.b32.xlu0 %v2512, 127
    %v2524 = vpop.permute.xlu0 %2523
    %v2529 = vadd.f32 %v2457, %v2518
    %v2530 = vadd.f32 %v2458, %v2520
    %v2531 = vadd.f32 %v2459, %v2522
    %v2532 = vadd.f32 %v2460, %v2524
    %s2533 = sld [smem:[#allocation3 + $0x7b]]
    %v2534 = vstv %s2533
    %v2535 = vmul.f32 %v2437, %v2534
    %v2536 = vmul.f32 %v2438, %v2534
    %v2537 = vmul.f32 %v2439, %v2534
    %v2538 = vmul.f32 %v2440, %v2534
    %2543 = vrot.lane.b32.xlu0 %v2535, 127
    %v2544 = vpop.permute.xlu0 %2543
    %2545 = vrot.lane.b32.xlu0 %v2536, 127
    %v2546 = vpop.permute.xlu0 %2545
    %2547 = vrot.lane.b32.xlu0 %v2537, 127
    %v2548 = vpop.permute.xlu0 %2547
    %2549 = vrot.lane.b32.xlu0 %v2538, 127
    %v2550 = vpop.permute.xlu0 %2549
    %v2555 = vadd.f32 %v2467, %v2544
    %v2556 = vadd.f32 %v2468, %v2546
    %v2557 = vadd.f32 %v2469, %v2548
    %v2558 = vadd.f32 %v2470, %v2550
    %s2559 = sld [smem:[#allocation3 + $0x7f]]
    %v2560 = vstv %s2559
    %v2561 = vmul.f32 %v2437, %v2560
    %v2562 = vmul.f32 %v2438, %v2560
    %v2563 = vmul.f32 %v2439, %v2560
    %v2564 = vmul.f32 %v2440, %v2560
    %2569 = vrot.lane.b32.xlu0 %v2561, 127
    %v2570 = vpop.permute.xlu0 %2569
    %2571 = vrot.lane.b32.xlu0 %v2562, 127
    %v2572 = vpop.permute.xlu0 %2571
    %2573 = vrot.lane.b32.xlu0 %v2563, 127
    %v2574 = vpop.permute.xlu0 %2573
    %2575 = vrot.lane.b32.xlu0 %v2564, 127
    %v2576 = vpop.permute.xlu0 %2575
    %v2581 = vadd.f32 %v2477, %v2570
    %v2582 = vadd.f32 %v2478, %v2572
    %v2583 = vadd.f32 %v2479, %v2574
    %v2584 = vadd.f32 %v2480, %v2576
    %2589 = vrot.lane.b32.xlu0 %v2503, 127
    %v2590 = vpop.permute.xlu0 %2589
    %2591 = vrot.lane.b32.xlu0 %v2504, 127
    %v2592 = vpop.permute.xlu0 %2591
    %2593 = vrot.lane.b32.xlu0 %v2505, 127
    %v2594 = vpop.permute.xlu0 %2593
    %2595 = vrot.lane.b32.xlu0 %v2506, 127
    %v2596 = vpop.permute.xlu0 %2595
    %s2601 = scalar_lea.vmem [#allocation10], 32
    %2602 = vst.msk [vmem:[%s2601] sm:$0xff] %vm1373, %v2590
    %2603 = vst.msk [vmem:[%s2601 + $0x8] sm:$0xff] %vm1373, %v2592
    %2604 = vst.msk [vmem:[%s2601 + $0x10] sm:$0xff] %vm1373, %v2594
    %2605 = vst.msk [vmem:[%s2601 + $0x18] sm:$0xff] %vm1373, %v2596
    %2610 = vrot.lane.b32.xlu0 %v2529, 127
    %v2611 = vpop.permute.xlu0 %2610
    %2612 = vrot.lane.b32.xlu0 %v2530, 127
    %v2613 = vpop.permute.xlu0 %2612
    %2614 = vrot.lane.b32.xlu0 %v2531, 127
    %v2615 = vpop.permute.xlu0 %2614
    %2616 = vrot.lane.b32.xlu0 %v2532, 127
    %v2617 = vpop.permute.xlu0 %2616
    %s2622 = scalar_lea.vmem [#allocation10], 160
    %2623 = vst.msk [vmem:[%s2622] sm:$0xff] %vm1373, %v2611
    %2624 = vst.msk [vmem:[%s2622 + $0x8] sm:$0xff] %vm1373, %v2613
    %2625 = vst.msk [vmem:[%s2622 + $0x10] sm:$0xff] %vm1373, %v2615
    %2626 = vst.msk [vmem:[%s2622 + $0x18] sm:$0xff] %vm1373, %v2617
    %2631 = vrot.lane.b32.xlu0 %v2555, 127
    %v2632 = vpop.permute.xlu0 %2631
    %2633 = vrot.lane.b32.xlu0 %v2556, 127
    %v2634 = vpop.permute.xlu0 %2633
    %2635 = vrot.lane.b32.xlu0 %v2557, 127
    %v2636 = vpop.permute.xlu0 %2635
    %2637 = vrot.lane.b32.xlu0 %v2558, 127
    %v2638 = vpop.permute.xlu0 %2637
    %s2643 = scalar_lea.vmem [#allocation10], 288
    %2644 = vst.msk [vmem:[%s2643] sm:$0xff] %vm1373, %v2632
    %2645 = vst.msk [vmem:[%s2643 + $0x8] sm:$0xff] %vm1373, %v2634
    %2646 = vst.msk [vmem:[%s2643 + $0x10] sm:$0xff] %vm1373, %v2636
    %2647 = vst.msk [vmem:[%s2643 + $0x18] sm:$0xff] %vm1373, %v2638
    %2652 = vrot.lane.b32.xlu0 %v2581, 127
    %v2653 = vpop.permute.xlu0 %2652
    %2654 = vrot.lane.b32.xlu0 %v2582, 127
    %v2655 = vpop.permute.xlu0 %2654
    %2656 = vrot.lane.b32.xlu0 %v2583, 127
    %v2657 = vpop.permute.xlu0 %2656
    %2658 = vrot.lane.b32.xlu0 %v2584, 127
    %v2659 = vpop.permute.xlu0 %2658
    %s2664 = scalar_lea.vmem [#allocation10], 416
    %2665 = vst.msk [vmem:[%s2664] sm:$0xff] %vm1373, %v2653
    %2666 = vst.msk [vmem:[%s2664 + $0x8] sm:$0xff] %vm1373, %v2655
    %2667 = vst.msk [vmem:[%s2664 + $0x10] sm:$0xff] %vm1373, %v2657
    %2668 = vst.msk [vmem:[%s2664 + $0x18] sm:$0xff] %vm1373, %v2659
    %s2669 = sld [smem:[#allocation8]]
    %v2670 = vstv %s2669
    %s2671 = sld [smem:[#allocation8 + $0x1]]
    %v2672 = vstv %s2671
    %s2673 = sld [smem:[#allocation8 + $0x2]]
    %v2674 = vstv %s2673
    %s2675 = sld [smem:[#allocation8 + $0x3]]
    %v2676 = vstv %s2675
    %v2677 = vld [vmem:[#allocation2 + $0x1] sm:$0xff]
    %v2678 = vld [vmem:[#allocation2 + $0x9] sm:$0xff]
    %v2679 = vld [vmem:[#allocation2 + $0x19] sm:$0xff]
    %v2680 = vld [vmem:[#allocation2 + $0x21] sm:$0xff]
    %s2681 = sld [smem:[#allocation3 + $0x80]]
    %v2682 = vstv %s2681
    %v2683 = vmul.f32 %v2677, %v2682
    %v2684 = vmul.f32 %v2678, %v2682
    %v2685 = vmul.f32 %v2679, %v2682
    %v2686 = vmul.f32 %v2680, %v2682
    %v2687 = vadd.f32 %v2670, %v2683
    %v2688 = vadd.f32 %v2670, %v2684
    %v2689 = vadd.f32 %v2670, %v2685
    %v2690 = vadd.f32 %v2670, %v2686
    %s2691 = sld [smem:[#allocation3 + $0x84]]
    %v2692 = vstv %s2691
    %v2693 = vmul.f32 %v2677, %v2692
    %v2694 = vmul.f32 %v2678, %v2692
    %v2695 = vmul.f32 %v2679, %v2692
    %v2696 = vmul.f32 %v2680, %v2692
    %v2697 = vadd.f32 %v2672, %v2693
    %v2698 = vadd.f32 %v2672, %v2694
    %v2699 = vadd.f32 %v2672, %v2695
    %v2700 = vadd.f32 %v2672, %v2696
    %s2701 = sld [smem:[#allocation3 + $0x88]]
    %v2702 = vstv %s2701
    %v2703 = vmul.f32 %v2677, %v2702
    %v2704 = vmul.f32 %v2678, %v2702
    %v2705 = vmul.f32 %v2679, %v2702
    %v2706 = vmul.f32 %v2680, %v2702
    %v2707 = vadd.f32 %v2674, %v2703
    %v2708 = vadd.f32 %v2674, %v2704
    %v2709 = vadd.f32 %v2674, %v2705
    %v2710 = vadd.f32 %v2674, %v2706
    %s2711 = sld [smem:[#allocation3 + $0x8c]]
    %v2712 = vstv %s2711
    %v2713 = vmul.f32 %v2677, %v2712
    %v2714 = vmul.f32 %v2678, %v2712
    %v2715 = vmul.f32 %v2679, %v2712
    %v2716 = vmul.f32 %v2680, %v2712
    %v2717 = vadd.f32 %v2676, %v2713
    %v2718 = vadd.f32 %v2676, %v2714
    %v2719 = vadd.f32 %v2676, %v2715
    %v2720 = vadd.f32 %v2676, %v2716
    %s2721 = sld [smem:[#allocation3 + $0x90]]
    %v2722 = vstv %s2721
    %v2723 = vmul.f32 %v2677, %v2722
    %v2724 = vmul.f32 %v2678, %v2722
    %v2725 = vmul.f32 %v2679, %v2722
    %v2726 = vmul.f32 %v2680, %v2722
    %2731 = vrot.lane.b32.xlu0 %v2723, 127
    %v2732 = vpop.permute.xlu0 %2731
    %2733 = vrot.lane.b32.xlu0 %v2724, 127
    %v2734 = vpop.permute.xlu0 %2733
    %2735 = vrot.lane.b32.xlu0 %v2725, 127
    %v2736 = vpop.permute.xlu0 %2735
    %2737 = vrot.lane.b32.xlu0 %v2726, 127
    %v2738 = vpop.permute.xlu0 %2737
    %v2743 = vadd.f32 %v2687, %v2732
    %v2744 = vadd.f32 %v2688, %v2734
    %v2745 = vadd.f32 %v2689, %v2736
    %v2746 = vadd.f32 %v2690, %v2738
    %s2747 = sld [smem:[#allocation3 + $0x94]]
    %v2748 = vstv %s2747
    %v2749 = vmul.f32 %v2677, %v2748
    %v2750 = vmul.f32 %v2678, %v2748
    %v2751 = vmul.f32 %v2679, %v2748
    %v2752 = vmul.f32 %v2680, %v2748
    %2757 = vrot.lane.b32.xlu0 %v2749, 127
    %v2758 = vpop.permute.xlu0 %2757
    %2759 = vrot.lane.b32.xlu0 %v2750, 127
    %v2760 = vpop.permute.xlu0 %2759
    %2761 = vrot.lane.b32.xlu0 %v2751, 127
    %v2762 = vpop.permute.xlu0 %2761
    %2763 = vrot.lane.b32.xlu0 %v2752, 127
    %v2764 = vpop.permute.xlu0 %2763
    %v2769 = vadd.f32 %v2697, %v2758
    %v2770 = vadd.f32 %v2698, %v2760
    %v2771 = vadd.f32 %v2699, %v2762
    %v2772 = vadd.f32 %v2700, %v2764
    %s2773 = sld [smem:[#allocation3 + $0x98]]
    %v2774 = vstv %s2773
    %v2775 = vmul.f32 %v2677, %v2774
    %v2776 = vmul.f32 %v2678, %v2774
    %v2777 = vmul.f32 %v2679, %v2774
    %v2778 = vmul.f32 %v2680, %v2774
    %2783 = vrot.lane.b32.xlu0 %v2775, 127
    %v2784 = vpop.permute.xlu0 %2783
    %2785 = vrot.lane.b32.xlu0 %v2776, 127
    %v2786 = vpop.permute.xlu0 %2785
    %2787 = vrot.lane.b32.xlu0 %v2777, 127
    %v2788 = vpop.permute.xlu0 %2787
    %2789 = vrot.lane.b32.xlu0 %v2778, 127
    %v2790 = vpop.permute.xlu0 %2789
    %v2795 = vadd.f32 %v2707, %v2784
    %v2796 = vadd.f32 %v2708, %v2786
    %v2797 = vadd.f32 %v2709, %v2788
    %v2798 = vadd.f32 %v2710, %v2790
    %s2799 = sld [smem:[#allocation3 + $0x9c]]
    %v2800 = vstv %s2799
    %v2801 = vmul.f32 %v2677, %v2800
    %v2802 = vmul.f32 %v2678, %v2800
    %v2803 = vmul.f32 %v2679, %v2800
    %v2804 = vmul.f32 %v2680, %v2800
    %2809 = vrot.lane.b32.xlu0 %v2801, 127
    %v2810 = vpop.permute.xlu0 %2809
    %2811 = vrot.lane.b32.xlu0 %v2802, 127
    %v2812 = vpop.permute.xlu0 %2811
    %2813 = vrot.lane.b32.xlu0 %v2803, 127
    %v2814 = vpop.permute.xlu0 %2813
    %2815 = vrot.lane.b32.xlu0 %v2804, 127
    %v2816 = vpop.permute.xlu0 %2815
    %v2821 = vadd.f32 %v2717, %v2810
    %v2822 = vadd.f32 %v2718, %v2812
    %v2823 = vadd.f32 %v2719, %v2814
    %v2824 = vadd.f32 %v2720, %v2816
    %v2825 = vld [vmem:[#allocation2 + $0x2] sm:$0xff]
    %v2826 = vld [vmem:[#allocation2 + $0xa] sm:$0xff]
    %v2827 = vld [vmem:[#allocation2 + $0x1a] sm:$0xff]
    %v2828 = vld [vmem:[#allocation2 + $0x22] sm:$0xff]
    %s2829 = sld [smem:[#allocation3 + $0xa0]]
    %v2830 = vstv %s2829
    %v2831 = vmul.f32 %v2825, %v2830
    %v2832 = vmul.f32 %v2826, %v2830
    %v2833 = vmul.f32 %v2827, %v2830
    %v2834 = vmul.f32 %v2828, %v2830
    %v2835 = vadd.f32 %v2743, %v2831
    %v2836 = vadd.f32 %v2744, %v2832
    %v2837 = vadd.f32 %v2745, %v2833
    %v2838 = vadd.f32 %v2746, %v2834
    %s2839 = sld [smem:[#allocation3 + $0xa4]]
    %v2840 = vstv %s2839
    %v2841 = vmul.f32 %v2825, %v2840
    %v2842 = vmul.f32 %v2826, %v2840
    %v2843 = vmul.f32 %v2827, %v2840
    %v2844 = vmul.f32 %v2828, %v2840
    %v2845 = vadd.f32 %v2769, %v2841
    %v2846 = vadd.f32 %v2770, %v2842
    %v2847 = vadd.f32 %v2771, %v2843
    %v2848 = vadd.f32 %v2772, %v2844
    %s2849 = sld [smem:[#allocation3 + $0xa8]]
    %v2850 = vstv %s2849
    %v2851 = vmul.f32 %v2825, %v2850
    %v2852 = vmul.f32 %v2826, %v2850
    %v2853 = vmul.f32 %v2827, %v2850
    %v2854 = vmul.f32 %v2828, %v2850
    %v2855 = vadd.f32 %v2795, %v2851
    %v2856 = vadd.f32 %v2796, %v2852
    %v2857 = vadd.f32 %v2797, %v2853
    %v2858 = vadd.f32 %v2798, %v2854
    %s2859 = sld [smem:[#allocation3 + $0xac]]
    %v2860 = vstv %s2859
    %v2861 = vmul.f32 %v2825, %v2860
    %v2862 = vmul.f32 %v2826, %v2860
    %v2863 = vmul.f32 %v2827, %v2860
    %v2864 = vmul.f32 %v2828, %v2860
    %v2865 = vadd.f32 %v2821, %v2861
    %v2866 = vadd.f32 %v2822, %v2862
    %v2867 = vadd.f32 %v2823, %v2863
    %v2868 = vadd.f32 %v2824, %v2864
    %s2869 = sld [smem:[#allocation3 + $0xb0]]
    %v2870 = vstv %s2869
    %v2871 = vmul.f32 %v2825, %v2870
    %v2872 = vmul.f32 %v2826, %v2870
    %v2873 = vmul.f32 %v2827, %v2870
    %v2874 = vmul.f32 %v2828, %v2870
    %2879 = vrot.lane.b32.xlu0 %v2871, 127
    %v2880 = vpop.permute.xlu0 %2879
    %2881 = vrot.lane.b32.xlu0 %v2872, 127
    %v2882 = vpop.permute.xlu0 %2881
    %2883 = vrot.lane.b32.xlu0 %v2873, 127
    %v2884 = vpop.permute.xlu0 %2883
    %2885 = vrot.lane.b32.xlu0 %v2874, 127
    %v2886 = vpop.permute.xlu0 %2885
    %v2891 = vadd.f32 %v2835, %v2880
    %v2892 = vadd.f32 %v2836, %v2882
    %v2893 = vadd.f32 %v2837, %v2884
    %v2894 = vadd.f32 %v2838, %v2886
    %s2895 = sld [smem:[#allocation3 + $0xb4]]
    %v2896 = vstv %s2895
    %v2897 = vmul.f32 %v2825, %v2896
    %v2898 = vmul.f32 %v2826, %v2896
    %v2899 = vmul.f32 %v2827, %v2896
    %v2900 = vmul.f32 %v2828, %v2896
    %2905 = vrot.lane.b32.xlu0 %v2897, 127
    %v2906 = vpop.permute.xlu0 %2905
    %2907 = vrot.lane.b32.xlu0 %v2898, 127
    %v2908 = vpop.permute.xlu0 %2907
    %2909 = vrot.lane.b32.xlu0 %v2899, 127
    %v2910 = vpop.permute.xlu0 %2909
    %2911 = vrot.lane.b32.xlu0 %v2900, 127
    %v2912 = vpop.permute.xlu0 %2911
    %v2917 = vadd.f32 %v2845, %v2906
    %v2918 = vadd.f32 %v2846, %v2908
    %v2919 = vadd.f32 %v2847, %v2910
    %v2920 = vadd.f32 %v2848, %v2912
    %s2921 = sld [smem:[#allocation3 + $0xb8]]
    %v2922 = vstv %s2921
    %v2923 = vmul.f32 %v2825, %v2922
    %v2924 = vmul.f32 %v2826, %v2922
    %v2925 = vmul.f32 %v2827, %v2922
    %v2926 = vmul.f32 %v2828, %v2922
    %2931 = vrot.lane.b32.xlu0 %v2923, 127
    %v2932 = vpop.permute.xlu0 %2931
    %2933 = vrot.lane.b32.xlu0 %v2924, 127
    %v2934 = vpop.permute.xlu0 %2933
    %2935 = vrot.lane.b32.xlu0 %v2925, 127
    %v2936 = vpop.permute.xlu0 %2935
    %2937 = vrot.lane.b32.xlu0 %v2926, 127
    %v2938 = vpop.permute.xlu0 %2937
    %v2943 = vadd.f32 %v2855, %v2932
    %v2944 = vadd.f32 %v2856, %v2934
    %v2945 = vadd.f32 %v2857, %v2936
    %v2946 = vadd.f32 %v2858, %v2938
    %s2947 = sld [smem:[#allocation3 + $0xbc]]
    %v2948 = vstv %s2947
    %v2949 = vmul.f32 %v2825, %v2948
    %v2950 = vmul.f32 %v2826, %v2948
    %v2951 = vmul.f32 %v2827, %v2948
    %v2952 = vmul.f32 %v2828, %v2948
    %2957 = vrot.lane.b32.xlu0 %v2949, 127
    %v2958 = vpop.permute.xlu0 %2957
    %2959 = vrot.lane.b32.xlu0 %v2950, 127
    %v2960 = vpop.permute.xlu0 %2959
    %2961 = vrot.lane.b32.xlu0 %v2951, 127
    %v2962 = vpop.permute.xlu0 %2961
    %2963 = vrot.lane.b32.xlu0 %v2952, 127
    %v2964 = vpop.permute.xlu0 %2963
    %v2969 = vadd.f32 %v2865, %v2958
    %v2970 = vadd.f32 %v2866, %v2960
    %v2971 = vadd.f32 %v2867, %v2962
    %v2972 = vadd.f32 %v2868, %v2964
    %v2973 = vld [vmem:[%s124 + $0x1] sm:$0xff]
    %v2974 = vld [vmem:[%s124 + $0x9] sm:$0xff]
    %v2975 = vld [vmem:[%s124 + $0x19] sm:$0xff]
    %v2976 = vld [vmem:[%s124 + $0x21] sm:$0xff]
    %s2977 = sld [smem:[#allocation3 + $0x81]]
    %v2978 = vstv %s2977
    %v2979 = vmul.f32 %v2973, %v2978
    %v2980 = vmul.f32 %v2974, %v2978
    %v2981 = vmul.f32 %v2975, %v2978
    %v2982 = vmul.f32 %v2976, %v2978
    %v2983 = vadd.f32 %v2891, %v2979
    %v2984 = vadd.f32 %v2892, %v2980
    %v2985 = vadd.f32 %v2893, %v2981
    %v2986 = vadd.f32 %v2894, %v2982
    %s2987 = sld [smem:[#allocation3 + $0x85]]
    %v2988 = vstv %s2987
    %v2989 = vmul.f32 %v2973, %v2988
    %v2990 = vmul.f32 %v2974, %v2988
    %v2991 = vmul.f32 %v2975, %v2988
    %v2992 = vmul.f32 %v2976, %v2988
    %v2993 = vadd.f32 %v2917, %v2989
    %v2994 = vadd.f32 %v2918, %v2990
    %v2995 = vadd.f32 %v2919, %v2991
    %v2996 = vadd.f32 %v2920, %v2992
    %s2997 = sld [smem:[#allocation3 + $0x89]]
    %v2998 = vstv %s2997
    %v2999 = vmul.f32 %v2973, %v2998
    %v3000 = vmul.f32 %v2974, %v2998
    %v3001 = vmul.f32 %v2975, %v2998
    %v3002 = vmul.f32 %v2976, %v2998
    %v3003 = vadd.f32 %v2943, %v2999
    %v3004 = vadd.f32 %v2944, %v3000
    %v3005 = vadd.f32 %v2945, %v3001
    %v3006 = vadd.f32 %v2946, %v3002
    %s3007 = sld [smem:[#allocation3 + $0x8d]]
    %v3008 = vstv %s3007
    %v3009 = vmul.f32 %v2973, %v3008
    %v3010 = vmul.f32 %v2974, %v3008
    %v3011 = vmul.f32 %v2975, %v3008
    %v3012 = vmul.f32 %v2976, %v3008
    %v3013 = vadd.f32 %v2969, %v3009
    %v3014 = vadd.f32 %v2970, %v3010
    %v3015 = vadd.f32 %v2971, %v3011
    %v3016 = vadd.f32 %v2972, %v3012
    %s3017 = sld [smem:[#allocation3 + $0x91]]
    %v3018 = vstv %s3017
    %v3019 = vmul.f32 %v2973, %v3018
    %v3020 = vmul.f32 %v2974, %v3018
    %v3021 = vmul.f32 %v2975, %v3018
    %v3022 = vmul.f32 %v2976, %v3018
    %3027 = vrot.lane.b32.xlu0 %v3019, 127
    %v3028 = vpop.permute.xlu0 %3027
    %3029 = vrot.lane.b32.xlu0 %v3020, 127
    %v3030 = vpop.permute.xlu0 %3029
    %3031 = vrot.lane.b32.xlu0 %v3021, 127
    %v3032 = vpop.permute.xlu0 %3031
    %3033 = vrot.lane.b32.xlu0 %v3022, 127
    %v3034 = vpop.permute.xlu0 %3033
    %v3039 = vadd.f32 %v2983, %v3028
    %v3040 = vadd.f32 %v2984, %v3030
    %v3041 = vadd.f32 %v2985, %v3032
    %v3042 = vadd.f32 %v2986, %v3034
    %s3043 = sld [smem:[#allocation3 + $0x95]]
    %v3044 = vstv %s3043
    %v3045 = vmul.f32 %v2973, %v3044
    %v3046 = vmul.f32 %v2974, %v3044
    %v3047 = vmul.f32 %v2975, %v3044
    %v3048 = vmul.f32 %v2976, %v3044
    %3053 = vrot.lane.b32.xlu0 %v3045, 127
    %v3054 = vpop.permute.xlu0 %3053
    %3055 = vrot.lane.b32.xlu0 %v3046, 127
    %v3056 = vpop.permute.xlu0 %3055
    %3057 = vrot.lane.b32.xlu0 %v3047, 127
    %v3058 = vpop.permute.xlu0 %3057
    %3059 = vrot.lane.b32.xlu0 %v3048, 127
    %v3060 = vpop.permute.xlu0 %3059
    %v3065 = vadd.f32 %v2993, %v3054
    %v3066 = vadd.f32 %v2994, %v3056
    %v3067 = vadd.f32 %v2995, %v3058
    %v3068 = vadd.f32 %v2996, %v3060
    %s3069 = sld [smem:[#allocation3 + $0x99]]
    %v3070 = vstv %s3069
    %v3071 = vmul.f32 %v2973, %v3070
    %v3072 = vmul.f32 %v2974, %v3070
    %v3073 = vmul.f32 %v2975, %v3070
    %v3074 = vmul.f32 %v2976, %v3070
    %3079 = vrot.lane.b32.xlu0 %v3071, 127
    %v3080 = vpop.permute.xlu0 %3079
    %3081 = vrot.lane.b32.xlu0 %v3072, 127
    %v3082 = vpop.permute.xlu0 %3081
    %3083 = vrot.lane.b32.xlu0 %v3073, 127
    %v3084 = vpop.permute.xlu0 %3083
    %3085 = vrot.lane.b32.xlu0 %v3074, 127
    %v3086 = vpop.permute.xlu0 %3085
    %v3091 = vadd.f32 %v3003, %v3080
    %v3092 = vadd.f32 %v3004, %v3082
    %v3093 = vadd.f32 %v3005, %v3084
    %v3094 = vadd.f32 %v3006, %v3086
    %s3095 = sld [smem:[#allocation3 + $0x9d]]
    %v3096 = vstv %s3095
    %v3097 = vmul.f32 %v2973, %v3096
    %v3098 = vmul.f32 %v2974, %v3096
    %v3099 = vmul.f32 %v2975, %v3096
    %v3100 = vmul.f32 %v2976, %v3096
    %3105 = vrot.lane.b32.xlu0 %v3097, 127
    %v3106 = vpop.permute.xlu0 %3105
    %3107 = vrot.lane.b32.xlu0 %v3098, 127
    %v3108 = vpop.permute.xlu0 %3107
    %3109 = vrot.lane.b32.xlu0 %v3099, 127
    %v3110 = vpop.permute.xlu0 %3109
    %3111 = vrot.lane.b32.xlu0 %v3100, 127
    %v3112 = vpop.permute.xlu0 %3111
    %v3117 = vadd.f32 %v3013, %v3106
    %v3118 = vadd.f32 %v3014, %v3108
    %v3119 = vadd.f32 %v3015, %v3110
    %v3120 = vadd.f32 %v3016, %v3112
    %v3121 = vld [vmem:[%s124 + $0x2] sm:$0xff]
    %v3122 = vld [vmem:[%s124 + $0xa] sm:$0xff]
    %v3123 = vld [vmem:[%s124 + $0x1a] sm:$0xff]
    %v3124 = vld [vmem:[%s124 + $0x22] sm:$0xff]
    %s3125 = sld [smem:[#allocation3 + $0xa1]]
    %v3126 = vstv %s3125
    %v3127 = vmul.f32 %v3121, %v3126
    %v3128 = vmul.f32 %v3122, %v3126
    %v3129 = vmul.f32 %v3123, %v3126
    %v3130 = vmul.f32 %v3124, %v3126
    %v3131 = vadd.f32 %v3039, %v3127
    %v3132 = vadd.f32 %v3040, %v3128
    %v3133 = vadd.f32 %v3041, %v3129
    %v3134 = vadd.f32 %v3042, %v3130
    %s3135 = sld [smem:[#allocation3 + $0xa5]]
    %v3136 = vstv %s3135
    %v3137 = vmul.f32 %v3121, %v3136
    %v3138 = vmul.f32 %v3122, %v3136
    %v3139 = vmul.f32 %v3123, %v3136
    %v3140 = vmul.f32 %v3124, %v3136
    %v3141 = vadd.f32 %v3065, %v3137
    %v3142 = vadd.f32 %v3066, %v3138
    %v3143 = vadd.f32 %v3067, %v3139
    %v3144 = vadd.f32 %v3068, %v3140
    %s3145 = sld [smem:[#allocation3 + $0xa9]]
    %v3146 = vstv %s3145
    %v3147 = vmul.f32 %v3121, %v3146
    %v3148 = vmul.f32 %v3122, %v3146
    %v3149 = vmul.f32 %v3123, %v3146
    %v3150 = vmul.f32 %v3124, %v3146
    %v3151 = vadd.f32 %v3091, %v3147
    %v3152 = vadd.f32 %v3092, %v3148
    %v3153 = vadd.f32 %v3093, %v3149
    %v3154 = vadd.f32 %v3094, %v3150
    %s3155 = sld [smem:[#allocation3 + $0xad]]
    %v3156 = vstv %s3155
    %v3157 = vmul.f32 %v3121, %v3156
    %v3158 = vmul.f32 %v3122, %v3156
    %v3159 = vmul.f32 %v3123, %v3156
    %v3160 = vmul.f32 %v3124, %v3156
    %v3161 = vadd.f32 %v3117, %v3157
    %v3162 = vadd.f32 %v3118, %v3158
    %v3163 = vadd.f32 %v3119, %v3159
    %v3164 = vadd.f32 %v3120, %v3160
    %s3165 = sld [smem:[#allocation3 + $0xb1]]
    %v3166 = vstv %s3165
    %v3167 = vmul.f32 %v3121, %v3166
    %v3168 = vmul.f32 %v3122, %v3166
    %v3169 = vmul.f32 %v3123, %v3166
    %v3170 = vmul.f32 %v3124, %v3166
    %3175 = vrot.lane.b32.xlu0 %v3167, 127
    %v3176 = vpop.permute.xlu0 %3175
    %3177 = vrot.lane.b32.xlu0 %v3168, 127
    %v3178 = vpop.permute.xlu0 %3177
    %3179 = vrot.lane.b32.xlu0 %v3169, 127
    %v3180 = vpop.permute.xlu0 %3179
    %3181 = vrot.lane.b32.xlu0 %v3170, 127
    %v3182 = vpop.permute.xlu0 %3181
    %v3187 = vadd.f32 %v3131, %v3176
    %v3188 = vadd.f32 %v3132, %v3178
    %v3189 = vadd.f32 %v3133, %v3180
    %v3190 = vadd.f32 %v3134, %v3182
    %s3191 = sld [smem:[#allocation3 + $0xb5]]
    %v3192 = vstv %s3191
    %v3193 = vmul.f32 %v3121, %v3192
    %v3194 = vmul.f32 %v3122, %v3192
    %v3195 = vmul.f32 %v3123, %v3192
    %v3196 = vmul.f32 %v3124, %v3192
    %3201 = vrot.lane.b32.xlu0 %v3193, 127
    %v3202 = vpop.permute.xlu0 %3201
    %3203 = vrot.lane.b32.xlu0 %v3194, 127
    %v3204 = vpop.permute.xlu0 %3203
    %3205 = vrot.lane.b32.xlu0 %v3195, 127
    %v3206 = vpop.permute.xlu0 %3205
    %3207 = vrot.lane.b32.xlu0 %v3196, 127
    %v3208 = vpop.permute.xlu0 %3207
    %v3213 = vadd.f32 %v3141, %v3202
    %v3214 = vadd.f32 %v3142, %v3204
    %v3215 = vadd.f32 %v3143, %v3206
    %v3216 = vadd.f32 %v3144, %v3208
    %s3217 = sld [smem:[#allocation3 + $0xb9]]
    %v3218 = vstv %s3217
    %v3219 = vmul.f32 %v3121, %v3218
    %v3220 = vmul.f32 %v3122, %v3218
    %v3221 = vmul.f32 %v3123, %v3218
    %v3222 = vmul.f32 %v3124, %v3218
    %3227 = vrot.lane.b32.xlu0 %v3219, 127
    %v3228 = vpop.permute.xlu0 %3227
    %3229 = vrot.lane.b32.xlu0 %v3220, 127
    %v3230 = vpop.permute.xlu0 %3229
    %3231 = vrot.lane.b32.xlu0 %v3221, 127
    %v3232 = vpop.permute.xlu0 %3231
    %3233 = vrot.lane.b32.xlu0 %v3222, 127
    %v3234 = vpop.permute.xlu0 %3233
    %v3239 = vadd.f32 %v3151, %v3228
    %v3240 = vadd.f32 %v3152, %v3230
    %v3241 = vadd.f32 %v3153, %v3232
    %v3242 = vadd.f32 %v3154, %v3234
    %s3243 = sld [smem:[#allocation3 + $0xbd]]
    %v3244 = vstv %s3243
    %v3245 = vmul.f32 %v3121, %v3244
    %v3246 = vmul.f32 %v3122, %v3244
    %v3247 = vmul.f32 %v3123, %v3244
    %v3248 = vmul.f32 %v3124, %v3244
    %3253 = vrot.lane.b32.xlu0 %v3245, 127
    %v3254 = vpop.permute.xlu0 %3253
    %3255 = vrot.lane.b32.xlu0 %v3246, 127
    %v3256 = vpop.permute.xlu0 %3255
    %3257 = vrot.lane.b32.xlu0 %v3247, 127
    %v3258 = vpop.permute.xlu0 %3257
    %3259 = vrot.lane.b32.xlu0 %v3248, 127
    %v3260 = vpop.permute.xlu0 %3259
    %v3265 = vadd.f32 %v3161, %v3254
    %v3266 = vadd.f32 %v3162, %v3256
    %v3267 = vadd.f32 %v3163, %v3258
    %v3268 = vadd.f32 %v3164, %v3260
    %v3269 = vld [vmem:[%s150 + $0x1] sm:$0xff]
    %v3270 = vld [vmem:[%s150 + $0x9] sm:$0xff]
    %v3271 = vld [vmem:[%s150 + $0x19] sm:$0xff]
    %v3272 = vld [vmem:[%s150 + $0x21] sm:$0xff]
    %s3273 = sld [smem:[#allocation3 + $0x82]]
    %v3274 = vstv %s3273
    %v3275 = vmul.f32 %v3269, %v3274
    %v3276 = vmul.f32 %v3270, %v3274
    %v3277 = vmul.f32 %v3271, %v3274
    %v3278 = vmul.f32 %v3272, %v3274
    %v3279 = vadd.f32 %v3187, %v3275
    %v3280 = vadd.f32 %v3188, %v3276
    %v3281 = vadd.f32 %v3189, %v3277
    %v3282 = vadd.f32 %v3190, %v3278
    %s3283 = sld [smem:[#allocation3 + $0x86]]
    %v3284 = vstv %s3283
    %v3285 = vmul.f32 %v3269, %v3284
    %v3286 = vmul.f32 %v3270, %v3284
    %v3287 = vmul.f32 %v3271, %v3284
    %v3288 = vmul.f32 %v3272, %v3284
    %v3289 = vadd.f32 %v3213, %v3285
    %v3290 = vadd.f32 %v3214, %v3286
    %v3291 = vadd.f32 %v3215, %v3287
    %v3292 = vadd.f32 %v3216, %v3288
    %s3293 = sld [smem:[#allocation3 + $0x8a]]
    %v3294 = vstv %s3293
    %v3295 = vmul.f32 %v3269, %v3294
    %v3296 = vmul.f32 %v3270, %v3294
    %v3297 = vmul.f32 %v3271, %v3294
    %v3298 = vmul.f32 %v3272, %v3294
    %v3299 = vadd.f32 %v3239, %v3295
    %v3300 = vadd.f32 %v3240, %v3296
    %v3301 = vadd.f32 %v3241, %v3297
    %v3302 = vadd.f32 %v3242, %v3298
    %s3303 = sld [smem:[#allocation3 + $0x8e]]
    %v3304 = vstv %s3303
    %v3305 = vmul.f32 %v3269, %v3304
    %v3306 = vmul.f32 %v3270, %v3304
    %v3307 = vmul.f32 %v3271, %v3304
    %v3308 = vmul.f32 %v3272, %v3304
    %v3309 = vadd.f32 %v3265, %v3305
    %v3310 = vadd.f32 %v3266, %v3306
    %v3311 = vadd.f32 %v3267, %v3307
    %v3312 = vadd.f32 %v3268, %v3308
    %s3313 = sld [smem:[#allocation3 + $0x92]]
    %v3314 = vstv %s3313
    %v3315 = vmul.f32 %v3269, %v3314
    %v3316 = vmul.f32 %v3270, %v3314
    %v3317 = vmul.f32 %v3271, %v3314
    %v3318 = vmul.f32 %v3272, %v3314
    %3323 = vrot.lane.b32.xlu0 %v3315, 127
    %v3324 = vpop.permute.xlu0 %3323
    %3325 = vrot.lane.b32.xlu0 %v3316, 127
    %v3326 = vpop.permute.xlu0 %3325
    %3327 = vrot.lane.b32.xlu0 %v3317, 127
    %v3328 = vpop.permute.xlu0 %3327
    %3329 = vrot.lane.b32.xlu0 %v3318, 127
    %v3330 = vpop.permute.xlu0 %3329
    %v3335 = vadd.f32 %v3279, %v3324
    %v3336 = vadd.f32 %v3280, %v3326
    %v3337 = vadd.f32 %v3281, %v3328
    %v3338 = vadd.f32 %v3282, %v3330
    %s3339 = sld [smem:[#allocation3 + $0x96]]
    %v3340 = vstv %s3339
    %v3341 = vmul.f32 %v3269, %v3340
    %v3342 = vmul.f32 %v3270, %v3340
    %v3343 = vmul.f32 %v3271, %v3340
    %v3344 = vmul.f32 %v3272, %v3340
    %3349 = vrot.lane.b32.xlu0 %v3341, 127
    %v3350 = vpop.permute.xlu0 %3349
    %3351 = vrot.lane.b32.xlu0 %v3342, 127
    %v3352 = vpop.permute.xlu0 %3351
    %3353 = vrot.lane.b32.xlu0 %v3343, 127
    %v3354 = vpop.permute.xlu0 %3353
    %3355 = vrot.lane.b32.xlu0 %v3344, 127
    %v3356 = vpop.permute.xlu0 %3355
    %v3361 = vadd.f32 %v3289, %v3350
    %v3362 = vadd.f32 %v3290, %v3352
    %v3363 = vadd.f32 %v3291, %v3354
    %v3364 = vadd.f32 %v3292, %v3356
    %s3365 = sld [smem:[#allocation3 + $0x9a]]
    %v3366 = vstv %s3365
    %v3367 = vmul.f32 %v3269, %v3366
    %v3368 = vmul.f32 %v3270, %v3366
    %v3369 = vmul.f32 %v3271, %v3366
    %v3370 = vmul.f32 %v3272, %v3366
    %3375 = vrot.lane.b32.xlu0 %v3367, 127
    %v3376 = vpop.permute.xlu0 %3375
    %3377 = vrot.lane.b32.xlu0 %v3368, 127
    %v3378 = vpop.permute.xlu0 %3377
    %3379 = vrot.lane.b32.xlu0 %v3369, 127
    %v3380 = vpop.permute.xlu0 %3379
    %3381 = vrot.lane.b32.xlu0 %v3370, 127
    %v3382 = vpop.permute.xlu0 %3381
    %v3387 = vadd.f32 %v3299, %v3376
    %v3388 = vadd.f32 %v3300, %v3378
    %v3389 = vadd.f32 %v3301, %v3380
    %v3390 = vadd.f32 %v3302, %v3382
    %s3391 = sld [smem:[#allocation3 + $0x9e]]
    %v3392 = vstv %s3391
    %v3393 = vmul.f32 %v3269, %v3392
    %v3394 = vmul.f32 %v3270, %v3392
    %v3395 = vmul.f32 %v3271, %v3392
    %v3396 = vmul.f32 %v3272, %v3392
    %3401 = vrot.lane.b32.xlu0 %v3393, 127
    %v3402 = vpop.permute.xlu0 %3401
    %3403 = vrot.lane.b32.xlu0 %v3394, 127
    %v3404 = vpop.permute.xlu0 %3403
    %3405 = vrot.lane.b32.xlu0 %v3395, 127
    %v3406 = vpop.permute.xlu0 %3405
    %3407 = vrot.lane.b32.xlu0 %v3396, 127
    %v3408 = vpop.permute.xlu0 %3407
    %v3413 = vadd.f32 %v3309, %v3402
    %v3414 = vadd.f32 %v3310, %v3404
    %v3415 = vadd.f32 %v3311, %v3406
    %v3416 = vadd.f32 %v3312, %v3408
    %v3417 = vld [vmem:[%s150 + $0x2] sm:$0xff]
    %v3418 = vld [vmem:[%s150 + $0xa] sm:$0xff]
    %v3419 = vld [vmem:[%s150 + $0x1a] sm:$0xff]
    %v3420 = vld [vmem:[%s150 + $0x22] sm:$0xff]
    %s3421 = sld [smem:[#allocation3 + $0xa2]]
    %v3422 = vstv %s3421
    %v3423 = vmul.f32 %v3417, %v3422
    %v3424 = vmul.f32 %v3418, %v3422
    %v3425 = vmul.f32 %v3419, %v3422
    %v3426 = vmul.f32 %v3420, %v3422
    %v3427 = vadd.f32 %v3335, %v3423
    %v3428 = vadd.f32 %v3336, %v3424
    %v3429 = vadd.f32 %v3337, %v3425
    %v3430 = vadd.f32 %v3338, %v3426
    %s3431 = sld [smem:[#allocation3 + $0xa6]]
    %v3432 = vstv %s3431
    %v3433 = vmul.f32 %v3417, %v3432
    %v3434 = vmul.f32 %v3418, %v3432
    %v3435 = vmul.f32 %v3419, %v3432
    %v3436 = vmul.f32 %v3420, %v3432
    %v3437 = vadd.f32 %v3361, %v3433
    %v3438 = vadd.f32 %v3362, %v3434
    %v3439 = vadd.f32 %v3363, %v3435
    %v3440 = vadd.f32 %v3364, %v3436
    %s3441 = sld [smem:[#allocation3 + $0xaa]]
    %v3442 = vstv %s3441
    %v3443 = vmul.f32 %v3417, %v3442
    %v3444 = vmul.f32 %v3418, %v3442
    %v3445 = vmul.f32 %v3419, %v3442
    %v3446 = vmul.f32 %v3420, %v3442
    %v3447 = vadd.f32 %v3387, %v3443
    %v3448 = vadd.f32 %v3388, %v3444
    %v3449 = vadd.f32 %v3389, %v3445
    %v3450 = vadd.f32 %v3390, %v3446
    %s3451 = sld [smem:[#allocation3 + $0xae]]
    %v3452 = vstv %s3451
    %v3453 = vmul.f32 %v3417, %v3452
    %v3454 = vmul.f32 %v3418, %v3452
    %v3455 = vmul.f32 %v3419, %v3452
    %v3456 = vmul.f32 %v3420, %v3452
    %v3457 = vadd.f32 %v3413, %v3453
    %v3458 = vadd.f32 %v3414, %v3454
    %v3459 = vadd.f32 %v3415, %v3455
    %v3460 = vadd.f32 %v3416, %v3456
    %s3461 = sld [smem:[#allocation3 + $0xb2]]
    %v3462 = vstv %s3461
    %v3463 = vmul.f32 %v3417, %v3462
    %v3464 = vmul.f32 %v3418, %v3462
    %v3465 = vmul.f32 %v3419, %v3462
    %v3466 = vmul.f32 %v3420, %v3462
    %3471 = vrot.lane.b32.xlu0 %v3463, 127
    %v3472 = vpop.permute.xlu0 %3471
    %3473 = vrot.lane.b32.xlu0 %v3464, 127
    %v3474 = vpop.permute.xlu0 %3473
    %3475 = vrot.lane.b32.xlu0 %v3465, 127
    %v3476 = vpop.permute.xlu0 %3475
    %3477 = vrot.lane.b32.xlu0 %v3466, 127
    %v3478 = vpop.permute.xlu0 %3477
    %v3483 = vadd.f32 %v3427, %v3472
    %v3484 = vadd.f32 %v3428, %v3474
    %v3485 = vadd.f32 %v3429, %v3476
    %v3486 = vadd.f32 %v3430, %v3478
    %s3487 = sld [smem:[#allocation3 + $0xb6]]
    %v3488 = vstv %s3487
    %v3489 = vmul.f32 %v3417, %v3488
    %v3490 = vmul.f32 %v3418, %v3488
    %v3491 = vmul.f32 %v3419, %v3488
    %v3492 = vmul.f32 %v3420, %v3488
    %3497 = vrot.lane.b32.xlu0 %v3489, 127
    %v3498 = vpop.permute.xlu0 %3497
    %3499 = vrot.lane.b32.xlu0 %v3490, 127
    %v3500 = vpop.permute.xlu0 %3499
    %3501 = vrot.lane.b32.xlu0 %v3491, 127
    %v3502 = vpop.permute.xlu0 %3501
    %3503 = vrot.lane.b32.xlu0 %v3492, 127
    %v3504 = vpop.permute.xlu0 %3503
    %v3509 = vadd.f32 %v3437, %v3498
    %v3510 = vadd.f32 %v3438, %v3500
    %v3511 = vadd.f32 %v3439, %v3502
    %v3512 = vadd.f32 %v3440, %v3504
    %s3513 = sld [smem:[#allocation3 + $0xba]]
    %v3514 = vstv %s3513
    %v3515 = vmul.f32 %v3417, %v3514
    %v3516 = vmul.f32 %v3418, %v3514
    %v3517 = vmul.f32 %v3419, %v3514
    %v3518 = vmul.f32 %v3420, %v3514
    %3523 = vrot.lane.b32.xlu0 %v3515, 127
    %v3524 = vpop.permute.xlu0 %3523
    %3525 = vrot.lane.b32.xlu0 %v3516, 127
    %v3526 = vpop.permute.xlu0 %3525
    %3527 = vrot.lane.b32.xlu0 %v3517, 127
    %v3528 = vpop.permute.xlu0 %3527
    %3529 = vrot.lane.b32.xlu0 %v3518, 127
    %v3530 = vpop.permute.xlu0 %3529
    %v3535 = vadd.f32 %v3447, %v3524
    %v3536 = vadd.f32 %v3448, %v3526
    %v3537 = vadd.f32 %v3449, %v3528
    %v3538 = vadd.f32 %v3450, %v3530
    %s3539 = sld [smem:[#allocation3 + $0xbe]]
    %v3540 = vstv %s3539
    %v3541 = vmul.f32 %v3417, %v3540
    %v3542 = vmul.f32 %v3418, %v3540
    %v3543 = vmul.f32 %v3419, %v3540
    %v3544 = vmul.f32 %v3420, %v3540
    %3549 = vrot.lane.b32.xlu0 %v3541, 127
    %v3550 = vpop.permute.xlu0 %3549
    %3551 = vrot.lane.b32.xlu0 %v3542, 127
    %v3552 = vpop.permute.xlu0 %3551
    %3553 = vrot.lane.b32.xlu0 %v3543, 127
    %v3554 = vpop.permute.xlu0 %3553
    %3555 = vrot.lane.b32.xlu0 %v3544, 127
    %v3556 = vpop.permute.xlu0 %3555
    %v3561 = vadd.f32 %v3457, %v3550
    %v3562 = vadd.f32 %v3458, %v3552
    %v3563 = vadd.f32 %v3459, %v3554
    %v3564 = vadd.f32 %v3460, %v3556
    %v3565 = vld [vmem:[%s176 + $0x1] sm:$0xff]
    %v3566 = vld [vmem:[%s176 + $0x9] sm:$0xff]
    %v3567 = vld [vmem:[%s176 + $0x19] sm:$0xff]
    %v3568 = vld [vmem:[%s176 + $0x21] sm:$0xff]
    %s3569 = sld [smem:[#allocation3 + $0x83]]
    %v3570 = vstv %s3569
    %v3571 = vmul.f32 %v3565, %v3570
    %v3572 = vmul.f32 %v3566, %v3570
    %v3573 = vmul.f32 %v3567, %v3570
    %v3574 = vmul.f32 %v3568, %v3570
    %v3575 = vadd.f32 %v3483, %v3571
    %v3576 = vadd.f32 %v3484, %v3572
    %v3577 = vadd.f32 %v3485, %v3573
    %v3578 = vadd.f32 %v3486, %v3574
    %s3579 = sld [smem:[#allocation3 + $0x87]]
    %v3580 = vstv %s3579
    %v3581 = vmul.f32 %v3565, %v3580
    %v3582 = vmul.f32 %v3566, %v3580
    %v3583 = vmul.f32 %v3567, %v3580
    %v3584 = vmul.f32 %v3568, %v3580
    %v3585 = vadd.f32 %v3509, %v3581
    %v3586 = vadd.f32 %v3510, %v3582
    %v3587 = vadd.f32 %v3511, %v3583
    %v3588 = vadd.f32 %v3512, %v3584
    %s3589 = sld [smem:[#allocation3 + $0x8b]]
    %v3590 = vstv %s3589
    %v3591 = vmul.f32 %v3565, %v3590
    %v3592 = vmul.f32 %v3566, %v3590
    %v3593 = vmul.f32 %v3567, %v3590
    %v3594 = vmul.f32 %v3568, %v3590
    %v3595 = vadd.f32 %v3535, %v3591
    %v3596 = vadd.f32 %v3536, %v3592
    %v3597 = vadd.f32 %v3537, %v3593
    %v3598 = vadd.f32 %v3538, %v3594
    %s3599 = sld [smem:[#allocation3 + $0x8f]]
    %v3600 = vstv %s3599
    %v3601 = vmul.f32 %v3565, %v3600
    %v3602 = vmul.f32 %v3566, %v3600
    %v3603 = vmul.f32 %v3567, %v3600
    %v3604 = vmul.f32 %v3568, %v3600
    %v3605 = vadd.f32 %v3561, %v3601
    %v3606 = vadd.f32 %v3562, %v3602
    %v3607 = vadd.f32 %v3563, %v3603
    %v3608 = vadd.f32 %v3564, %v3604
    %s3609 = sld [smem:[#allocation3 + $0x93]]
    %v3610 = vstv %s3609
    %v3611 = vmul.f32 %v3565, %v3610
    %v3612 = vmul.f32 %v3566, %v3610
    %v3613 = vmul.f32 %v3567, %v3610
    %v3614 = vmul.f32 %v3568, %v3610
    %3619 = vrot.lane.b32.xlu0 %v3611, 127
    %v3620 = vpop.permute.xlu0 %3619
    %3621 = vrot.lane.b32.xlu0 %v3612, 127
    %v3622 = vpop.permute.xlu0 %3621
    %3623 = vrot.lane.b32.xlu0 %v3613, 127
    %v3624 = vpop.permute.xlu0 %3623
    %3625 = vrot.lane.b32.xlu0 %v3614, 127
    %v3626 = vpop.permute.xlu0 %3625
    %v3631 = vadd.f32 %v3575, %v3620
    %v3632 = vadd.f32 %v3576, %v3622
    %v3633 = vadd.f32 %v3577, %v3624
    %v3634 = vadd.f32 %v3578, %v3626
    %s3635 = sld [smem:[#allocation3 + $0x97]]
    %v3636 = vstv %s3635
    %v3637 = vmul.f32 %v3565, %v3636
    %v3638 = vmul.f32 %v3566, %v3636
    %v3639 = vmul.f32 %v3567, %v3636
    %v3640 = vmul.f32 %v3568, %v3636
    %3645 = vrot.lane.b32.xlu0 %v3637, 127
    %v3646 = vpop.permute.xlu0 %3645
    %3647 = vrot.lane.b32.xlu0 %v3638, 127
    %v3648 = vpop.permute.xlu0 %3647
    %3649 = vrot.lane.b32.xlu0 %v3639, 127
    %v3650 = vpop.permute.xlu0 %3649
    %3651 = vrot.lane.b32.xlu0 %v3640, 127
    %v3652 = vpop.permute.xlu0 %3651
    %v3657 = vadd.f32 %v3585, %v3646
    %v3658 = vadd.f32 %v3586, %v3648
    %v3659 = vadd.f32 %v3587, %v3650
    %v3660 = vadd.f32 %v3588, %v3652
    %s3661 = sld [smem:[#allocation3 + $0x9b]]
    %v3662 = vstv %s3661
    %v3663 = vmul.f32 %v3565, %v3662
    %v3664 = vmul.f32 %v3566, %v3662
    %v3665 = vmul.f32 %v3567, %v3662
    %v3666 = vmul.f32 %v3568, %v3662
    %3671 = vrot.lane.b32.xlu0 %v3663, 127
    %v3672 = vpop.permute.xlu0 %3671
    %3673 = vrot.lane.b32.xlu0 %v3664, 127
    %v3674 = vpop.permute.xlu0 %3673
    %3675 = vrot.lane.b32.xlu0 %v3665, 127
    %v3676 = vpop.permute.xlu0 %3675
    %3677 = vrot.lane.b32.xlu0 %v3666, 127
    %v3678 = vpop.permute.xlu0 %3677
    %v3683 = vadd.f32 %v3595, %v3672
    %v3684 = vadd.f32 %v3596, %v3674
    %v3685 = vadd.f32 %v3597, %v3676
    %v3686 = vadd.f32 %v3598, %v3678
    %s3687 = sld [smem:[#allocation3 + $0x9f]]
    %v3688 = vstv %s3687
    %v3689 = vmul.f32 %v3565, %v3688
    %v3690 = vmul.f32 %v3566, %v3688
    %v3691 = vmul.f32 %v3567, %v3688
    %v3692 = vmul.f32 %v3568, %v3688
    %3697 = vrot.lane.b32.xlu0 %v3689, 127
    %v3698 = vpop.permute.xlu0 %3697
    %3699 = vrot.lane.b32.xlu0 %v3690, 127
    %v3700 = vpop.permute.xlu0 %3699
    %3701 = vrot.lane.b32.xlu0 %v3691, 127
    %v3702 = vpop.permute.xlu0 %3701
    %3703 = vrot.lane.b32.xlu0 %v3692, 127
    %v3704 = vpop.permute.xlu0 %3703
    %v3709 = vadd.f32 %v3605, %v3698
    %v3710 = vadd.f32 %v3606, %v3700
    %v3711 = vadd.f32 %v3607, %v3702
    %v3712 = vadd.f32 %v3608, %v3704
    %v3713 = vld [vmem:[%s176 + $0x2] sm:$0xff]
    %v3714 = vld [vmem:[%s176 + $0xa] sm:$0xff]
    %v3715 = vld [vmem:[%s176 + $0x1a] sm:$0xff]
    %v3716 = vld [vmem:[%s176 + $0x22] sm:$0xff]
    %s3717 = sld [smem:[#allocation3 + $0xa3]]
    %v3718 = vstv %s3717
    %v3719 = vmul.f32 %v3713, %v3718
    %v3720 = vmul.f32 %v3714, %v3718
    %v3721 = vmul.f32 %v3715, %v3718
    %v3722 = vmul.f32 %v3716, %v3718
    %v3723 = vadd.f32 %v3631, %v3719
    %v3724 = vadd.f32 %v3632, %v3720
    %v3725 = vadd.f32 %v3633, %v3721
    %v3726 = vadd.f32 %v3634, %v3722
    %s3727 = sld [smem:[#allocation3 + $0xa7]]
    %v3728 = vstv %s3727
    %v3729 = vmul.f32 %v3713, %v3728
    %v3730 = vmul.f32 %v3714, %v3728
    %v3731 = vmul.f32 %v3715, %v3728
    %v3732 = vmul.f32 %v3716, %v3728
    %v3733 = vadd.f32 %v3657, %v3729
    %v3734 = vadd.f32 %v3658, %v3730
    %v3735 = vadd.f32 %v3659, %v3731
    %v3736 = vadd.f32 %v3660, %v3732
    %s3737 = sld [smem:[#allocation3 + $0xab]]
    %v3738 = vstv %s3737
    %v3739 = vmul.f32 %v3713, %v3738
    %v3740 = vmul.f32 %v3714, %v3738
    %v3741 = vmul.f32 %v3715, %v3738
    %v3742 = vmul.f32 %v3716, %v3738
    %v3743 = vadd.f32 %v3683, %v3739
    %v3744 = vadd.f32 %v3684, %v3740
    %v3745 = vadd.f32 %v3685, %v3741
    %v3746 = vadd.f32 %v3686, %v3742
    %s3747 = sld [smem:[#allocation3 + $0xaf]]
    %v3748 = vstv %s3747
    %v3749 = vmul.f32 %v3713, %v3748
    %v3750 = vmul.f32 %v3714, %v3748
    %v3751 = vmul.f32 %v3715, %v3748
    %v3752 = vmul.f32 %v3716, %v3748
    %v3753 = vadd.f32 %v3709, %v3749
    %v3754 = vadd.f32 %v3710, %v3750
    %v3755 = vadd.f32 %v3711, %v3751
    %v3756 = vadd.f32 %v3712, %v3752
    %s3757 = sld [smem:[#allocation3 + $0xb3]]
    %v3758 = vstv %s3757
    %v3759 = vmul.f32 %v3713, %v3758
    %v3760 = vmul.f32 %v3714, %v3758
    %v3761 = vmul.f32 %v3715, %v3758
    %v3762 = vmul.f32 %v3716, %v3758
    %3767 = vrot.lane.b32.xlu0 %v3759, 127
    %v3768 = vpop.permute.xlu0 %3767
    %3769 = vrot.lane.b32.xlu0 %v3760, 127
    %v3770 = vpop.permute.xlu0 %3769
    %3771 = vrot.lane.b32.xlu0 %v3761, 127
    %v3772 = vpop.permute.xlu0 %3771
    %3773 = vrot.lane.b32.xlu0 %v3762, 127
    %v3774 = vpop.permute.xlu0 %3773
    %v3779 = vadd.f32 %v3723, %v3768
    %v3780 = vadd.f32 %v3724, %v3770
    %v3781 = vadd.f32 %v3725, %v3772
    %v3782 = vadd.f32 %v3726, %v3774
    %s3783 = sld [smem:[#allocation3 + $0xb7]]
    %v3784 = vstv %s3783
    %v3785 = vmul.f32 %v3713, %v3784
    %v3786 = vmul.f32 %v3714, %v3784
    %v3787 = vmul.f32 %v3715, %v3784
    %v3788 = vmul.f32 %v3716, %v3784
    %3793 = vrot.lane.b32.xlu0 %v3785, 127
    %v3794 = vpop.permute.xlu0 %3793
    %3795 = vrot.lane.b32.xlu0 %v3786, 127
    %v3796 = vpop.permute.xlu0 %3795
    %3797 = vrot.lane.b32.xlu0 %v3787, 127
    %v3798 = vpop.permute.xlu0 %3797
    %3799 = vrot.lane.b32.xlu0 %v3788, 127
    %v3800 = vpop.permute.xlu0 %3799
    %v3805 = vadd.f32 %v3733, %v3794
    %v3806 = vadd.f32 %v3734, %v3796
    %v3807 = vadd.f32 %v3735, %v3798
    %v3808 = vadd.f32 %v3736, %v3800
    %s3809 = sld [smem:[#allocation3 + $0xbb]]
    %v3810 = vstv %s3809
    %v3811 = vmul.f32 %v3713, %v3810
    %v3812 = vmul.f32 %v3714, %v3810
    %v3813 = vmul.f32 %v3715, %v3810
    %v3814 = vmul.f32 %v3716, %v3810
    %3819 = vrot.lane.b32.xlu0 %v3811, 127
    %v3820 = vpop.permute.xlu0 %3819
    %3821 = vrot.lane.b32.xlu0 %v3812, 127
    %v3822 = vpop.permute.xlu0 %3821
    %3823 = vrot.lane.b32.xlu0 %v3813, 127
    %v3824 = vpop.permute.xlu0 %3823
    %3825 = vrot.lane.b32.xlu0 %v3814, 127
    %v3826 = vpop.permute.xlu0 %3825
    %v3831 = vadd.f32 %v3743, %v3820
    %v3832 = vadd.f32 %v3744, %v3822
    %v3833 = vadd.f32 %v3745, %v3824
    %v3834 = vadd.f32 %v3746, %v3826
    %s3835 = sld [smem:[#allocation3 + $0xbf]]
    %v3836 = vstv %s3835
    %v3837 = vmul.f32 %v3713, %v3836
    %v3838 = vmul.f32 %v3714, %v3836
    %v3839 = vmul.f32 %v3715, %v3836
    %v3840 = vmul.f32 %v3716, %v3836
    %3845 = vrot.lane.b32.xlu0 %v3837, 127
    %v3846 = vpop.permute.xlu0 %3845
    %3847 = vrot.lane.b32.xlu0 %v3838, 127
    %v3848 = vpop.permute.xlu0 %3847
    %3849 = vrot.lane.b32.xlu0 %v3839, 127
    %v3850 = vpop.permute.xlu0 %3849
    %3851 = vrot.lane.b32.xlu0 %v3840, 127
    %v3852 = vpop.permute.xlu0 %3851
    %v3857 = vadd.f32 %v3753, %v3846
    %v3858 = vadd.f32 %v3754, %v3848
    %v3859 = vadd.f32 %v3755, %v3850
    %v3860 = vadd.f32 %v3756, %v3852
    %s3861 = scalar_lea.vmem [#allocation10], 64
    %3862 = vst.msk [vmem:[%s3861] sm:$0xff] %vm1373, %v3779
    %3863 = vst.msk [vmem:[%s3861 + $0x8] sm:$0xff] %vm1373, %v3780
    %3864 = vst.msk [vmem:[%s3861 + $0x10] sm:$0xff] %vm1373, %v3781
    %3865 = vst.msk [vmem:[%s3861 + $0x18] sm:$0xff] %vm1373, %v3782
    %s3866 = scalar_lea.vmem [#allocation10], 192
    %3867 = vst.msk [vmem:[%s3866] sm:$0xff] %vm1373, %v3805
    %3868 = vst.msk [vmem:[%s3866 + $0x8] sm:$0xff] %vm1373, %v3806
    %3869 = vst.msk [vmem:[%s3866 + $0x10] sm:$0xff] %vm1373, %v3807
    %3870 = vst.msk [vmem:[%s3866 + $0x18] sm:$0xff] %vm1373, %v3808
    %s3871 = scalar_lea.vmem [#allocation10], 320
    %3872 = vst.msk [vmem:[%s3871] sm:$0xff] %vm1373, %v3831
    %3873 = vst.msk [vmem:[%s3871 + $0x8] sm:$0xff] %vm1373, %v3832
    %3874 = vst.msk [vmem:[%s3871 + $0x10] sm:$0xff] %vm1373, %v3833
    %3875 = vst.msk [vmem:[%s3871 + $0x18] sm:$0xff] %vm1373, %v3834
    %s3876 = scalar_lea.vmem [#allocation10], 448
    %3877 = vst.msk [vmem:[%s3876] sm:$0xff] %vm1373, %v3857
    %3878 = vst.msk [vmem:[%s3876 + $0x8] sm:$0xff] %vm1373, %v3858
    %3879 = vst.msk [vmem:[%s3876 + $0x10] sm:$0xff] %vm1373, %v3859
    %3880 = vst.msk [vmem:[%s3876 + $0x18] sm:$0xff] %vm1373, %v3860
    %s3881 = sld [smem:[#allocation8]]
    %v3882 = vstv %s3881
    %s3883 = sld [smem:[#allocation8 + $0x1]]
    %v3884 = vstv %s3883
    %s3885 = sld [smem:[#allocation8 + $0x2]]
    %v3886 = vstv %s3885
    %s3887 = sld [smem:[#allocation8 + $0x3]]
    %v3888 = vstv %s3887
    %v3889 = vld [vmem:[#allocation2 + $0x1] sm:$0xff]
    %v3890 = vld [vmem:[#allocation2 + $0x9] sm:$0xff]
    %v3891 = vld [vmem:[#allocation2 + $0x19] sm:$0xff]
    %v3892 = vld [vmem:[#allocation2 + $0x21] sm:$0xff]
    %s3893 = sld [smem:[#allocation3 + $0xc0]]
    %v3894 = vstv %s3893
    %v3895 = vmul.f32 %v3889, %v3894
    %v3896 = vmul.f32 %v3890, %v3894
    %v3897 = vmul.f32 %v3891, %v3894
    %v3898 = vmul.f32 %v3892, %v3894
    %v3899 = vadd.f32 %v3882, %v3895
    %v3900 = vadd.f32 %v3882, %v3896
    %v3901 = vadd.f32 %v3882, %v3897
    %v3902 = vadd.f32 %v3882, %v3898
    %s3903 = sld [smem:[#allocation3 + $0xc4]]
    %v3904 = vstv %s3903
    %v3905 = vmul.f32 %v3889, %v3904
    %v3906 = vmul.f32 %v3890, %v3904
    %v3907 = vmul.f32 %v3891, %v3904
    %v3908 = vmul.f32 %v3892, %v3904
    %v3909 = vadd.f32 %v3884, %v3905
    %v3910 = vadd.f32 %v3884, %v3906
    %v3911 = vadd.f32 %v3884, %v3907
    %v3912 = vadd.f32 %v3884, %v3908
    %s3913 = sld [smem:[#allocation3 + $0xc8]]
    %v3914 = vstv %s3913
    %v3915 = vmul.f32 %v3889, %v3914
    %v3916 = vmul.f32 %v3890, %v3914
    %v3917 = vmul.f32 %v3891, %v3914
    %v3918 = vmul.f32 %v3892, %v3914
    %v3919 = vadd.f32 %v3886, %v3915
    %v3920 = vadd.f32 %v3886, %v3916
    %v3921 = vadd.f32 %v3886, %v3917
    %v3922 = vadd.f32 %v3886, %v3918
    %s3923 = sld [smem:[#allocation3 + $0xcc]]
    %v3924 = vstv %s3923
    %v3925 = vmul.f32 %v3889, %v3924
    %v3926 = vmul.f32 %v3890, %v3924
    %v3927 = vmul.f32 %v3891, %v3924
    %v3928 = vmul.f32 %v3892, %v3924
    %v3929 = vadd.f32 %v3888, %v3925
    %v3930 = vadd.f32 %v3888, %v3926
    %v3931 = vadd.f32 %v3888, %v3927
    %v3932 = vadd.f32 %v3888, %v3928
    %s3933 = sld [smem:[#allocation3 + $0xd0]]
    %v3934 = vstv %s3933
    %v3935 = vmul.f32 %v3889, %v3934
    %v3936 = vmul.f32 %v3890, %v3934
    %v3937 = vmul.f32 %v3891, %v3934
    %v3938 = vmul.f32 %v3892, %v3934
    %3943 = vrot.lane.b32.xlu0 %v3935, 127
    %v3944 = vpop.permute.xlu0 %3943
    %3945 = vrot.lane.b32.xlu0 %v3936, 127
    %v3946 = vpop.permute.xlu0 %3945
    %3947 = vrot.lane.b32.xlu0 %v3937, 127
    %v3948 = vpop.permute.xlu0 %3947
    %3949 = vrot.lane.b32.xlu0 %v3938, 127
    %v3950 = vpop.permute.xlu0 %3949
    %v3955 = vadd.f32 %v3899, %v3944
    %v3956 = vadd.f32 %v3900, %v3946
    %v3957 = vadd.f32 %v3901, %v3948
    %v3958 = vadd.f32 %v3902, %v3950
    %s3959 = sld [smem:[#allocation3 + $0xd4]]
    %v3960 = vstv %s3959
    %v3961 = vmul.f32 %v3889, %v3960
    %v3962 = vmul.f32 %v3890, %v3960
    %v3963 = vmul.f32 %v3891, %v3960
    %v3964 = vmul.f32 %v3892, %v3960
    %3969 = vrot.lane.b32.xlu0 %v3961, 127
    %v3970 = vpop.permute.xlu0 %3969
    %3971 = vrot.lane.b32.xlu0 %v3962, 127
    %v3972 = vpop.permute.xlu0 %3971
    %3973 = vrot.lane.b32.xlu0 %v3963, 127
    %v3974 = vpop.permute.xlu0 %3973
    %3975 = vrot.lane.b32.xlu0 %v3964, 127
    %v3976 = vpop.permute.xlu0 %3975
    %v3981 = vadd.f32 %v3909, %v3970
    %v3982 = vadd.f32 %v3910, %v3972
    %v3983 = vadd.f32 %v3911, %v3974
    %v3984 = vadd.f32 %v3912, %v3976
    %s3985 = sld [smem:[#allocation3 + $0xd8]]
    %v3986 = vstv %s3985
    %v3987 = vmul.f32 %v3889, %v3986
    %v3988 = vmul.f32 %v3890, %v3986
    %v3989 = vmul.f32 %v3891, %v3986
    %v3990 = vmul.f32 %v3892, %v3986
    %3995 = vrot.lane.b32.xlu0 %v3987, 127
    %v3996 = vpop.permute.xlu0 %3995
    %3997 = vrot.lane.b32.xlu0 %v3988, 127
    %v3998 = vpop.permute.xlu0 %3997
    %3999 = vrot.lane.b32.xlu0 %v3989, 127
    %v4000 = vpop.permute.xlu0 %3999
    %4001 = vrot.lane.b32.xlu0 %v3990, 127
    %v4002 = vpop.permute.xlu0 %4001
    %v4007 = vadd.f32 %v3919, %v3996
    %v4008 = vadd.f32 %v3920, %v3998
    %v4009 = vadd.f32 %v3921, %v4000
    %v4010 = vadd.f32 %v3922, %v4002
    %s4011 = sld [smem:[#allocation3 + $0xdc]]
    %v4012 = vstv %s4011
    %v4013 = vmul.f32 %v3889, %v4012
    %v4014 = vmul.f32 %v3890, %v4012
    %v4015 = vmul.f32 %v3891, %v4012
    %v4016 = vmul.f32 %v3892, %v4012
    %4021 = vrot.lane.b32.xlu0 %v4013, 127
    %v4022 = vpop.permute.xlu0 %4021
    %4023 = vrot.lane.b32.xlu0 %v4014, 127
    %v4024 = vpop.permute.xlu0 %4023
    %4025 = vrot.lane.b32.xlu0 %v4015, 127
    %v4026 = vpop.permute.xlu0 %4025
    %4027 = vrot.lane.b32.xlu0 %v4016, 127
    %v4028 = vpop.permute.xlu0 %4027
    %v4033 = vadd.f32 %v3929, %v4022
    %v4034 = vadd.f32 %v3930, %v4024
    %v4035 = vadd.f32 %v3931, %v4026
    %v4036 = vadd.f32 %v3932, %v4028
    %v4037 = vld [vmem:[#allocation2 + $0x2] sm:$0xff]
    %v4038 = vld [vmem:[#allocation2 + $0xa] sm:$0xff]
    %v4039 = vld [vmem:[#allocation2 + $0x1a] sm:$0xff]
    %v4040 = vld [vmem:[#allocation2 + $0x22] sm:$0xff]
    %s4041 = sld [smem:[#allocation3 + $0xe0]]
    %v4042 = vstv %s4041
    %v4043 = vmul.f32 %v4037, %v4042
    %v4044 = vmul.f32 %v4038, %v4042
    %v4045 = vmul.f32 %v4039, %v4042
    %v4046 = vmul.f32 %v4040, %v4042
    %v4047 = vadd.f32 %v3955, %v4043
    %v4048 = vadd.f32 %v3956, %v4044
    %v4049 = vadd.f32 %v3957, %v4045
    %v4050 = vadd.f32 %v3958, %v4046
    %s4051 = sld [smem:[#allocation3 + $0xe4]]
    %v4052 = vstv %s4051
    %v4053 = vmul.f32 %v4037, %v4052
    %v4054 = vmul.f32 %v4038, %v4052
    %v4055 = vmul.f32 %v4039, %v4052
    %v4056 = vmul.f32 %v4040, %v4052
    %v4057 = vadd.f32 %v3981, %v4053
    %v4058 = vadd.f32 %v3982, %v4054
    %v4059 = vadd.f32 %v3983, %v4055
    %v4060 = vadd.f32 %v3984, %v4056
    %s4061 = sld [smem:[#allocation3 + $0xe8]]
    %v4062 = vstv %s4061
    %v4063 = vmul.f32 %v4037, %v4062
    %v4064 = vmul.f32 %v4038, %v4062
    %v4065 = vmul.f32 %v4039, %v4062
    %v4066 = vmul.f32 %v4040, %v4062
    %v4067 = vadd.f32 %v4007, %v4063
    %v4068 = vadd.f32 %v4008, %v4064
    %v4069 = vadd.f32 %v4009, %v4065
    %v4070 = vadd.f32 %v4010, %v4066
    %s4071 = sld [smem:[#allocation3 + $0xec]]
    %v4072 = vstv %s4071
    %v4073 = vmul.f32 %v4037, %v4072
    %v4074 = vmul.f32 %v4038, %v4072
    %v4075 = vmul.f32 %v4039, %v4072
    %v4076 = vmul.f32 %v4040, %v4072
    %v4077 = vadd.f32 %v4033, %v4073
    %v4078 = vadd.f32 %v4034, %v4074
    %v4079 = vadd.f32 %v4035, %v4075
    %v4080 = vadd.f32 %v4036, %v4076
    %s4081 = sld [smem:[#allocation3 + $0xf0]]
    %v4082 = vstv %s4081
    %v4083 = vmul.f32 %v4037, %v4082
    %v4084 = vmul.f32 %v4038, %v4082
    %v4085 = vmul.f32 %v4039, %v4082
    %v4086 = vmul.f32 %v4040, %v4082
    %4091 = vrot.lane.b32.xlu0 %v4083, 127
    %v4092 = vpop.permute.xlu0 %4091
    %4093 = vrot.lane.b32.xlu0 %v4084, 127
    %v4094 = vpop.permute.xlu0 %4093
    %4095 = vrot.lane.b32.xlu0 %v4085, 127
    %v4096 = vpop.permute.xlu0 %4095
    %4097 = vrot.lane.b32.xlu0 %v4086, 127
    %v4098 = vpop.permute.xlu0 %4097
    %v4103 = vadd.f32 %v4047, %v4092
    %v4104 = vadd.f32 %v4048, %v4094
    %v4105 = vadd.f32 %v4049, %v4096
    %v4106 = vadd.f32 %v4050, %v4098
    %s4107 = sld [smem:[#allocation3 + $0xf4]]
    %v4108 = vstv %s4107
    %v4109 = vmul.f32 %v4037, %v4108
    %v4110 = vmul.f32 %v4038, %v4108
    %v4111 = vmul.f32 %v4039, %v4108
    %v4112 = vmul.f32 %v4040, %v4108
    %4117 = vrot.lane.b32.xlu0 %v4109, 127
    %v4118 = vpop.permute.xlu0 %4117
    %4119 = vrot.lane.b32.xlu0 %v4110, 127
    %v4120 = vpop.permute.xlu0 %4119
    %4121 = vrot.lane.b32.xlu0 %v4111, 127
    %v4122 = vpop.permute.xlu0 %4121
    %4123 = vrot.lane.b32.xlu0 %v4112, 127
    %v4124 = vpop.permute.xlu0 %4123
    %v4129 = vadd.f32 %v4057, %v4118
    %v4130 = vadd.f32 %v4058, %v4120
    %v4131 = vadd.f32 %v4059, %v4122
    %v4132 = vadd.f32 %v4060, %v4124
    %s4133 = sld [smem:[#allocation3 + $0xf8]]
    %v4134 = vstv %s4133
    %v4135 = vmul.f32 %v4037, %v4134
    %v4136 = vmul.f32 %v4038, %v4134
    %v4137 = vmul.f32 %v4039, %v4134
    %v4138 = vmul.f32 %v4040, %v4134
    %4143 = vrot.lane.b32.xlu0 %v4135, 127
    %v4144 = vpop.permute.xlu0 %4143
    %4145 = vrot.lane.b32.xlu0 %v4136, 127
    %v4146 = vpop.permute.xlu0 %4145
    %4147 = vrot.lane.b32.xlu0 %v4137, 127
    %v4148 = vpop.permute.xlu0 %4147
    %4149 = vrot.lane.b32.xlu0 %v4138, 127
    %v4150 = vpop.permute.xlu0 %4149
    %v4155 = vadd.f32 %v4067, %v4144
    %v4156 = vadd.f32 %v4068, %v4146
    %v4157 = vadd.f32 %v4069, %v4148
    %v4158 = vadd.f32 %v4070, %v4150
    %s4159 = sld [smem:[#allocation3 + $0xfc]]
    %v4160 = vstv %s4159
    %v4161 = vmul.f32 %v4037, %v4160
    %v4162 = vmul.f32 %v4038, %v4160
    %v4163 = vmul.f32 %v4039, %v4160
    %v4164 = vmul.f32 %v4040, %v4160
    %4169 = vrot.lane.b32.xlu0 %v4161, 127
    %v4170 = vpop.permute.xlu0 %4169
    %4171 = vrot.lane.b32.xlu0 %v4162, 127
    %v4172 = vpop.permute.xlu0 %4171
    %4173 = vrot.lane.b32.xlu0 %v4163, 127
    %v4174 = vpop.permute.xlu0 %4173
    %4175 = vrot.lane.b32.xlu0 %v4164, 127
    %v4176 = vpop.permute.xlu0 %4175
    %v4181 = vadd.f32 %v4077, %v4170
    %v4182 = vadd.f32 %v4078, %v4172
    %v4183 = vadd.f32 %v4079, %v4174
    %v4184 = vadd.f32 %v4080, %v4176
    %v4185 = vld [vmem:[%s124 + $0x1] sm:$0xff]
    %v4186 = vld [vmem:[%s124 + $0x9] sm:$0xff]
    %v4187 = vld [vmem:[%s124 + $0x19] sm:$0xff]
    %v4188 = vld [vmem:[%s124 + $0x21] sm:$0xff]
    %s4189 = sld [smem:[#allocation3 + $0xc1]]
    %v4190 = vstv %s4189
    %v4191 = vmul.f32 %v4185, %v4190
    %v4192 = vmul.f32 %v4186, %v4190
    %v4193 = vmul.f32 %v4187, %v4190
    %v4194 = vmul.f32 %v4188, %v4190
    %v4195 = vadd.f32 %v4103, %v4191
    %v4196 = vadd.f32 %v4104, %v4192
    %v4197 = vadd.f32 %v4105, %v4193
    %v4198 = vadd.f32 %v4106, %v4194
    %s4199 = sld [smem:[#allocation3 + $0xc5]]
    %v4200 = vstv %s4199
    %v4201 = vmul.f32 %v4185, %v4200
    %v4202 = vmul.f32 %v4186, %v4200
    %v4203 = vmul.f32 %v4187, %v4200
    %v4204 = vmul.f32 %v4188, %v4200
    %v4205 = vadd.f32 %v4129, %v4201
    %v4206 = vadd.f32 %v4130, %v4202
    %v4207 = vadd.f32 %v4131, %v4203
    %v4208 = vadd.f32 %v4132, %v4204
    %s4209 = sld [smem:[#allocation3 + $0xc9]]
    %v4210 = vstv %s4209
    %v4211 = vmul.f32 %v4185, %v4210
    %v4212 = vmul.f32 %v4186, %v4210
    %v4213 = vmul.f32 %v4187, %v4210
    %v4214 = vmul.f32 %v4188, %v4210
    %v4215 = vadd.f32 %v4155, %v4211
    %v4216 = vadd.f32 %v4156, %v4212
    %v4217 = vadd.f32 %v4157, %v4213
    %v4218 = vadd.f32 %v4158, %v4214
    %s4219 = sld [smem:[#allocation3 + $0xcd]]
    %v4220 = vstv %s4219
    %v4221 = vmul.f32 %v4185, %v4220
    %v4222 = vmul.f32 %v4186, %v4220
    %v4223 = vmul.f32 %v4187, %v4220
    %v4224 = vmul.f32 %v4188, %v4220
    %v4225 = vadd.f32 %v4181, %v4221
    %v4226 = vadd.f32 %v4182, %v4222
    %v4227 = vadd.f32 %v4183, %v4223
    %v4228 = vadd.f32 %v4184, %v4224
    %s4229 = sld [smem:[#allocation3 + $0xd1]]
    %v4230 = vstv %s4229
    %v4231 = vmul.f32 %v4185, %v4230
    %v4232 = vmul.f32 %v4186, %v4230
    %v4233 = vmul.f32 %v4187, %v4230
    %v4234 = vmul.f32 %v4188, %v4230
    %4239 = vrot.lane.b32.xlu0 %v4231, 127
    %v4240 = vpop.permute.xlu0 %4239
    %4241 = vrot.lane.b32.xlu0 %v4232, 127
    %v4242 = vpop.permute.xlu0 %4241
    %4243 = vrot.lane.b32.xlu0 %v4233, 127
    %v4244 = vpop.permute.xlu0 %4243
    %4245 = vrot.lane.b32.xlu0 %v4234, 127
    %v4246 = vpop.permute.xlu0 %4245
    %v4251 = vadd.f32 %v4195, %v4240
    %v4252 = vadd.f32 %v4196, %v4242
    %v4253 = vadd.f32 %v4197, %v4244
    %v4254 = vadd.f32 %v4198, %v4246
    %s4255 = sld [smem:[#allocation3 + $0xd5]]
    %v4256 = vstv %s4255
    %v4257 = vmul.f32 %v4185, %v4256
    %v4258 = vmul.f32 %v4186, %v4256
    %v4259 = vmul.f32 %v4187, %v4256
    %v4260 = vmul.f32 %v4188, %v4256
    %4265 = vrot.lane.b32.xlu0 %v4257, 127
    %v4266 = vpop.permute.xlu0 %4265
    %4267 = vrot.lane.b32.xlu0 %v4258, 127
    %v4268 = vpop.permute.xlu0 %4267
    %4269 = vrot.lane.b32.xlu0 %v4259, 127
    %v4270 = vpop.permute.xlu0 %4269
    %4271 = vrot.lane.b32.xlu0 %v4260, 127
    %v4272 = vpop.permute.xlu0 %4271
    %v4277 = vadd.f32 %v4205, %v4266
    %v4278 = vadd.f32 %v4206, %v4268
    %v4279 = vadd.f32 %v4207, %v4270
    %v4280 = vadd.f32 %v4208, %v4272
    %s4281 = sld [smem:[#allocation3 + $0xd9]]
    %v4282 = vstv %s4281
    %v4283 = vmul.f32 %v4185, %v4282
    %v4284 = vmul.f32 %v4186, %v4282
    %v4285 = vmul.f32 %v4187, %v4282
    %v4286 = vmul.f32 %v4188, %v4282
    %4291 = vrot.lane.b32.xlu0 %v4283, 127
    %v4292 = vpop.permute.xlu0 %4291
    %4293 = vrot.lane.b32.xlu0 %v4284, 127
    %v4294 = vpop.permute.xlu0 %4293
    %4295 = vrot.lane.b32.xlu0 %v4285, 127
    %v4296 = vpop.permute.xlu0 %4295
    %4297 = vrot.lane.b32.xlu0 %v4286, 127
    %v4298 = vpop.permute.xlu0 %4297
    %v4303 = vadd.f32 %v4215, %v4292
    %v4304 = vadd.f32 %v4216, %v4294
    %v4305 = vadd.f32 %v4217, %v4296
    %v4306 = vadd.f32 %v4218, %v4298
    %s4307 = sld [smem:[#allocation3 + $0xdd]]
    %v4308 = vstv %s4307
    %v4309 = vmul.f32 %v4185, %v4308
    %v4310 = vmul.f32 %v4186, %v4308
    %v4311 = vmul.f32 %v4187, %v4308
    %v4312 = vmul.f32 %v4188, %v4308
    %4317 = vrot.lane.b32.xlu0 %v4309, 127
    %v4318 = vpop.permute.xlu0 %4317
    %4319 = vrot.lane.b32.xlu0 %v4310, 127
    %v4320 = vpop.permute.xlu0 %4319
    %4321 = vrot.lane.b32.xlu0 %v4311, 127
    %v4322 = vpop.permute.xlu0 %4321
    %4323 = vrot.lane.b32.xlu0 %v4312, 127
    %v4324 = vpop.permute.xlu0 %4323
    %v4329 = vadd.f32 %v4225, %v4318
    %v4330 = vadd.f32 %v4226, %v4320
    %v4331 = vadd.f32 %v4227, %v4322
    %v4332 = vadd.f32 %v4228, %v4324
    %v4333 = vld [vmem:[%s124 + $0x2] sm:$0xff]
    %v4334 = vld [vmem:[%s124 + $0xa] sm:$0xff]
    %v4335 = vld [vmem:[%s124 + $0x1a] sm:$0xff]
    %v4336 = vld [vmem:[%s124 + $0x22] sm:$0xff]
    %s4337 = sld [smem:[#allocation3 + $0xe1]]
    %v4338 = vstv %s4337
    %v4339 = vmul.f32 %v4333, %v4338
    %v4340 = vmul.f32 %v4334, %v4338
    %v4341 = vmul.f32 %v4335, %v4338
    %v4342 = vmul.f32 %v4336, %v4338
    %v4343 = vadd.f32 %v4251, %v4339
    %v4344 = vadd.f32 %v4252, %v4340
    %v4345 = vadd.f32 %v4253, %v4341
    %v4346 = vadd.f32 %v4254, %v4342
    %s4347 = sld [smem:[#allocation3 + $0xe5]]
    %v4348 = vstv %s4347
    %v4349 = vmul.f32 %v4333, %v4348
    %v4350 = vmul.f32 %v4334, %v4348
    %v4351 = vmul.f32 %v4335, %v4348
    %v4352 = vmul.f32 %v4336, %v4348
    %v4353 = vadd.f32 %v4277, %v4349
    %v4354 = vadd.f32 %v4278, %v4350
    %v4355 = vadd.f32 %v4279, %v4351
    %v4356 = vadd.f32 %v4280, %v4352
    %s4357 = sld [smem:[#allocation3 + $0xe9]]
    %v4358 = vstv %s4357
    %v4359 = vmul.f32 %v4333, %v4358
    %v4360 = vmul.f32 %v4334, %v4358
    %v4361 = vmul.f32 %v4335, %v4358
    %v4362 = vmul.f32 %v4336, %v4358
    %v4363 = vadd.f32 %v4303, %v4359
    %v4364 = vadd.f32 %v4304, %v4360
    %v4365 = vadd.f32 %v4305, %v4361
    %v4366 = vadd.f32 %v4306, %v4362
    %s4367 = sld [smem:[#allocation3 + $0xed]]
    %v4368 = vstv %s4367
    %v4369 = vmul.f32 %v4333, %v4368
    %v4370 = vmul.f32 %v4334, %v4368
    %v4371 = vmul.f32 %v4335, %v4368
    %v4372 = vmul.f32 %v4336, %v4368
    %v4373 = vadd.f32 %v4329, %v4369
    %v4374 = vadd.f32 %v4330, %v4370
    %v4375 = vadd.f32 %v4331, %v4371
    %v4376 = vadd.f32 %v4332, %v4372
    %s4377 = sld [smem:[#allocation3 + $0xf1]]
    %v4378 = vstv %s4377
    %v4379 = vmul.f32 %v4333, %v4378
    %v4380 = vmul.f32 %v4334, %v4378
    %v4381 = vmul.f32 %v4335, %v4378
    %v4382 = vmul.f32 %v4336, %v4378
    %4387 = vrot.lane.b32.xlu0 %v4379, 127
    %v4388 = vpop.permute.xlu0 %4387
    %4389 = vrot.lane.b32.xlu0 %v4380, 127
    %v4390 = vpop.permute.xlu0 %4389
    %4391 = vrot.lane.b32.xlu0 %v4381, 127
    %v4392 = vpop.permute.xlu0 %4391
    %4393 = vrot.lane.b32.xlu0 %v4382, 127
    %v4394 = vpop.permute.xlu0 %4393
    %v4399 = vadd.f32 %v4343, %v4388
    %v4400 = vadd.f32 %v4344, %v4390
    %v4401 = vadd.f32 %v4345, %v4392
    %v4402 = vadd.f32 %v4346, %v4394
    %s4403 = sld [smem:[#allocation3 + $0xf5]]
    %v4404 = vstv %s4403
    %v4405 = vmul.f32 %v4333, %v4404
    %v4406 = vmul.f32 %v4334, %v4404
    %v4407 = vmul.f32 %v4335, %v4404
    %v4408 = vmul.f32 %v4336, %v4404
    %4413 = vrot.lane.b32.xlu0 %v4405, 127
    %v4414 = vpop.permute.xlu0 %4413
    %4415 = vrot.lane.b32.xlu0 %v4406, 127
    %v4416 = vpop.permute.xlu0 %4415
    %4417 = vrot.lane.b32.xlu0 %v4407, 127
    %v4418 = vpop.permute.xlu0 %4417
    %4419 = vrot.lane.b32.xlu0 %v4408, 127
    %v4420 = vpop.permute.xlu0 %4419
    %v4425 = vadd.f32 %v4353, %v4414
    %v4426 = vadd.f32 %v4354, %v4416
    %v4427 = vadd.f32 %v4355, %v4418
    %v4428 = vadd.f32 %v4356, %v4420
    %s4429 = sld [smem:[#allocation3 + $0xf9]]
    %v4430 = vstv %s4429
    %v4431 = vmul.f32 %v4333, %v4430
    %v4432 = vmul.f32 %v4334, %v4430
    %v4433 = vmul.f32 %v4335, %v4430
    %v4434 = vmul.f32 %v4336, %v4430
    %4439 = vrot.lane.b32.xlu0 %v4431, 127
    %v4440 = vpop.permute.xlu0 %4439
    %4441 = vrot.lane.b32.xlu0 %v4432, 127
    %v4442 = vpop.permute.xlu0 %4441
    %4443 = vrot.lane.b32.xlu0 %v4433, 127
    %v4444 = vpop.permute.xlu0 %4443
    %4445 = vrot.lane.b32.xlu0 %v4434, 127
    %v4446 = vpop.permute.xlu0 %4445
    %v4451 = vadd.f32 %v4363, %v4440
    %v4452 = vadd.f32 %v4364, %v4442
    %v4453 = vadd.f32 %v4365, %v4444
    %v4454 = vadd.f32 %v4366, %v4446
    %s4455 = sld [smem:[#allocation3 + $0xfd]]
    %v4456 = vstv %s4455
    %v4457 = vmul.f32 %v4333, %v4456
    %v4458 = vmul.f32 %v4334, %v4456
    %v4459 = vmul.f32 %v4335, %v4456
    %v4460 = vmul.f32 %v4336, %v4456
    %4465 = vrot.lane.b32.xlu0 %v4457, 127
    %v4466 = vpop.permute.xlu0 %4465
    %4467 = vrot.lane.b32.xlu0 %v4458, 127
    %v4468 = vpop.permute.xlu0 %4467
    %4469 = vrot.lane.b32.xlu0 %v4459, 127
    %v4470 = vpop.permute.xlu0 %4469
    %4471 = vrot.lane.b32.xlu0 %v4460, 127
    %v4472 = vpop.permute.xlu0 %4471
    %v4477 = vadd.f32 %v4373, %v4466
    %v4478 = vadd.f32 %v4374, %v4468
    %v4479 = vadd.f32 %v4375, %v4470
    %v4480 = vadd.f32 %v4376, %v4472
    %v4481 = vld [vmem:[%s150 + $0x1] sm:$0xff]
    %v4482 = vld [vmem:[%s150 + $0x9] sm:$0xff]
    %v4483 = vld [vmem:[%s150 + $0x19] sm:$0xff]
    %v4484 = vld [vmem:[%s150 + $0x21] sm:$0xff]
    %s4485 = sld [smem:[#allocation3 + $0xc2]]
    %v4486 = vstv %s4485
    %v4487 = vmul.f32 %v4481, %v4486
    %v4488 = vmul.f32 %v4482, %v4486
    %v4489 = vmul.f32 %v4483, %v4486
    %v4490 = vmul.f32 %v4484, %v4486
    %v4491 = vadd.f32 %v4399, %v4487
    %v4492 = vadd.f32 %v4400, %v4488
    %v4493 = vadd.f32 %v4401, %v4489
    %v4494 = vadd.f32 %v4402, %v4490
    %s4495 = sld [smem:[#allocation3 + $0xc6]]
    %v4496 = vstv %s4495
    %v4497 = vmul.f32 %v4481, %v4496
    %v4498 = vmul.f32 %v4482, %v4496
    %v4499 = vmul.f32 %v4483, %v4496
    %v4500 = vmul.f32 %v4484, %v4496
    %v4501 = vadd.f32 %v4425, %v4497
    %v4502 = vadd.f32 %v4426, %v4498
    %v4503 = vadd.f32 %v4427, %v4499
    %v4504 = vadd.f32 %v4428, %v4500
    %s4505 = sld [smem:[#allocation3 + $0xca]]
    %v4506 = vstv %s4505
    %v4507 = vmul.f32 %v4481, %v4506
    %v4508 = vmul.f32 %v4482, %v4506
    %v4509 = vmul.f32 %v4483, %v4506
    %v4510 = vmul.f32 %v4484, %v4506
    %v4511 = vadd.f32 %v4451, %v4507
    %v4512 = vadd.f32 %v4452, %v4508
    %v4513 = vadd.f32 %v4453, %v4509
    %v4514 = vadd.f32 %v4454, %v4510
    %s4515 = sld [smem:[#allocation3 + $0xce]]
    %v4516 = vstv %s4515
    %v4517 = vmul.f32 %v4481, %v4516
    %v4518 = vmul.f32 %v4482, %v4516
    %v4519 = vmul.f32 %v4483, %v4516
    %v4520 = vmul.f32 %v4484, %v4516
    %v4521 = vadd.f32 %v4477, %v4517
    %v4522 = vadd.f32 %v4478, %v4518
    %v4523 = vadd.f32 %v4479, %v4519
    %v4524 = vadd.f32 %v4480, %v4520
    %s4525 = sld [smem:[#allocation3 + $0xd2]]
    %v4526 = vstv %s4525
    %v4527 = vmul.f32 %v4481, %v4526
    %v4528 = vmul.f32 %v4482, %v4526
    %v4529 = vmul.f32 %v4483, %v4526
    %v4530 = vmul.f32 %v4484, %v4526
    %4535 = vrot.lane.b32.xlu0 %v4527, 127
    %v4536 = vpop.permute.xlu0 %4535
    %4537 = vrot.lane.b32.xlu0 %v4528, 127
    %v4538 = vpop.permute.xlu0 %4537
    %4539 = vrot.lane.b32.xlu0 %v4529, 127
    %v4540 = vpop.permute.xlu0 %4539
    %4541 = vrot.lane.b32.xlu0 %v4530, 127
    %v4542 = vpop.permute.xlu0 %4541
    %v4547 = vadd.f32 %v4491, %v4536
    %v4548 = vadd.f32 %v4492, %v4538
    %v4549 = vadd.f32 %v4493, %v4540
    %v4550 = vadd.f32 %v4494, %v4542
    %s4551 = sld [smem:[#allocation3 + $0xd6]]
    %v4552 = vstv %s4551
    %v4553 = vmul.f32 %v4481, %v4552
    %v4554 = vmul.f32 %v4482, %v4552
    %v4555 = vmul.f32 %v4483, %v4552
    %v4556 = vmul.f32 %v4484, %v4552
    %4561 = vrot.lane.b32.xlu0 %v4553, 127
    %v4562 = vpop.permute.xlu0 %4561
    %4563 = vrot.lane.b32.xlu0 %v4554, 127
    %v4564 = vpop.permute.xlu0 %4563
    %4565 = vrot.lane.b32.xlu0 %v4555, 127
    %v4566 = vpop.permute.xlu0 %4565
    %4567 = vrot.lane.b32.xlu0 %v4556, 127
    %v4568 = vpop.permute.xlu0 %4567
    %v4573 = vadd.f32 %v4501, %v4562
    %v4574 = vadd.f32 %v4502, %v4564
    %v4575 = vadd.f32 %v4503, %v4566
    %v4576 = vadd.f32 %v4504, %v4568
    %s4577 = sld [smem:[#allocation3 + $0xda]]
    %v4578 = vstv %s4577
    %v4579 = vmul.f32 %v4481, %v4578
    %v4580 = vmul.f32 %v4482, %v4578
    %v4581 = vmul.f32 %v4483, %v4578
    %v4582 = vmul.f32 %v4484, %v4578
    %4587 = vrot.lane.b32.xlu0 %v4579, 127
    %v4588 = vpop.permute.xlu0 %4587
    %4589 = vrot.lane.b32.xlu0 %v4580, 127
    %v4590 = vpop.permute.xlu0 %4589
    %4591 = vrot.lane.b32.xlu0 %v4581, 127
    %v4592 = vpop.permute.xlu0 %4591
    %4593 = vrot.lane.b32.xlu0 %v4582, 127
    %v4594 = vpop.permute.xlu0 %4593
    %v4599 = vadd.f32 %v4511, %v4588
    %v4600 = vadd.f32 %v4512, %v4590
    %v4601 = vadd.f32 %v4513, %v4592
    %v4602 = vadd.f32 %v4514, %v4594
    %s4603 = sld [smem:[#allocation3 + $0xde]]
    %v4604 = vstv %s4603
    %v4605 = vmul.f32 %v4481, %v4604
    %v4606 = vmul.f32 %v4482, %v4604
    %v4607 = vmul.f32 %v4483, %v4604
    %v4608 = vmul.f32 %v4484, %v4604
    %4613 = vrot.lane.b32.xlu0 %v4605, 127
    %v4614 = vpop.permute.xlu0 %4613
    %4615 = vrot.lane.b32.xlu0 %v4606, 127
    %v4616 = vpop.permute.xlu0 %4615
    %4617 = vrot.lane.b32.xlu0 %v4607, 127
    %v4618 = vpop.permute.xlu0 %4617
    %4619 = vrot.lane.b32.xlu0 %v4608, 127
    %v4620 = vpop.permute.xlu0 %4619
    %v4625 = vadd.f32 %v4521, %v4614
    %v4626 = vadd.f32 %v4522, %v4616
    %v4627 = vadd.f32 %v4523, %v4618
    %v4628 = vadd.f32 %v4524, %v4620
    %v4629 = vld [vmem:[%s150 + $0x2] sm:$0xff]
    %v4630 = vld [vmem:[%s150 + $0xa] sm:$0xff]
    %v4631 = vld [vmem:[%s150 + $0x1a] sm:$0xff]
    %v4632 = vld [vmem:[%s150 + $0x22] sm:$0xff]
    %s4633 = sld [smem:[#allocation3 + $0xe2]]
    %v4634 = vstv %s4633
    %v4635 = vmul.f32 %v4629, %v4634
    %v4636 = vmul.f32 %v4630, %v4634
    %v4637 = vmul.f32 %v4631, %v4634
    %v4638 = vmul.f32 %v4632, %v4634
    %v4639 = vadd.f32 %v4547, %v4635
    %v4640 = vadd.f32 %v4548, %v4636
    %v4641 = vadd.f32 %v4549, %v4637
    %v4642 = vadd.f32 %v4550, %v4638
    %s4643 = sld [smem:[#allocation3 + $0xe6]]
    %v4644 = vstv %s4643
    %v4645 = vmul.f32 %v4629, %v4644
    %v4646 = vmul.f32 %v4630, %v4644
    %v4647 = vmul.f32 %v4631, %v4644
    %v4648 = vmul.f32 %v4632, %v4644
    %v4649 = vadd.f32 %v4573, %v4645
    %v4650 = vadd.f32 %v4574, %v4646
    %v4651 = vadd.f32 %v4575, %v4647
    %v4652 = vadd.f32 %v4576, %v4648
    %s4653 = sld [smem:[#allocation3 + $0xea]]
    %v4654 = vstv %s4653
    %v4655 = vmul.f32 %v4629, %v4654
    %v4656 = vmul.f32 %v4630, %v4654
    %v4657 = vmul.f32 %v4631, %v4654
    %v4658 = vmul.f32 %v4632, %v4654
    %v4659 = vadd.f32 %v4599, %v4655
    %v4660 = vadd.f32 %v4600, %v4656
    %v4661 = vadd.f32 %v4601, %v4657
    %v4662 = vadd.f32 %v4602, %v4658
    %s4663 = sld [smem:[#allocation3 + $0xee]]
    %v4664 = vstv %s4663
    %v4665 = vmul.f32 %v4629, %v4664
    %v4666 = vmul.f32 %v4630, %v4664
    %v4667 = vmul.f32 %v4631, %v4664
    %v4668 = vmul.f32 %v4632, %v4664
    %v4669 = vadd.f32 %v4625, %v4665
    %v4670 = vadd.f32 %v4626, %v4666
    %v4671 = vadd.f32 %v4627, %v4667
    %v4672 = vadd.f32 %v4628, %v4668
    %s4673 = sld [smem:[#allocation3 + $0xf2]]
    %v4674 = vstv %s4673
    %v4675 = vmul.f32 %v4629, %v4674
    %v4676 = vmul.f32 %v4630, %v4674
    %v4677 = vmul.f32 %v4631, %v4674
    %v4678 = vmul.f32 %v4632, %v4674
    %4683 = vrot.lane.b32.xlu0 %v4675, 127
    %v4684 = vpop.permute.xlu0 %4683
    %4685 = vrot.lane.b32.xlu0 %v4676, 127
    %v4686 = vpop.permute.xlu0 %4685
    %4687 = vrot.lane.b32.xlu0 %v4677, 127
    %v4688 = vpop.permute.xlu0 %4687
    %4689 = vrot.lane.b32.xlu0 %v4678, 127
    %v4690 = vpop.permute.xlu0 %4689
    %v4695 = vadd.f32 %v4639, %v4684
    %v4696 = vadd.f32 %v4640, %v4686
    %v4697 = vadd.f32 %v4641, %v4688
    %v4698 = vadd.f32 %v4642, %v4690
    %s4699 = sld [smem:[#allocation3 + $0xf6]]
    %v4700 = vstv %s4699
    %v4701 = vmul.f32 %v4629, %v4700
    %v4702 = vmul.f32 %v4630, %v4700
    %v4703 = vmul.f32 %v4631, %v4700
    %v4704 = vmul.f32 %v4632, %v4700
    %4709 = vrot.lane.b32.xlu0 %v4701, 127
    %v4710 = vpop.permute.xlu0 %4709
    %4711 = vrot.lane.b32.xlu0 %v4702, 127
    %v4712 = vpop.permute.xlu0 %4711
    %4713 = vrot.lane.b32.xlu0 %v4703, 127
    %v4714 = vpop.permute.xlu0 %4713
    %4715 = vrot.lane.b32.xlu0 %v4704, 127
    %v4716 = vpop.permute.xlu0 %4715
    %v4721 = vadd.f32 %v4649, %v4710
    %v4722 = vadd.f32 %v4650, %v4712
    %v4723 = vadd.f32 %v4651, %v4714
    %v4724 = vadd.f32 %v4652, %v4716
    %s4725 = sld [smem:[#allocation3 + $0xfa]]
    %v4726 = vstv %s4725
    %v4727 = vmul.f32 %v4629, %v4726
    %v4728 = vmul.f32 %v4630, %v4726
    %v4729 = vmul.f32 %v4631, %v4726
    %v4730 = vmul.f32 %v4632, %v4726
    %4735 = vrot.lane.b32.xlu0 %v4727, 127
    %v4736 = vpop.permute.xlu0 %4735
    %4737 = vrot.lane.b32.xlu0 %v4728, 127
    %v4738 = vpop.permute.xlu0 %4737
    %4739 = vrot.lane.b32.xlu0 %v4729, 127
    %v4740 = vpop.permute.xlu0 %4739
    %4741 = vrot.lane.b32.xlu0 %v4730, 127
    %v4742 = vpop.permute.xlu0 %4741
    %v4747 = vadd.f32 %v4659, %v4736
    %v4748 = vadd.f32 %v4660, %v4738
    %v4749 = vadd.f32 %v4661, %v4740
    %v4750 = vadd.f32 %v4662, %v4742
    %s4751 = sld [smem:[#allocation3 + $0xfe]]
    %v4752 = vstv %s4751
    %v4753 = vmul.f32 %v4629, %v4752
    %v4754 = vmul.f32 %v4630, %v4752
    %v4755 = vmul.f32 %v4631, %v4752
    %v4756 = vmul.f32 %v4632, %v4752
    %4761 = vrot.lane.b32.xlu0 %v4753, 127
    %v4762 = vpop.permute.xlu0 %4761
    %4763 = vrot.lane.b32.xlu0 %v4754, 127
    %v4764 = vpop.permute.xlu0 %4763
    %4765 = vrot.lane.b32.xlu0 %v4755, 127
    %v4766 = vpop.permute.xlu0 %4765
    %4767 = vrot.lane.b32.xlu0 %v4756, 127
    %v4768 = vpop.permute.xlu0 %4767
    %v4773 = vadd.f32 %v4669, %v4762
    %v4774 = vadd.f32 %v4670, %v4764
    %v4775 = vadd.f32 %v4671, %v4766
    %v4776 = vadd.f32 %v4672, %v4768
    %v4777 = vld [vmem:[%s176 + $0x1] sm:$0xff]
    %v4778 = vld [vmem:[%s176 + $0x9] sm:$0xff]
    %v4779 = vld [vmem:[%s176 + $0x19] sm:$0xff]
    %v4780 = vld [vmem:[%s176 + $0x21] sm:$0xff]
    %s4781 = sld [smem:[#allocation3 + $0xc3]]
    %v4782 = vstv %s4781
    %v4783 = vmul.f32 %v4777, %v4782
    %v4784 = vmul.f32 %v4778, %v4782
    %v4785 = vmul.f32 %v4779, %v4782
    %v4786 = vmul.f32 %v4780, %v4782
    %v4787 = vadd.f32 %v4695, %v4783
    %v4788 = vadd.f32 %v4696, %v4784
    %v4789 = vadd.f32 %v4697, %v4785
    %v4790 = vadd.f32 %v4698, %v4786
    %s4791 = sld [smem:[#allocation3 + $0xc7]]
    %v4792 = vstv %s4791
    %v4793 = vmul.f32 %v4777, %v4792
    %v4794 = vmul.f32 %v4778, %v4792
    %v4795 = vmul.f32 %v4779, %v4792
    %v4796 = vmul.f32 %v4780, %v4792
    %v4797 = vadd.f32 %v4721, %v4793
    %v4798 = vadd.f32 %v4722, %v4794
    %v4799 = vadd.f32 %v4723, %v4795
    %v4800 = vadd.f32 %v4724, %v4796
    %s4801 = sld [smem:[#allocation3 + $0xcb]]
    %v4802 = vstv %s4801
    %v4803 = vmul.f32 %v4777, %v4802
    %v4804 = vmul.f32 %v4778, %v4802
    %v4805 = vmul.f32 %v4779, %v4802
    %v4806 = vmul.f32 %v4780, %v4802
    %v4807 = vadd.f32 %v4747, %v4803
    %v4808 = vadd.f32 %v4748, %v4804
    %v4809 = vadd.f32 %v4749, %v4805
    %v4810 = vadd.f32 %v4750, %v4806
    %s4811 = sld [smem:[#allocation3 + $0xcf]]
    %v4812 = vstv %s4811
    %v4813 = vmul.f32 %v4777, %v4812
    %v4814 = vmul.f32 %v4778, %v4812
    %v4815 = vmul.f32 %v4779, %v4812
    %v4816 = vmul.f32 %v4780, %v4812
    %v4817 = vadd.f32 %v4773, %v4813
    %v4818 = vadd.f32 %v4774, %v4814
    %v4819 = vadd.f32 %v4775, %v4815
    %v4820 = vadd.f32 %v4776, %v4816
    %s4821 = sld [smem:[#allocation3 + $0xd3]]
    %v4822 = vstv %s4821
    %v4823 = vmul.f32 %v4777, %v4822
    %v4824 = vmul.f32 %v4778, %v4822
    %v4825 = vmul.f32 %v4779, %v4822
    %v4826 = vmul.f32 %v4780, %v4822
    %4831 = vrot.lane.b32.xlu0 %v4823, 127
    %v4832 = vpop.permute.xlu0 %4831
    %4833 = vrot.lane.b32.xlu0 %v4824, 127
    %v4834 = vpop.permute.xlu0 %4833
    %4835 = vrot.lane.b32.xlu0 %v4825, 127
    %v4836 = vpop.permute.xlu0 %4835
    %4837 = vrot.lane.b32.xlu0 %v4826, 127
    %v4838 = vpop.permute.xlu0 %4837
    %v4843 = vadd.f32 %v4787, %v4832
    %v4844 = vadd.f32 %v4788, %v4834
    %v4845 = vadd.f32 %v4789, %v4836
    %v4846 = vadd.f32 %v4790, %v4838
    %s4847 = sld [smem:[#allocation3 + $0xd7]]
    %v4848 = vstv %s4847
    %v4849 = vmul.f32 %v4777, %v4848
    %v4850 = vmul.f32 %v4778, %v4848
    %v4851 = vmul.f32 %v4779, %v4848
    %v4852 = vmul.f32 %v4780, %v4848
    %4857 = vrot.lane.b32.xlu0 %v4849, 127
    %v4858 = vpop.permute.xlu0 %4857
    %4859 = vrot.lane.b32.xlu0 %v4850, 127
    %v4860 = vpop.permute.xlu0 %4859
    %4861 = vrot.lane.b32.xlu0 %v4851, 127
    %v4862 = vpop.permute.xlu0 %4861
    %4863 = vrot.lane.b32.xlu0 %v4852, 127
    %v4864 = vpop.permute.xlu0 %4863
    %v4869 = vadd.f32 %v4797, %v4858
    %v4870 = vadd.f32 %v4798, %v4860
    %v4871 = vadd.f32 %v4799, %v4862
    %v4872 = vadd.f32 %v4800, %v4864
    %s4873 = sld [smem:[#allocation3 + $0xdb]]
    %v4874 = vstv %s4873
    %v4875 = vmul.f32 %v4777, %v4874
    %v4876 = vmul.f32 %v4778, %v4874
    %v4877 = vmul.f32 %v4779, %v4874
    %v4878 = vmul.f32 %v4780, %v4874
    %4883 = vrot.lane.b32.xlu0 %v4875, 127
    %v4884 = vpop.permute.xlu0 %4883
    %4885 = vrot.lane.b32.xlu0 %v4876, 127
    %v4886 = vpop.permute.xlu0 %4885
    %4887 = vrot.lane.b32.xlu0 %v4877, 127
    %v4888 = vpop.permute.xlu0 %4887
    %4889 = vrot.lane.b32.xlu0 %v4878, 127
    %v4890 = vpop.permute.xlu0 %4889
    %v4895 = vadd.f32 %v4807, %v4884
    %v4896 = vadd.f32 %v4808, %v4886
    %v4897 = vadd.f32 %v4809, %v4888
    %v4898 = vadd.f32 %v4810, %v4890
    %s4899 = sld [smem:[#allocation3 + $0xdf]]
    %v4900 = vstv %s4899
    %v4901 = vmul.f32 %v4777, %v4900
    %v4902 = vmul.f32 %v4778, %v4900
    %v4903 = vmul.f32 %v4779, %v4900
    %v4904 = vmul.f32 %v4780, %v4900
    %4909 = vrot.lane.b32.xlu0 %v4901, 127
    %v4910 = vpop.permute.xlu0 %4909
    %4911 = vrot.lane.b32.xlu0 %v4902, 127
    %v4912 = vpop.permute.xlu0 %4911
    %4913 = vrot.lane.b32.xlu0 %v4903, 127
    %v4914 = vpop.permute.xlu0 %4913
    %4915 = vrot.lane.b32.xlu0 %v4904, 127
    %v4916 = vpop.permute.xlu0 %4915
    %v4921 = vadd.f32 %v4817, %v4910
    %v4922 = vadd.f32 %v4818, %v4912
    %v4923 = vadd.f32 %v4819, %v4914
    %v4924 = vadd.f32 %v4820, %v4916
    %v4925 = vld [vmem:[%s176 + $0x2] sm:$0xff]
    %v4926 = vld [vmem:[%s176 + $0xa] sm:$0xff]
    %v4927 = vld [vmem:[%s176 + $0x1a] sm:$0xff]
    %v4928 = vld [vmem:[%s176 + $0x22] sm:$0xff]
    %s4929 = sld [smem:[#allocation3 + $0xe3]]
    %v4930 = vstv %s4929
    %v4931 = vmul.f32 %v4925, %v4930
    %v4932 = vmul.f32 %v4926, %v4930
    %v4933 = vmul.f32 %v4927, %v4930
    %v4934 = vmul.f32 %v4928, %v4930
    %v4935 = vadd.f32 %v4843, %v4931
    %v4936 = vadd.f32 %v4844, %v4932
    %v4937 = vadd.f32 %v4845, %v4933
    %v4938 = vadd.f32 %v4846, %v4934
    %s4939 = sld [smem:[#allocation3 + $0xe7]]
    %v4940 = vstv %s4939
    %v4941 = vmul.f32 %v4925, %v4940
    %v4942 = vmul.f32 %v4926, %v4940
    %v4943 = vmul.f32 %v4927, %v4940
    %v4944 = vmul.f32 %v4928, %v4940
    %v4945 = vadd.f32 %v4869, %v4941
    %v4946 = vadd.f32 %v4870, %v4942
    %v4947 = vadd.f32 %v4871, %v4943
    %v4948 = vadd.f32 %v4872, %v4944
    %s4949 = sld [smem:[#allocation3 + $0xeb]]
    %v4950 = vstv %s4949
    %v4951 = vmul.f32 %v4925, %v4950
    %v4952 = vmul.f32 %v4926, %v4950
    %v4953 = vmul.f32 %v4927, %v4950
    %v4954 = vmul.f32 %v4928, %v4950
    %v4955 = vadd.f32 %v4895, %v4951
    %v4956 = vadd.f32 %v4896, %v4952
    %v4957 = vadd.f32 %v4897, %v4953
    %v4958 = vadd.f32 %v4898, %v4954
    %s4959 = sld [smem:[#allocation3 + $0xef]]
    %v4960 = vstv %s4959
    %v4961 = vmul.f32 %v4925, %v4960
    %v4962 = vmul.f32 %v4926, %v4960
    %v4963 = vmul.f32 %v4927, %v4960
    %v4964 = vmul.f32 %v4928, %v4960
    %v4965 = vadd.f32 %v4921, %v4961
    %v4966 = vadd.f32 %v4922, %v4962
    %v4967 = vadd.f32 %v4923, %v4963
    %v4968 = vadd.f32 %v4924, %v4964
    %s4969 = sld [smem:[#allocation3 + $0xf3]]
    %v4970 = vstv %s4969
    %v4971 = vmul.f32 %v4925, %v4970
    %v4972 = vmul.f32 %v4926, %v4970
    %v4973 = vmul.f32 %v4927, %v4970
    %v4974 = vmul.f32 %v4928, %v4970
    %4979 = vrot.lane.b32.xlu0 %v4971, 127
    %v4980 = vpop.permute.xlu0 %4979
    %4981 = vrot.lane.b32.xlu0 %v4972, 127
    %v4982 = vpop.permute.xlu0 %4981
    %4983 = vrot.lane.b32.xlu0 %v4973, 127
    %v4984 = vpop.permute.xlu0 %4983
    %4985 = vrot.lane.b32.xlu0 %v4974, 127
    %v4986 = vpop.permute.xlu0 %4985
    %v4991 = vadd.f32 %v4935, %v4980
    %v4992 = vadd.f32 %v4936, %v4982
    %v4993 = vadd.f32 %v4937, %v4984
    %v4994 = vadd.f32 %v4938, %v4986
    %s4995 = sld [smem:[#allocation3 + $0xf7]]
    %v4996 = vstv %s4995
    %v4997 = vmul.f32 %v4925, %v4996
    %v4998 = vmul.f32 %v4926, %v4996
    %v4999 = vmul.f32 %v4927, %v4996
    %v5000 = vmul.f32 %v4928, %v4996
    %5005 = vrot.lane.b32.xlu0 %v4997, 127
    %v5006 = vpop.permute.xlu0 %5005
    %5007 = vrot.lane.b32.xlu0 %v4998, 127
    %v5008 = vpop.permute.xlu0 %5007
    %5009 = vrot.lane.b32.xlu0 %v4999, 127
    %v5010 = vpop.permute.xlu0 %5009
    %5011 = vrot.lane.b32.xlu0 %v5000, 127
    %v5012 = vpop.permute.xlu0 %5011
    %v5017 = vadd.f32 %v4945, %v5006
    %v5018 = vadd.f32 %v4946, %v5008
    %v5019 = vadd.f32 %v4947, %v5010
    %v5020 = vadd.f32 %v4948, %v5012
    %s5021 = sld [smem:[#allocation3 + $0xfb]]
    %v5022 = vstv %s5021
    %v5023 = vmul.f32 %v4925, %v5022
    %v5024 = vmul.f32 %v4926, %v5022
    %v5025 = vmul.f32 %v4927, %v5022
    %v5026 = vmul.f32 %v4928, %v5022
    %5031 = vrot.lane.b32.xlu0 %v5023, 127
    %v5032 = vpop.permute.xlu0 %5031
    %5033 = vrot.lane.b32.xlu0 %v5024, 127
    %v5034 = vpop.permute.xlu0 %5033
    %5035 = vrot.lane.b32.xlu0 %v5025, 127
    %v5036 = vpop.permute.xlu0 %5035
    %5037 = vrot.lane.b32.xlu0 %v5026, 127
    %v5038 = vpop.permute.xlu0 %5037
    %v5043 = vadd.f32 %v4955, %v5032
    %v5044 = vadd.f32 %v4956, %v5034
    %v5045 = vadd.f32 %v4957, %v5036
    %v5046 = vadd.f32 %v4958, %v5038
    %s5047 = sld [smem:[#allocation3 + $0xff]]
    %v5048 = vstv %s5047
    %v5049 = vmul.f32 %v4925, %v5048
    %v5050 = vmul.f32 %v4926, %v5048
    %v5051 = vmul.f32 %v4927, %v5048
    %v5052 = vmul.f32 %v4928, %v5048
    %5057 = vrot.lane.b32.xlu0 %v5049, 127
    %v5058 = vpop.permute.xlu0 %5057
    %5059 = vrot.lane.b32.xlu0 %v5050, 127
    %v5060 = vpop.permute.xlu0 %5059
    %5061 = vrot.lane.b32.xlu0 %v5051, 127
    %v5062 = vpop.permute.xlu0 %5061
    %5063 = vrot.lane.b32.xlu0 %v5052, 127
    %v5064 = vpop.permute.xlu0 %5063
    %v5069 = vadd.f32 %v4965, %v5058
    %v5070 = vadd.f32 %v4966, %v5060
    %v5071 = vadd.f32 %v4967, %v5062
    %v5072 = vadd.f32 %v4968, %v5064
    %5077 = vrot.lane.b32.xlu0 %v4991, 127
    %v5078 = vpop.permute.xlu0 %5077
    %5079 = vrot.lane.b32.xlu0 %v4992, 127
    %v5080 = vpop.permute.xlu0 %5079
    %5081 = vrot.lane.b32.xlu0 %v4993, 127
    %v5082 = vpop.permute.xlu0 %5081
    %5083 = vrot.lane.b32.xlu0 %v4994, 127
    %v5084 = vpop.permute.xlu0 %5083
    %s5089 = scalar_lea.vmem [#allocation10], 96
    %5090 = vst.msk [vmem:[%s5089] sm:$0xff] %vm1373, %v5078
    %5091 = vst.msk [vmem:[%s5089 + $0x8] sm:$0xff] %vm1373, %v5080
    %5092 = vst.msk [vmem:[%s5089 + $0x10] sm:$0xff] %vm1373, %v5082
    %5093 = vst.msk [vmem:[%s5089 + $0x18] sm:$0xff] %vm1373, %v5084
    %5098 = vrot.lane.b32.xlu0 %v5017, 127
    %v5099 = vpop.permute.xlu0 %5098
    %5100 = vrot.lane.b32.xlu0 %v5018, 127
    %v5101 = vpop.permute.xlu0 %5100
    %5102 = vrot.lane.b32.xlu0 %v5019, 127
    %v5103 = vpop.permute.xlu0 %5102
    %5104 = vrot.lane.b32.xlu0 %v5020, 127
    %v5105 = vpop.permute.xlu0 %5104
    %s5110 = scalar_lea.vmem [#allocation10], 224
    %5111 = vst.msk [vmem:[%s5110] sm:$0xff] %vm1373, %v5099
    %5112 = vst.msk [vmem:[%s5110 + $0x8] sm:$0xff] %vm1373, %v5101
    %5113 = vst.msk [vmem:[%s5110 + $0x10] sm:$0xff] %vm1373, %v5103
    %5114 = vst.msk [vmem:[%s5110 + $0x18] sm:$0xff] %vm1373, %v5105
    %5119 = vrot.lane.b32.xlu0 %v5043, 127
    %v5120 = vpop.permute.xlu0 %5119
    %5121 = vrot.lane.b32.xlu0 %v5044, 127
    %v5122 = vpop.permute.xlu0 %5121
    %5123 = vrot.lane.b32.xlu0 %v5045, 127
    %v5124 = vpop.permute.xlu0 %5123
    %5125 = vrot.lane.b32.xlu0 %v5046, 127
    %v5126 = vpop.permute.xlu0 %5125
    %s5131 = scalar_lea.vmem [#allocation10], 352
    %5132 = vst.msk [vmem:[%s5131] sm:$0xff] %vm1373, %v5120
    %5133 = vst.msk [vmem:[%s5131 + $0x8] sm:$0xff] %vm1373, %v5122
    %5134 = vst.msk [vmem:[%s5131 + $0x10] sm:$0xff] %vm1373, %v5124
    %5135 = vst.msk [vmem:[%s5131 + $0x18] sm:$0xff] %vm1373, %v5126
    %5140 = vrot.lane.b32.xlu0 %v5069, 127
    %v5141 = vpop.permute.xlu0 %5140
    %5142 = vrot.lane.b32.xlu0 %v5070, 127
    %v5143 = vpop.permute.xlu0 %5142
    %5144 = vrot.lane.b32.xlu0 %v5071, 127
    %v5145 = vpop.permute.xlu0 %5144
    %5146 = vrot.lane.b32.xlu0 %v5072, 127
    %v5147 = vpop.permute.xlu0 %5146
    %s5152 = scalar_lea.vmem [#allocation10], 480
    %5153 = vst.msk [vmem:[%s5152] sm:$0xff] %vm1373, %v5141
    %5154 = vst.msk [vmem:[%s5152 + $0x8] sm:$0xff] %vm1373, %v5143
    %5155 = vst.msk [vmem:[%s5152 + $0x10] sm:$0xff] %vm1373, %v5145
    %5156 = vst.msk [vmem:[%s5152 + $0x18] sm:$0xff] %vm1373, %v5147
    // Predicated region
    $region26: #{tpu_custom_call.1} parent=1 // pred_check
      _
    $region27: #{tpu_custom_call.1} parent=1 // pred_check_branch
      %5158 = sbr.rel (0) target = $region29
    $region28: #{tpu_custom_call.1} parent=1 // pred_region
      %s5160 = ssub.s32 8192, 8192
      %5161 = vsyncadd [#allocation5], %s5160
      %s5162 = sshll.u32 [#allocation10], 4
      %s5163 = int_to_ptr.vmem [resolvable:$true] %s5162
      %5168 = dma.vmem_to_hbm [thread:$0]  %s5163, 8192, %s3, [#allocation5], 128, 128, 8
    $region29: #{tpu_custom_call.1} parent=1 // pred_fallthru
      _
    // Predicated region
    $region30: #{tpu_custom_call.1} parent=1 // pred_check
      _
    $region31: #{tpu_custom_call.1} parent=1 // pred_check_branch
      %5170 = sbr.rel (0) target = $region33
    $region32: #{tpu_custom_call.1} parent=1 // pred_region
      %5171 = dma.done [#allocation5], 8192
    $region33: #{tpu_custom_call.1} parent=1 // pred_fallthru
      _
    %5172 = vsyncpa [#allocation4], 1
    %5173 = vsyncpa [#allocation5], 1
    %5174 = vsyncpa [#allocation6], 1
    %5175 = vsyncpa [#allocation7], 1

</llo_original>
